<compile_context>
chip_gen: v7x
topology: tpu7x:2x2x1
jax: 0.10.0
libtpu: 0.0.40
codegen_flags: <defaults>
</compile_context>

<pallas_src>
import functools

import jax
import jax.numpy as jnp
from jax import lax
from jax.experimental import pallas as pl
from jax.experimental.pallas import tpu as pltpu


def _make_kernel(kh_total, kw_total, th, w_out, fold_kw):
    """Kernel closure over static conv geometry.

    fold_kw: x_ref (Hp_pad, W_out, KW*C) bf16 ; w_ref (KH, KW*C, OC_pad) bf16
    else   : x_ref (Hp_pad, Wp,    C)    bf16 ; w_ref (KH, KW, C, OC_pad) bf16
    scale_ref / bias_ref : (1, OC_pad) f32
    o_ref                : (TH, W_out, OC_pad) f32   (one band of output rows)
    """

    def kernel(x_ref, w_ref, scale_ref, bias_ref, o_ref):
        base = pl.program_id(1) * th           # first output row of this band
        scale = scale_ref[...]                 # (1, OC_pad) f32 (hoisted)
        bias = bias_ref[...]                   # (1, OC_pad) f32 (hoisted)
        for t in range(th):                    # unrolled band rows
            for kh in range(kh_total):         # unrolled KH taps
                row = x_ref[base + t + kh]     # one padded input row (from VMEM)
                if fold_kw:
                    # Single dot with K = KW*C (KW already folded on the host).
                    taps = ((row, w_ref[kh]),)
                else:
                    # Per-tap dots with K = C (C >= 128 -> MXU depth is full).
                    taps = tuple((row[kw:kw + w_out, :], w_ref[kh, kw])
                                 for kw in range(kw_total))
                for j, (lhs, rhs) in enumerate(taps):
                    part = jnp.dot(lhs, rhs, preferred_element_type=jnp.float32)
                    if kh == 0 and j == 0:
                        o_ref[t] = part        # first tap initializes the row
                    else:
                        o_ref[t] += part       # accumulate in the output block
            # Folded BN scale/bias + ReLU epilogue, in place.
            y = o_ref[t] * scale + bias
            o_ref[t] = jnp.maximum(y, 0.0)

    return kernel


@functools.partial(jax.jit, static_argnames=("bn", "padding", "eps"))
def basic_conv2d(x, weight, bias, gamma, beta, running_mean, running_var,
                 *, bn=True, padding=1, eps=1e-3):
    """Equivalent of BasicConv2d.forward (eval-mode BN), stride=1 only.

    x:      (N, C, H, W)      float32
    weight: (OC, C, KH, KW)   float32
    bias:   (OC,)             float32 (Conv2d default has bias)
    gamma/beta/running_mean/running_var: (OC,) BN params (ignored if bn=False)
    returns (N, OC, H_out, W_out) float32
    """
    N, C, H, W = x.shape
    OC, Cw, KH, KW = weight.shape
    assert Cw == C, "channel mismatch"

    Hp, Wp = H + 2 * padding, W + 2 * padding
    H_out, W_out = Hp - KH + 1, Wp - KW + 1
    OC_pad = ((OC + 127) // 128) * 128

    # ---- band tiling along H ----
    TH = max(1, min(8, H_out))
    n_hb = pl.cdiv(H_out, TH)
    # Extra bottom rows so a (possibly ragged) last band never reads OOB.
    Hp_pad = n_hb * TH + KH - 1

    # Fold KW into the contraction dim on the host when C is small (the 3x
    # input blow-up is cheap there and K = C would badly underfill the MXU).
    fold_kw = C <= 128

    # ---- glue: layout / padding / parameter folding (plain JAX, one pass) ----
    x_nhwc = jnp.transpose(x, (0, 2, 3, 1))                       # (N, H, W, C)
    xp = jnp.pad(
        x_nhwc,
        ((0, 0), (padding, Hp_pad - H - padding), (padding, padding), (0, 0)),
    ).astype(jnp.bfloat16)                                        # (N, Hp_pad, Wp, C)

    w_r = jnp.transpose(weight, (2, 3, 1, 0))                     # (KH, KW, C, OC)
    w_r = jnp.pad(w_r, ((0, 0), (0, 0), (0, 0),
                        (0, OC_pad - OC))).astype(jnp.bfloat16)   # (KH, KW, C, OC_pad)

    if bn:
        inv_std = 1.0 / jnp.sqrt(running_var + eps)
        scale = gamma * inv_std                                   # (OC,)
        bias_total = (bias - running_mean) * scale + beta
    else:
        scale = jnp.ones((OC,), jnp.float32)
        bias_total = bias
    scale_p = jnp.pad(scale, (0, OC_pad - OC)).reshape(1, OC_pad).astype(jnp.float32)
    bias_p = jnp.pad(bias_total, (0, OC_pad - OC)).reshape(1, OC_pad).astype(jnp.float32)

    if fold_kw:
        # (N, Hp_pad, W_out, KW*C): one input row already holds the im2col LHS
        # for every output column of that row.
        xin = jnp.concatenate([xp[:, :, kw:kw + W_out, :] for kw in range(KW)],
                              axis=-1)
        w_in = w_r.reshape(KH, KW * C, OC_pad)
        x_spec = pl.BlockSpec((None, Hp_pad, W_out, KW * C),
                              lambda n, hb: (n, 0, 0, 0))
        w_spec = pl.BlockSpec((KH, KW * C, OC_pad), lambda n, hb: (0, 0, 0))
        x_row_bytes = W_out * KW * C * 2
    else:
        xin = xp
        w_in = w_r
        x_spec = pl.BlockSpec((None, Hp_pad, Wp, C), lambda n, hb: (n, 0, 0, 0))
        w_spec = pl.BlockSpec((KH, KW, C, OC_pad), lambda n, hb: (0, 0, 0, 0))
        x_row_bytes = Wp * C * 2

    # ---- VMEM budget: every operand is double-buffered by the pipeline ----
    x_bytes = Hp_pad * x_row_bytes                 # resident padded image (bf16)
    w_bytes = KH * KW * C * OC_pad * 2             # resident weight (bf16)
    out_tile_bytes = TH * W_out * OC_pad * 4       # one output band (f32)
    sb_bytes = 2 * OC_pad * 4                      # scale + bias
    tmp_bytes = 4 * W_out * OC_pad * 4 + 2 * x_row_bytes   # in-kernel temporaries
    vmem_needed = 2 * (x_bytes + w_bytes + out_tile_bytes + sb_bytes) + tmp_bytes
    try:
        phys_vmem = pltpu.get_tpu_info().vmem_capacity_bytes
    except Exception:
        phys_vmem = 64 * 1024 * 1024               # v7x per-TC size = safe lower bound
    cap = (phys_vmem * 7) // 8                     # leave compiler headroom
    vmem_limit = int(min(max(vmem_needed * 3 // 2, 32 * 1024 * 1024), cap))

    flops = 2 * N * H_out * W_out * KH * KW * C * OC_pad
    bytes_accessed = (xin.size * 2 + w_in.size * 2 + 2 * OC_pad * 4
                      + N * H_out * W_out * OC_pad * 4)

    out_nhwc = pl.pallas_call(
        _make_kernel(KH, KW, TH, W_out, fold_kw),
        out_shape=jax.ShapeDtypeStruct((N, H_out, W_out, OC_pad), jnp.float32),
        grid_spec=pltpu.PrefetchScalarGridSpec(
            num_scalar_prefetch=0,
            grid=(N, n_hb),
            in_specs=[
                x_spec,                                    # resident per-n image
                w_spec,                                    # resident weight
                pl.BlockSpec((1, OC_pad), lambda n, hb: (0, 0)),
                pl.BlockSpec((1, OC_pad), lambda n, hb: (0, 0)),
            ],
            out_specs=pl.BlockSpec((None, TH, W_out, OC_pad),
                                   lambda n, hb: (n, hb, 0, 0)),
        ),
        compiler_params=pltpu.CompilerParams(
            dimension_semantics=("parallel", "parallel"),
            vmem_limit_bytes=vmem_limit),
        cost_estimate=pl.CostEstimate(flops=flops, transcendentals=0,
                                      bytes_accessed=bytes_accessed),
    )(xin, w_in, scale_p, bias_p)

    out = out_nhwc[..., :OC]                       # drop padded channels
    return jnp.transpose(out, (0, 3, 1, 2))        # keep the module's NCHW contract


def _reference(x, weight, bias, gamma, beta, running_mean, running_var,
               *, bn=True, padding=1, eps=1e-3, cast_bf16=False):
    xc = x.astype(jnp.bfloat16) if cast_bf16 else x
    wc = weight.astype(jnp.bfloat16) if cast_bf16 else weight
    y = lax.conv_general_dilated(
        xc, wc, window_strides=(1, 1),
        padding=((padding, padding), (padding, padding)),
        dimension_numbers=("NCHW", "OIHW", "NCHW"),
        preferred_element_type=jnp.float32)
    y = y + bias[None, :, None, None]
    if bn:
        inv_std = 1.0 / jnp.sqrt(running_var + eps)
        y = (y - running_mean[None, :, None, None]) * (gamma * inv_std)[None, :, None, None] \
            + beta[None, :, None, None]
    return jnp.maximum(y, 0.0)


def _make_params(key, n, c, h, w, oc, kh, kw):
    k1, k2, k3, k4, k5, k6, k7 = jax.random.split(key, 7)
    x = jax.random.normal(k1, (n, c, h, w), jnp.float32)
    weight = jax.random.normal(k2, (oc, c, kh, kw), jnp.float32) * 0.1
    bias = jax.random.normal(k3, (oc,), jnp.float32) * 0.1
    gamma = 1.0 + 0.1 * jax.random.normal(k4, (oc,), jnp.float32)
    beta = 0.1 * jax.random.normal(k5, (oc,), jnp.float32)
    running_mean = 0.1 * jax.random.normal(k6, (oc,), jnp.float32)
    running_var = jnp.abs(1.0 + 0.1 * jax.random.normal(k7, (oc,), jnp.float32))
    return x, weight, bias, gamma, beta, running_mean, running_var


if __name__ == "__main__":
    key = jax.random.PRNGKey(0)
    k_a, k_b = jax.random.split(key)

    # Config A: stem-style small-C layer (exercises the host-side KW-fold path).
    args_a = _make_params(k_a, 2, 4, 16, 16, 8, 3, 3)
    out_a = jax.block_until_ready(basic_conv2d(*args_a, bn=True, padding=1))
    assert out_a.shape == (2, 8, 16, 16)

    # Tight check vs a reference with the same bf16 input/weight quantization
    # (validates the fused im2col / BN-fold / ReLU logic).
    ref_a_bf16 = _reference(*args_a, bn=True, padding=1, cast_bf16=True)
    assert jnp.allclose(out_a, ref_a_bf16, atol=2e-3, rtol=2e-3), \
        "config A mismatch vs bf16-quantized reference"
    # Loose sanity check vs the pure f32 reference (bf16 MXU quantization error).
    ref_a_f32 = _reference(*args_a, bn=True, padding=1, cast_bf16=False)
    assert jnp.allclose(out_a, ref_a_f32, atol=5e-2, rtol=5e-2), \
        "config A mismatch vs f32 reference"

    # Config B: larger-C layer (exercises the per-tap K=C path, no host fold).
    args_b = _make_params(k_b, 1, 256, 8, 8, 16, 3, 3)
    out_b = jax.block_until_ready(basic_conv2d(*args_b, bn=True, padding=1))
    assert out_b.shape == (1, 16, 8, 8)
    ref_b_bf16 = _reference(*args_b, bn=True, padding=1, cast_bf16=True)
    assert jnp.allclose(out_b, ref_b_bf16, atol=3e-3, rtol=3e-3), \
        "config B mismatch vs bf16-quantized reference"

    print("KERNEL_OK")
</pallas_src>

<mosaic_0001>
module attributes {stable_mosaic.version = 11 : i64} {
  func.func @kernel(%arg0: i32, %arg1: i32, %arg2: memref<1x18x16x12xbf16, #tpu.memory_space<vmem>>, %arg3: memref<3x12x128xbf16, #tpu.memory_space<vmem>>, %arg4: memref<1x128xf32, #tpu.memory_space<vmem>>, %arg5: memref<1x128xf32, #tpu.memory_space<vmem>>, %arg6: memref<1x8x16x128xf32, #tpu.memory_space<vmem>>) attributes {dimension_semantics = [#tpu.dimension_semantics<parallel>, #tpu.dimension_semantics<parallel>], iteration_bounds = array<i64: 2, 2>, scalar_prefetch = 0 : i64, scratch_operands = 0 : i64, tpu.core_type = #tpu.core_type<tc>, window_params = [{transform_indices = @transform_0, window_bounds = array<i64: 1, 18, 16, 12>}, {pipeline_mode = #tpu.pipeline_mode<synchronous>, transform_indices = @transform_1, window_bounds = array<i64: 3, 12, 128>}, {pipeline_mode = #tpu.pipeline_mode<synchronous>, transform_indices = @transform_2, window_bounds = array<i64: 1, 128>}, {pipeline_mode = #tpu.pipeline_mode<synchronous>, transform_indices = @transform_3, window_bounds = array<i64: 1, 128>}, {transform_indices = @transform_4, window_bounds = array<i64: 1, 8, 16, 128>}]} {
    %c8_i32 = arith.constant 8 : i32
    %0 = arith.muli %arg1, %c8_i32 : i32
    %c0 = arith.constant 0 : index
    %c0_0 = arith.constant 0 : index
    %1 = vector.load %arg4[%c0, %c0_0] : memref<1x128xf32, #tpu.memory_space<vmem>>, vector<1x128xf32>
    %c0_1 = arith.constant 0 : index
    %c0_2 = arith.constant 0 : index
    %2 = vector.load %arg5[%c0_1, %c0_2] : memref<1x128xf32, #tpu.memory_space<vmem>>, vector<1x128xf32>
    %c0_i32 = arith.constant 0 : i32
    %3 = arith.addi %0, %c0_i32 : i32
    %c0_i32_3 = arith.constant 0 : i32
    %4 = arith.addi %3, %c0_i32_3 : i32
    %c0_4 = arith.constant 0 : index
    %5 = arith.index_cast %4 : i32 to index
    %c0_5 = arith.constant 0 : index
    %c0_6 = arith.constant 0 : index
    %6 = vector.load %arg2[%c0_4, %5, %c0_5, %c0_6] : memref<1x18x16x12xbf16, #tpu.memory_space<vmem>>, vector<1x1x16x12xbf16>
    %7 = vector.shape_cast %6 : vector<1x1x16x12xbf16> to vector<16x12xbf16>
    %c0_7 = arith.constant 0 : index
    %c0_8 = arith.constant 0 : index
    %c0_9 = arith.constant 0 : index
    %8 = vector.load %arg3[%c0_7, %c0_8, %c0_9] : memref<3x12x128xbf16, #tpu.memory_space<vmem>>, vector<1x12x128xbf16>
    %9 = vector.shape_cast %8 : vector<1x12x128xbf16> to vector<12x128xbf16>
    %cst = arith.constant dense<0.000000e+00> : vector<16x128xf32>
    %10 = tpu.matmul %7, %9, %cst {dimension_numbers = #tpu.dot_dimension_numbers<[1], [0], [0], [1], [0, 0, 1, 1], [], []>} : vector<16x12xbf16>, vector<12x128xbf16>, vector<16x128xf32> -> vector<16x128xf32>
    %c0_10 = arith.constant 0 : index
    %c0_11 = arith.constant 0 : index
    %c0_12 = arith.constant 0 : index
    %c0_13 = arith.constant 0 : index
    %11 = vector.load %arg6[%c0_10, %c0_11, %c0_12, %c0_13] : memref<1x8x16x128xf32, #tpu.memory_space<vmem>>, vector<1x1x16x128xf32>
    %12 = vector.shape_cast %11 : vector<1x1x16x128xf32> to vector<16x128xf32>
    %13 = vector.shape_cast %10 : vector<16x128xf32> to vector<1x1x16x128xf32>
    tpu.vector_store %arg6[%c0_10, %c0_11, %c0_12, %c0_13], %13 {strides = array<i32>} : memref<1x8x16x128xf32, #tpu.memory_space<vmem>>, vector<1x1x16x128xf32>,
    %c0_i32_14 = arith.constant 0 : i32
    %14 = arith.addi %0, %c0_i32_14 : i32
    %c1_i32 = arith.constant 1 : i32
    %15 = arith.addi %14, %c1_i32 : i32
    %c0_15 = arith.constant 0 : index
    %16 = arith.index_cast %15 : i32 to index
    %c0_16 = arith.constant 0 : index
    %c0_17 = arith.constant 0 : index
    %17 = vector.load %arg2[%c0_15, %16, %c0_16, %c0_17] : memref<1x18x16x12xbf16, #tpu.memory_space<vmem>>, vector<1x1x16x12xbf16>
    %18 = vector.shape_cast %17 : vector<1x1x16x12xbf16> to vector<16x12xbf16>
    %c1 = arith.constant 1 : index
    %c0_18 = arith.constant 0 : index
    %c0_19 = arith.constant 0 : index
    %19 = vector.load %arg3[%c1, %c0_18, %c0_19] : memref<3x12x128xbf16, #tpu.memory_space<vmem>>, vector<1x12x128xbf16>
    %20 = vector.shape_cast %19 : vector<1x12x128xbf16> to vector<12x128xbf16>
    %cst_20 = arith.constant dense<0.000000e+00> : vector<16x128xf32>
    %21 = tpu.matmul %18, %20, %cst_20 {dimension_numbers = #tpu.dot_dimension_numbers<[1], [0], [0], [1], [0, 0, 1, 1], [], []>} : vector<16x12xbf16>, vector<12x128xbf16>, vector<16x128xf32> -> vector<16x128xf32>
    %c0_21 = arith.constant 0 : index
    %c0_22 = arith.constant 0 : index
    %c0_23 = arith.constant 0 : index
    %c0_24 = arith.constant 0 : index
    %22 = vector.load %arg6[%c0_21, %c0_22, %c0_23, %c0_24] : memref<1x8x16x128xf32, #tpu.memory_space<vmem>>, vector<1x1x16x128xf32>
    %23 = vector.shape_cast %22 : vector<1x1x16x128xf32> to vector<16x128xf32>
    %24 = arith.addf %23, %21 : vector<16x128xf32>
    %c0_25 = arith.constant 0 : index
    %c0_26 = arith.constant 0 : index
    %c0_27 = arith.constant 0 : index
    %c0_28 = arith.constant 0 : index
    %25 = vector.load %arg6[%c0_25, %c0_26, %c0_27, %c0_28] : memref<1x8x16x128xf32, #tpu.memory_space<vmem>>, vector<1x1x16x128xf32>
    %26 = vector.shape_cast %25 : vector<1x1x16x128xf32> to vector<16x128xf32>
    %27 = vector.shape_cast %24 : vector<16x128xf32> to vector<1x1x16x128xf32>
    tpu.vector_store %arg6[%c0_25, %c0_26, %c0_27, %c0_28], %27 {strides = array<i32>} : memref<1x8x16x128xf32, #tpu.memory_space<vmem>>, vector<1x1x16x128xf32>,
    %c0_i32_29 = arith.constant 0 : i32
    %28 = arith.addi %0, %c0_i32_29 : i32
    %c2_i32 = arith.constant 2 : i32
    %29 = arith.addi %28, %c2_i32 : i32
    %c0_30 = arith.constant 0 : index
    %30 = arith.index_cast %29 : i32 to index
    %c0_31 = arith.constant 0 : index
    %c0_32 = arith.constant 0 : index
    %31 = vector.load %arg2[%c0_30, %30, %c0_31, %c0_32] : memref<1x18x16x12xbf16, #tpu.memory_space<vmem>>, vector<1x1x16x12xbf16>
    %32 = vector.shape_cast %31 : vector<1x1x16x12xbf16> to vector<16x12xbf16>
    %c2 = arith.constant 2 : index
    %c0_33 = arith.constant 0 : index
    %c0_34 = arith.constant 0 : index
    %33 = vector.load %arg3[%c2, %c0_33, %c0_34] : memref<3x12x128xbf16, #tpu.memory_space<vmem>>, vector<1x12x128xbf16>
    %34 = vector.shape_cast %33 : vector<1x12x128xbf16> to vector<12x128xbf16>
    %cst_35 = arith.constant dense<0.000000e+00> : vector<16x128xf32>
    %35 = tpu.matmul %32, %34, %cst_35 {dimension_numbers = #tpu.dot_dimension_numbers<[1], [0], [0], [1], [0, 0, 1, 1], [], []>} : vector<16x12xbf16>, vector<12x128xbf16>, vector<16x128xf32> -> vector<16x128xf32>
    %c0_36 = arith.constant 0 : index
    %c0_37 = arith.constant 0 : index
    %c0_38 = arith.constant 0 : index
    %c0_39 = arith.constant 0 : index
    %36 = vector.load %arg6[%c0_36, %c0_37, %c0_38, %c0_39] : memref<1x8x16x128xf32, #tpu.memory_space<vmem>>, vector<1x1x16x128xf32>
    %37 = vector.shape_cast %36 : vector<1x1x16x128xf32> to vector<16x128xf32>
    %38 = arith.addf %37, %35 : vector<16x128xf32>
    %c0_40 = arith.constant 0 : index
    %c0_41 = arith.constant 0 : index
    %c0_42 = arith.constant 0 : index
    %c0_43 = arith.constant 0 : index
    %39 = vector.load %arg6[%c0_40, %c0_41, %c0_42, %c0_43] : memref<1x8x16x128xf32, #tpu.memory_space<vmem>>, vector<1x1x16x128xf32>
    %40 = vector.shape_cast %39 : vector<1x1x16x128xf32> to vector<16x128xf32>
    %41 = vector.shape_cast %38 : vector<16x128xf32> to vector<1x1x16x128xf32>
    tpu.vector_store %arg6[%c0_40, %c0_41, %c0_42, %c0_43], %41 {strides = array<i32>} : memref<1x8x16x128xf32, #tpu.memory_space<vmem>>, vector<1x1x16x128xf32>,
    %c0_44 = arith.constant 0 : index
    %c0_45 = arith.constant 0 : index
    %c0_46 = arith.constant 0 : index
    %c0_47 = arith.constant 0 : index
    %42 = vector.load %arg6[%c0_44, %c0_45, %c0_46, %c0_47] : memref<1x8x16x128xf32, #tpu.memory_space<vmem>>, vector<1x1x16x128xf32>
    %43 = vector.shape_cast %42 : vector<1x1x16x128xf32> to vector<16x128xf32>
    %44 = vector.broadcast %1 : vector<1x128xf32> to vector<16x128xf32>
    %45 = arith.mulf %43, %44 : vector<16x128xf32>
    %46 = vector.broadcast %2 : vector<1x128xf32> to vector<16x128xf32>
    %47 = arith.addf %45, %46 : vector<16x128xf32>
    %cst_48 = arith.constant 0.000000e+00 : f32
    %48 = vector.broadcast %cst_48 : f32 to vector<16x128xf32>
    %49 = arith.maximumf %47, %48 : vector<16x128xf32>
    %c0_49 = arith.constant 0 : index
    %c0_50 = arith.constant 0 : index
    %c0_51 = arith.constant 0 : index
    %c0_52 = arith.constant 0 : index
    %50 = vector.load %arg6[%c0_49, %c0_50, %c0_51, %c0_52] : memref<1x8x16x128xf32, #tpu.memory_space<vmem>>, vector<1x1x16x128xf32>
    %51 = vector.shape_cast %50 : vector<1x1x16x128xf32> to vector<16x128xf32>
    %52 = vector.shape_cast %49 : vector<16x128xf32> to vector<1x1x16x128xf32>
    tpu.vector_store %arg6[%c0_49, %c0_50, %c0_51, %c0_52], %52 {strides = array<i32>} : memref<1x8x16x128xf32, #tpu.memory_space<vmem>>, vector<1x1x16x128xf32>,
    %c1_i32_53 = arith.constant 1 : i32
    %53 = arith.addi %0, %c1_i32_53 : i32
    %c0_i32_54 = arith.constant 0 : i32
    %54 = arith.addi %53, %c0_i32_54 : i32
    %c0_55 = arith.constant 0 : index
    %55 = arith.index_cast %54 : i32 to index
    %c0_56 = arith.constant 0 : index
    %c0_57 = arith.constant 0 : index
    %56 = vector.load %arg2[%c0_55, %55, %c0_56, %c0_57] : memref<1x18x16x12xbf16, #tpu.memory_space<vmem>>, vector<1x1x16x12xbf16>
    %57 = vector.shape_cast %56 : vector<1x1x16x12xbf16> to vector<16x12xbf16>
    %c0_58 = arith.constant 0 : index
    %c0_59 = arith.constant 0 : index
    %c0_60 = arith.constant 0 : index
    %58 = vector.load %arg3[%c0_58, %c0_59, %c0_60] : memref<3x12x128xbf16, #tpu.memory_space<vmem>>, vector<1x12x128xbf16>
    %59 = vector.shape_cast %58 : vector<1x12x128xbf16> to vector<12x128xbf16>
    %cst_61 = arith.constant dense<0.000000e+00> : vector<16x128xf32>
    %60 = tpu.matmul %57, %59, %cst_61 {dimension_numbers = #tpu.dot_dimension_numbers<[1], [0], [0], [1], [0, 0, 1, 1], [], []>} : vector<16x12xbf16>, vector<12x128xbf16>, vector<16x128xf32> -> vector<16x128xf32>
    %c0_62 = arith.constant 0 : index
    %c1_63 = arith.constant 1 : index
    %c0_64 = arith.constant 0 : index
    %c0_65 = arith.constant 0 : index
    %61 = vector.load %arg6[%c0_62, %c1_63, %c0_64, %c0_65] : memref<1x8x16x128xf32, #tpu.memory_space<vmem>>, vector<1x1x16x128xf32>
    %62 = vector.shape_cast %61 : vector<1x1x16x128xf32> to vector<16x128xf32>
    %63 = vector.shape_cast %60 : vector<16x128xf32> to vector<1x1x16x128xf32>
    tpu.vector_store %arg6[%c0_62, %c1_63, %c0_64, %c0_65], %63 {strides = array<i32>} : memref<1x8x16x128xf32, #tpu.memory_space<vmem>>, vector<1x1x16x128xf32>,
    %c1_i32_66 = arith.constant 1 : i32
    %64 = arith.addi %0, %c1_i32_66 : i32
    %c1_i32_67 = arith.constant 1 : i32
    %65 = arith.addi %64, %c1_i32_67 : i32
    %c0_68 = arith.constant 0 : index
    %66 = arith.index_cast %65 : i32 to index
    %c0_69 = arith.constant 0 : index
    %c0_70 = arith.constant 0 : index
    %67 = vector.load %arg2[%c0_68, %66, %c0_69, %c0_70] : memref<1x18x16x12xbf16, #tpu.memory_space<vmem>>, vector<1x1x16x12xbf16>
    %68 = vector.shape_cast %67 : vector<1x1x16x12xbf16> to vector<16x12xbf16>
    %c1_71 = arith.constant 1 : index
    %c0_72 = arith.constant 0 : index
    %c0_73 = arith.constant 0 : index
    %69 = vector.load %arg3[%c1_71, %c0_72, %c0_73] : memref<3x12x128xbf16, #tpu.memory_space<vmem>>, vector<1x12x128xbf16>
    %70 = vector.shape_cast %69 : vector<1x12x128xbf16> to vector<12x128xbf16>
    %cst_74 = arith.constant dense<0.000000e+00> : vector<16x128xf32>
    %71 = tpu.matmul %68, %70, %cst_74 {dimension_numbers = #tpu.dot_dimension_numbers<[1], [0], [0], [1], [0, 0, 1, 1], [], []>} : vector<16x12xbf16>, vector<12x128xbf16>, vector<16x128xf32> -> vector<16x128xf32>
    %c0_75 = arith.constant 0 : index
    %c1_76 = arith.constant 1 : index
    %c0_77 = arith.constant 0 : index
    %c0_78 = arith.constant 0 : index
    %72 = vector.load %arg6[%c0_75, %c1_76, %c0_77, %c0_78] : memref<1x8x16x128xf32, #tpu.memory_space<vmem>>, vector<1x1x16x128xf32>
    %73 = vector.shape_cast %72 : vector<1x1x16x128xf32> to vector<16x128xf32>
    %74 = arith.addf %73, %71 : vector<16x128xf32>
    %c0_79 = arith.constant 0 : index
    %c1_80 = arith.constant 1 : index
    %c0_81 = arith.constant 0 : index
    %c0_82 = arith.constant 0 : index
    %75 = vector.load %arg6[%c0_79, %c1_80, %c0_81, %c0_82] : memref<1x8x16x128xf32, #tpu.memory_space<vmem>>, vector<1x1x16x128xf32>
    %76 = vector.shape_cast %75 : vector<1x1x16x128xf32> to vector<16x128xf32>
    %77 = vector.shape_cast %74 : vector<16x128xf32> to vector<1x1x16x128xf32>
    tpu.vector_store %arg6[%c0_79, %c1_80, %c0_81, %c0_82], %77 {strides = array<i32>} : memref<1x8x16x128xf32, #tpu.memory_space<vmem>>, vector<1x1x16x128xf32>,
    %c1_i32_83 = arith.constant 1 : i32
    %78 = arith.addi %0, %c1_i32_83 : i32
    %c2_i32_84 = arith.constant 2 : i32
    %79 = arith.addi %78, %c2_i32_84 : i32
    %c0_85 = arith.constant 0 : index
    %80 = arith.index_cast %79 : i32 to index
    %c0_86 = arith.constant 0 : index
    %c0_87 = arith.constant 0 : index
    %81 = vector.load %arg2[%c0_85, %80, %c0_86, %c0_87] : memref<1x18x16x12xbf16, #tpu.memory_space<vmem>>, vector<1x1x16x12xbf16>
    %82 = vector.shape_cast %81 : vector<1x1x16x12xbf16> to vector<16x12xbf16>
    %c2_88 = arith.constant 2 : index
    %c0_89 = arith.constant 0 : index
    %c0_90 = arith.constant 0 : index
    %83 = vector.load %arg3[%c2_88, %c0_89, %c0_90] : memref<3x12x128xbf16, #tpu.memory_space<vmem>>, vector<1x12x128xbf16>
    %84 = vector.shape_cast %83 : vector<1x12x128xbf16> to vector<12x128xbf16>
    %cst_91 = arith.constant dense<0.000000e+00> : vector<16x128xf32>
    %85 = tpu.matmul %82, %84, %cst_91 {dimension_numbers = #tpu.dot_dimension_numbers<[1], [0], [0], [1], [0, 0, 1, 1], [], []>} : vector<16x12xbf16>, vector<12x128xbf16>, vector<16x128xf32> -> vector<16x128xf32>
    %c0_92 = arith.constant 0 : index
    %c1_93 = arith.constant 1 : index
    %c0_94 = arith.constant 0 : index
    %c0_95 = arith.constant 0 : index
    %86 = vector.load %arg6[%c0_92, %c1_93, %c0_94, %c0_95] : memref<1x8x16x128xf32, #tpu.memory_space<vmem>>, vector<1x1x16x128xf32>
    %87 = vector.shape_cast %86 : vector<1x1x16x128xf32> to vector<16x128xf32>
    %88 = arith.addf %87, %85 : vector<16x128xf32>
    %c0_96 = arith.constant 0 : index
    %c1_97 = arith.constant 1 : index
    %c0_98 = arith.constant 0 : index
    %c0_99 = arith.constant 0 : index
    %89 = vector.load %arg6[%c0_96, %c1_97, %c0_98, %c0_99] : memref<1x8x16x128xf32, #tpu.memory_space<vmem>>, vector<1x1x16x128xf32>
    %90 = vector.shape_cast %89 : vector<1x1x16x128xf32> to vector<16x128xf32>
    %91 = vector.shape_cast %88 : vector<16x128xf32> to vector<1x1x16x128xf32>
    tpu.vector_store %arg6[%c0_96, %c1_97, %c0_98, %c0_99], %91 {strides = array<i32>} : memref<1x8x16x128xf32, #tpu.memory_space<vmem>>, vector<1x1x16x128xf32>,
    %c0_100 = arith.constant 0 : index
    %c1_101 = arith.constant 1 : index
    %c0_102 = arith.constant 0 : index
    %c0_103 = arith.constant 0 : index
    %92 = vector.load %arg6[%c0_100, %c1_101, %c0_102, %c0_103] : memref<1x8x16x128xf32, #tpu.memory_space<vmem>>, vector<1x1x16x128xf32>
    %93 = vector.shape_cast %92 : vector<1x1x16x128xf32> to vector<16x128xf32>
    %94 = vector.broadcast %1 : vector<1x128xf32> to vector<16x128xf32>
    %95 = arith.mulf %93, %94 : vector<16x128xf32>
    %96 = vector.broadcast %2 : vector<1x128xf32> to vector<16x128xf32>
    %97 = arith.addf %95, %96 : vector<16x128xf32>
    %cst_104 = arith.constant 0.000000e+00 : f32
    %98 = vector.broadcast %cst_104 : f32 to vector<16x128xf32>
    %99 = arith.maximumf %97, %98 : vector<16x128xf32>
    %c0_105 = arith.constant 0 : index
    %c1_106 = arith.constant 1 : index
    %c0_107 = arith.constant 0 : index
    %c0_108 = arith.constant 0 : index
    %100 = vector.load %arg6[%c0_105, %c1_106, %c0_107, %c0_108] : memref<1x8x16x128xf32, #tpu.memory_space<vmem>>, vector<1x1x16x128xf32>
    %101 = vector.shape_cast %100 : vector<1x1x16x128xf32> to vector<16x128xf32>
    %102 = vector.shape_cast %99 : vector<16x128xf32> to vector<1x1x16x128xf32>
    tpu.vector_store %arg6[%c0_105, %c1_106, %c0_107, %c0_108], %102 {strides = array<i32>} : memref<1x8x16x128xf32, #tpu.memory_space<vmem>>, vector<1x1x16x128xf32>,
    %c2_i32_109 = arith.constant 2 : i32
    %103 = arith.addi %0, %c2_i32_109 : i32
    %c0_i32_110 = arith.constant 0 : i32
    %104 = arith.addi %103, %c0_i32_110 : i32
    %c0_111 = arith.constant 0 : index
    %105 = arith.index_cast %104 : i32 to index
    %c0_112 = arith.constant 0 : index
    %c0_113 = arith.constant 0 : index
    %106 = vector.load %arg2[%c0_111, %105, %c0_112, %c0_113] : memref<1x18x16x12xbf16, #tpu.memory_space<vmem>>, vector<1x1x16x12xbf16>
    %107 = vector.shape_cast %106 : vector<1x1x16x12xbf16> to vector<16x12xbf16>
    %c0_114 = arith.constant 0 : index
    %c0_115 = arith.constant 0 : index
    %c0_116 = arith.constant 0 : index
    %108 = vector.load %arg3[%c0_114, %c0_115, %c0_116] : memref<3x12x128xbf16, #tpu.memory_space<vmem>>, vector<1x12x128xbf16>
    %109 = vector.shape_cast %108 : vector<1x12x128xbf16> to vector<12x128xbf16>
    %cst_117 = arith.constant dense<0.000000e+00> : vector<16x128xf32>
    %110 = tpu.matmul %107, %109, %cst_117 {dimension_numbers = #tpu.dot_dimension_numbers<[1], [0], [0], [1], [0, 0, 1, 1], [], []>} : vector<16x12xbf16>, vector<12x128xbf16>, vector<16x128xf32> -> vector<16x128xf32>
    %c0_118 = arith.constant 0 : index
    %c2_119 = arith.constant 2 : index
    %c0_120 = arith.constant 0 : index
    %c0_121 = arith.constant 0 : index
    %111 = vector.load %arg6[%c0_118, %c2_119, %c0_120, %c0_121] : memref<1x8x16x128xf32, #tpu.memory_space<vmem>>, vector<1x1x16x128xf32>
    %112 = vector.shape_cast %111 : vector<1x1x16x128xf32> to vector<16x128xf32>
    %113 = vector.shape_cast %110 : vector<16x128xf32> to vector<1x1x16x128xf32>
    tpu.vector_store %arg6[%c0_118, %c2_119, %c0_120, %c0_121], %113 {strides = array<i32>} : memref<1x8x16x128xf32, #tpu.memory_space<vmem>>, vector<1x1x16x128xf32>,
    %c2_i32_122 = arith.constant 2 : i32
    %114 = arith.addi %0, %c2_i32_122 : i32
    %c1_i32_123 = arith.constant 1 : i32
    %115 = arith.addi %114, %c1_i32_123 : i32
    %c0_124 = arith.constant 0 : index
    %116 = arith.index_cast %115 : i32 to index
    %c0_125 = arith.constant 0 : index
    %c0_126 = arith.constant 0 : index
    %117 = vector.load %arg2[%c0_124, %116, %c0_125, %c0_126] : memref<1x18x16x12xbf16, #tpu.memory_space<vmem>>, vector<1x1x16x12xbf16>
    %118 = vector.shape_cast %117 : vector<1x1x16x12xbf16> to vector<16x12xbf16>
    %c1_127 = arith.constant 1 : index
    %c0_128 = arith.constant 0 : index
    %c0_129 = arith.constant 0 : index
    %119 = vector.load %arg3[%c1_127, %c0_128, %c0_129] : memref<3x12x128xbf16, #tpu.memory_space<vmem>>, vector<1x12x128xbf16>
    %120 = vector.shape_cast %119 : vector<1x12x128xbf16> to vector<12x128xbf16>
    %cst_130 = arith.constant dense<0.000000e+00> : vector<16x128xf32>
    %121 = tpu.matmul %118, %120, %cst_130 {dimension_numbers = #tpu.dot_dimension_numbers<[1], [0], [0], [1], [0, 0, 1, 1], [], []>} : vector<16x12xbf16>, vector<12x128xbf16>, vector<16x128xf32> -> vector<16x128xf32>
    %c0_131 = arith.constant 0 : index
    %c2_132 = arith.constant 2 : index
    %c0_133 = arith.constant 0 : index
    %c0_134 = arith.constant 0 : index
    %122 = vector.load %arg6[%c0_131, %c2_132, %c0_133, %c0_134] : memref<1x8x16x128xf32, #tpu.memory_space<vmem>>, vector<1x1x16x128xf32>
    %123 = vector.shape_cast %122 : vector<1x1x16x128xf32> to vector<16x128xf32>
    %124 = arith.addf %123, %121 : vector<16x128xf32>
    %c0_135 = arith.constant 0 : index
    %c2_136 = arith.constant 2 : index
    %c0_137 = arith.constant 0 : index
    %c0_138 = arith.constant 0 : index
    %125 = vector.load %arg6[%c0_135, %c2_136, %c0_137, %c0_138] : memref<1x8x16x128xf32, #tpu.memory_space<vmem>>, vector<1x1x16x128xf32>
    %126 = vector.shape_cast %125 : vector<1x1x16x128xf32> to vector<16x128xf32>
    %127 = vector.shape_cast %124 : vector<16x128xf32> to vector<1x1x16x128xf32>
    tpu.vector_store %arg6[%c0_135, %c2_136, %c0_137, %c0_138], %127 {strides = array<i32>} : memref<1x8x16x128xf32, #tpu.memory_space<vmem>>, vector<1x1x16x128xf32>,
    %c2_i32_139 = arith.constant 2 : i32
    %128 = arith.addi %0, %c2_i32_139 : i32
    %c2_i32_140 = arith.constant 2 : i32
    %129 = arith.addi %128, %c2_i32_140 : i32
    %c0_141 = arith.constant 0 : index
    %130 = arith.index_cast %129 : i32 to index
    %c0_142 = arith.constant 0 : index
    %c0_143 = arith.constant 0 : index
    %131 = vector.load %arg2[%c0_141, %130, %c0_142, %c0_143] : memref<1x18x16x12xbf16, #tpu.memory_space<vmem>>, vector<1x1x16x12xbf16>
    %132 = vector.shape_cast %131 : vector<1x1x16x12xbf16> to vector<16x12xbf16>
    %c2_144 = arith.constant 2 : index
    %c0_145 = arith.constant 0 : index
    %c0_146 = arith.constant 0 : index
    %133 = vector.load %arg3[%c2_144, %c0_145, %c0_146] : memref<3x12x128xbf16, #tpu.memory_space<vmem>>, vector<1x12x128xbf16>
    %134 = vector.shape_cast %133 : vector<1x12x128xbf16> to vector<12x128xbf16>
    %cst_147 = arith.constant dense<0.000000e+00> : vector<16x128xf32>
    %135 = tpu.matmul %132, %134, %cst_147 {dimension_numbers = #tpu.dot_dimension_numbers<[1], [0], [0], [1], [0, 0, 1, 1], [], []>} : vector<16x12xbf16>, vector<12x128xbf16>, vector<16x128xf32> -> vector<16x128xf32>
    %c0_148 = arith.constant 0 : index
    %c2_149 = arith.constant 2 : index
    %c0_150 = arith.constant 0 : index
    %c0_151 = arith.constant 0 : index
    %136 = vector.load %arg6[%c0_148, %c2_149, %c0_150, %c0_151] : memref<1x8x16x128xf32, #tpu.memory_space<vmem>>, vector<1x1x16x128xf32>
    %137 = vector.shape_cast %136 : vector<1x1x16x128xf32> to vector<16x128xf32>
    %138 = arith.addf %137, %135 : vector<16x128xf32>
    %c0_152 = arith.constant 0 : index
    %c2_153 = arith.constant 2 : index
    %c0_154 = arith.constant 0 : index
    %c0_155 = arith.constant 0 : index
    %139 = vector.load %arg6[%c0_152, %c2_153, %c0_154, %c0_155] : memref<1x8x16x128xf32, #tpu.memory_space<vmem>>, vector<1x1x16x128xf32>
    %140 = vector.shape_cast %139 : vector<1x1x16x128xf32> to vector<16x128xf32>
    %141 = vector.shape_cast %138 : vector<16x128xf32> to vector<1x1x16x128xf32>
    tpu.vector_store %arg6[%c0_152, %c2_153, %c0_154, %c0_155], %141 {strides = array<i32>} : memref<1x8x16x128xf32, #tpu.memory_space<vmem>>, vector<1x1x16x128xf32>,
    %c0_156 = arith.constant 0 : index
    %c2_157 = arith.constant 2 : index
    %c0_158 = arith.constant 0 : index
    %c0_159 = arith.constant 0 : index
    %142 = vector.load %arg6[%c0_156, %c2_157, %c0_158, %c0_159] : memref<1x8x16x128xf32, #tpu.memory_space<vmem>>, vector<1x1x16x128xf32>
    %143 = vector.shape_cast %142 : vector<1x1x16x128xf32> to vector<16x128xf32>
    %144 = vector.broadcast %1 : vector<1x128xf32> to vector<16x128xf32>
    %145 = arith.mulf %143, %144 : vector<16x128xf32>
    %146 = vector.broadcast %2 : vector<1x128xf32> to vector<16x128xf32>
    %147 = arith.addf %145, %146 : vector<16x128xf32>
    %cst_160 = arith.constant 0.000000e+00 : f32
    %148 = vector.broadcast %cst_160 : f32 to vector<16x128xf32>
    %149 = arith.maximumf %147, %148 : vector<16x128xf32>
    %c0_161 = arith.constant 0 : index
    %c2_162 = arith.constant 2 : index
    %c0_163 = arith.constant 0 : index
    %c0_164 = arith.constant 0 : index
    %150 = vector.load %arg6[%c0_161, %c2_162, %c0_163, %c0_164] : memref<1x8x16x128xf32, #tpu.memory_space<vmem>>, vector<1x1x16x128xf32>
    %151 = vector.shape_cast %150 : vector<1x1x16x128xf32> to vector<16x128xf32>
    %152 = vector.shape_cast %149 : vector<16x128xf32> to vector<1x1x16x128xf32>
    tpu.vector_store %arg6[%c0_161, %c2_162, %c0_163, %c0_164], %152 {strides = array<i32>} : memref<1x8x16x128xf32, #tpu.memory_space<vmem>>, vector<1x1x16x128xf32>,
    %c3_i32 = arith.constant 3 : i32
    %153 = arith.addi %0, %c3_i32 : i32
    %c0_i32_165 = arith.constant 0 : i32
    %154 = arith.addi %153, %c0_i32_165 : i32
    %c0_166 = arith.constant 0 : index
    %155 = arith.index_cast %154 : i32 to index
    %c0_167 = arith.constant 0 : index
    %c0_168 = arith.constant 0 : index
    %156 = vector.load %arg2[%c0_166, %155, %c0_167, %c0_168] : memref<1x18x16x12xbf16, #tpu.memory_space<vmem>>, vector<1x1x16x12xbf16>
    %157 = vector.shape_cast %156 : vector<1x1x16x12xbf16> to vector<16x12xbf16>
    %c0_169 = arith.constant 0 : index
    %c0_170 = arith.constant 0 : index
    %c0_171 = arith.constant 0 : index
    %158 = vector.load %arg3[%c0_169, %c0_170, %c0_171] : memref<3x12x128xbf16, #tpu.memory_space<vmem>>, vector<1x12x128xbf16>
    %159 = vector.shape_cast %158 : vector<1x12x128xbf16> to vector<12x128xbf16>
    %cst_172 = arith.constant dense<0.000000e+00> : vector<16x128xf32>
    %160 = tpu.matmul %157, %159, %cst_172 {dimension_numbers = #tpu.dot_dimension_numbers<[1], [0], [0], [1], [0, 0, 1, 1], [], []>} : vector<16x12xbf16>, vector<12x128xbf16>, vector<16x128xf32> -> vector<16x128xf32>
    %c0_173 = arith.constant 0 : index
    %c3 = arith.constant 3 : index
    %c0_174 = arith.constant 0 : index
    %c0_175 = arith.constant 0 : index
    %161 = vector.load %arg6[%c0_173, %c3, %c0_174, %c0_175] : memref<1x8x16x128xf32, #tpu.memory_space<vmem>>, vector<1x1x16x128xf32>
    %162 = vector.shape_cast %161 : vector<1x1x16x128xf32> to vector<16x128xf32>
    %163 = vector.shape_cast %160 : vector<16x128xf32> to vector<1x1x16x128xf32>
    tpu.vector_store %arg6[%c0_173, %c3, %c0_174, %c0_175], %163 {strides = array<i32>} : memref<1x8x16x128xf32, #tpu.memory_space<vmem>>, vector<1x1x16x128xf32>,
    %c3_i32_176 = arith.constant 3 : i32
    %164 = arith.addi %0, %c3_i32_176 : i32
    %c1_i32_177 = arith.constant 1 : i32
    %165 = arith.addi %164, %c1_i32_177 : i32
    %c0_178 = arith.constant 0 : index
    %166 = arith.index_cast %165 : i32 to index
    %c0_179 = arith.constant 0 : index
    %c0_180 = arith.constant 0 : index
    %167 = vector.load %arg2[%c0_178, %166, %c0_179, %c0_180] : memref<1x18x16x12xbf16, #tpu.memory_space<vmem>>, vector<1x1x16x12xbf16>
    %168 = vector.shape_cast %167 : vector<1x1x16x12xbf16> to vector<16x12xbf16>
    %c1_181 = arith.constant 1 : index
    %c0_182 = arith.constant 0 : index
    %c0_183 = arith.constant 0 : index
    %169 = vector.load %arg3[%c1_181, %c0_182, %c0_183] : memref<3x12x128xbf16, #tpu.memory_space<vmem>>, vector<1x12x128xbf16>
    %170 = vector.shape_cast %169 : vector<1x12x128xbf16> to vector<12x128xbf16>
    %cst_184 = arith.constant dense<0.000000e+00> : vector<16x128xf32>
    %171 = tpu.matmul %168, %170, %cst_184 {dimension_numbers = #tpu.dot_dimension_numbers<[1], [0], [0], [1], [0, 0, 1, 1], [], []>} : vector<16x12xbf16>, vector<12x128xbf16>, vector<16x128xf32> -> vector<16x128xf32>
    %c0_185 = arith.constant 0 : index
    %c3_186 = arith.constant 3 : index
    %c0_187 = arith.constant 0 : index
    %c0_188 = arith.constant 0 : index
    %172 = vector.load %arg6[%c0_185, %c3_186, %c0_187, %c0_188] : memref<1x8x16x128xf32, #tpu.memory_space<vmem>>, vector<1x1x16x128xf32>
    %173 = vector.shape_cast %172 : vector<1x1x16x128xf32> to vector<16x128xf32>
    %174 = arith.addf %173, %171 : vector<16x128xf32>
    %c0_189 = arith.constant 0 : index
    %c3_190 = arith.constant 3 : index
    %c0_191 = arith.constant 0 : index
    %c0_192 = arith.constant 0 : index
    %175 = vector.load %arg6[%c0_189, %c3_190, %c0_191, %c0_192] : memref<1x8x16x128xf32, #tpu.memory_space<vmem>>, vector<1x1x16x128xf32>
    %176 = vector.shape_cast %175 : vector<1x1x16x128xf32> to vector<16x128xf32>
    %177 = vector.shape_cast %174 : vector<16x128xf32> to vector<1x1x16x128xf32>
    tpu.vector_store %arg6[%c0_189, %c3_190, %c0_191, %c0_192], %177 {strides = array<i32>} : memref<1x8x16x128xf32, #tpu.memory_space<vmem>>, vector<1x1x16x128xf32>,
    %c3_i32_193 = arith.constant 3 : i32
    %178 = arith.addi %0, %c3_i32_193 : i32
    %c2_i32_194 = arith.constant 2 : i32
    %179 = arith.addi %178, %c2_i32_194 : i32
    %c0_195 = arith.constant 0 : index
    %180 = arith.index_cast %179 : i32 to index
    %c0_196 = arith.constant 0 : index
    %c0_197 = arith.constant 0 : index
    %181 = vector.load %arg2[%c0_195, %180, %c0_196, %c0_197] : memref<1x18x16x12xbf16, #tpu.memory_space<vmem>>, vector<1x1x16x12xbf16>
    %182 = vector.shape_cast %181 : vector<1x1x16x12xbf16> to vector<16x12xbf16>
    %c2_198 = arith.constant 2 : index
    %c0_199 = arith.constant 0 : index
    %c0_200 = arith.constant 0 : index
    %183 = vector.load %arg3[%c2_198, %c0_199, %c0_200] : memref<3x12x128xbf16, #tpu.memory_space<vmem>>, vector<1x12x128xbf16>
    %184 = vector.shape_cast %183 : vector<1x12x128xbf16> to vector<12x128xbf16>
    %cst_201 = arith.constant dense<0.000000e+00> : vector<16x128xf32>
    %185 = tpu.matmul %182, %184, %cst_201 {dimension_numbers = #tpu.dot_dimension_numbers<[1], [0], [0], [1], [0, 0, 1, 1], [], []>} : vector<16x12xbf16>, vector<12x128xbf16>, vector<16x128xf32> -> vector<16x128xf32>
    %c0_202 = arith.constant 0 : index
    %c3_203 = arith.constant 3 : index
    %c0_204 = arith.constant 0 : index
    %c0_205 = arith.constant 0 : index
    %186 = vector.load %arg6[%c0_202, %c3_203, %c0_204, %c0_205] : memref<1x8x16x128xf32, #tpu.memory_space<vmem>>, vector<1x1x16x128xf32>
    %187 = vector.shape_cast %186 : vector<1x1x16x128xf32> to vector<16x128xf32>
    %188 = arith.addf %187, %185 : vector<16x128xf32>
    %c0_206 = arith.constant 0 : index
    %c3_207 = arith.constant 3 : index
    %c0_208 = arith.constant 0 : index
    %c0_209 = arith.constant 0 : index
    %189 = vector.load %arg6[%c0_206, %c3_207, %c0_208, %c0_209] : memref<1x8x16x128xf32, #tpu.memory_space<vmem>>, vector<1x1x16x128xf32>
    %190 = vector.shape_cast %189 : vector<1x1x16x128xf32> to vector<16x128xf32>
    %191 = vector.shape_cast %188 : vector<16x128xf32> to vector<1x1x16x128xf32>
    tpu.vector_store %arg6[%c0_206, %c3_207, %c0_208, %c0_209], %191 {strides = array<i32>} : memref<1x8x16x128xf32, #tpu.memory_space<vmem>>, vector<1x1x16x128xf32>,
    %c0_210 = arith.constant 0 : index
    %c3_211 = arith.constant 3 : index
    %c0_212 = arith.constant 0 : index
    %c0_213 = arith.constant 0 : index
    %192 = vector.load %arg6[%c0_210, %c3_211, %c0_212, %c0_213] : memref<1x8x16x128xf32, #tpu.memory_space<vmem>>, vector<1x1x16x128xf32>
    %193 = vector.shape_cast %192 : vector<1x1x16x128xf32> to vector<16x128xf32>
    %194 = vector.broadcast %1 : vector<1x128xf32> to vector<16x128xf32>
    %195 = arith.mulf %193, %194 : vector<16x128xf32>
    %196 = vector.broadcast %2 : vector<1x128xf32> to vector<16x128xf32>
    %197 = arith.addf %195, %196 : vector<16x128xf32>
    %cst_214 = arith.constant 0.000000e+00 : f32
    %198 = vector.broadcast %cst_214 : f32 to vector<16x128xf32>
    %199 = arith.maximumf %197, %198 : vector<16x128xf32>
    %c0_215 = arith.constant 0 : index
    %c3_216 = arith.constant 3 : index
    %c0_217 = arith.constant 0 : index
    %c0_218 = arith.constant 0 : index
    %200 = vector.load %arg6[%c0_215, %c3_216, %c0_217, %c0_218] : memref<1x8x16x128xf32, #tpu.memory_space<vmem>>, vector<1x1x16x128xf32>
    %201 = vector.shape_cast %200 : vector<1x1x16x128xf32> to vector<16x128xf32>
    %202 = vector.shape_cast %199 : vector<16x128xf32> to vector<1x1x16x128xf32>
    tpu.vector_store %arg6[%c0_215, %c3_216, %c0_217, %c0_218], %202 {strides = array<i32>} : memref<1x8x16x128xf32, #tpu.memory_space<vmem>>, vector<1x1x16x128xf32>,
    %c4_i32 = arith.constant 4 : i32
    %203 = arith.addi %0, %c4_i32 : i32
    %c0_i32_219 = arith.constant 0 : i32
    %204 = arith.addi %203, %c0_i32_219 : i32
    %c0_220 = arith.constant 0 : index
    %205 = arith.index_cast %204 : i32 to index
    %c0_221 = arith.constant 0 : index
    %c0_222 = arith.constant 0 : index
    %206 = vector.load %arg2[%c0_220, %205, %c0_221, %c0_222] : memref<1x18x16x12xbf16, #tpu.memory_space<vmem>>, vector<1x1x16x12xbf16>
    %207 = vector.shape_cast %206 : vector<1x1x16x12xbf16> to vector<16x12xbf16>
    %c0_223 = arith.constant 0 : index
    %c0_224 = arith.constant 0 : index
    %c0_225 = arith.constant 0 : index
    %208 = vector.load %arg3[%c0_223, %c0_224, %c0_225] : memref<3x12x128xbf16, #tpu.memory_space<vmem>>, vector<1x12x128xbf16>
    %209 = vector.shape_cast %208 : vector<1x12x128xbf16> to vector<12x128xbf16>
    %cst_226 = arith.constant dense<0.000000e+00> : vector<16x128xf32>
    %210 = tpu.matmul %207, %209, %cst_226 {dimension_numbers = #tpu.dot_dimension_numbers<[1], [0], [0], [1], [0, 0, 1, 1], [], []>} : vector<16x12xbf16>, vector<12x128xbf16>, vector<16x128xf32> -> vector<16x128xf32>
    %c0_227 = arith.constant 0 : index
    %c4 = arith.constant 4 : index
    %c0_228 = arith.constant 0 : index
    %c0_229 = arith.constant 0 : index
    %211 = vector.load %arg6[%c0_227, %c4, %c0_228, %c0_229] : memref<1x8x16x128xf32, #tpu.memory_space<vmem>>, vector<1x1x16x128xf32>
    %212 = vector.shape_cast %211 : vector<1x1x16x128xf32> to vector<16x128xf32>
    %213 = vector.shape_cast %210 : vector<16x128xf32> to vector<1x1x16x128xf32>
    tpu.vector_store %arg6[%c0_227, %c4, %c0_228, %c0_229], %213 {strides = array<i32>} : memref<1x8x16x128xf32, #tpu.memory_space<vmem>>, vector<1x1x16x128xf32>,
    %c4_i32_230 = arith.constant 4 : i32
    %214 = arith.addi %0, %c4_i32_230 : i32
    %c1_i32_231 = arith.constant 1 : i32
    %215 = arith.addi %214, %c1_i32_231 : i32
    %c0_232 = arith.constant 0 : index
    %216 = arith.index_cast %215 : i32 to index
    %c0_233 = arith.constant 0 : index
    %c0_234 = arith.constant 0 : index
    %217 = vector.load %arg2[%c0_232, %216, %c0_233, %c0_234] : memref<1x18x16x12xbf16, #tpu.memory_space<vmem>>, vector<1x1x16x12xbf16>
    %218 = vector.shape_cast %217 : vector<1x1x16x12xbf16> to vector<16x12xbf16>
    %c1_235 = arith.constant 1 : index
    %c0_236 = arith.constant 0 : index
    %c0_237 = arith.constant 0 : index
    %219 = vector.load %arg3[%c1_235, %c0_236, %c0_237] : memref<3x12x128xbf16, #tpu.memory_space<vmem>>, vector<1x12x128xbf16>
    %220 = vector.shape_cast %219 : vector<1x12x128xbf16> to vector<12x128xbf16>
    %cst_238 = arith.constant dense<0.000000e+00> : vector<16x128xf32>
    %221 = tpu.matmul %218, %220, %cst_238 {dimension_numbers = #tpu.dot_dimension_numbers<[1], [0], [0], [1], [0, 0, 1, 1], [], []>} : vector<16x12xbf16>, vector<12x128xbf16>, vector<16x128xf32> -> vector<16x128xf32>
    %c0_239 = arith.constant 0 : index
    %c4_240 = arith.constant 4 : index
    %c0_241 = arith.constant 0 : index
    %c0_242 = arith.constant 0 : index
    %222 = vector.load %arg6[%c0_239, %c4_240, %c0_241, %c0_242] : memref<1x8x16x128xf32, #tpu.memory_space<vmem>>, vector<1x1x16x128xf32>
    %223 = vector.shape_cast %222 : vector<1x1x16x128xf32> to vector<16x128xf32>
    %224 = arith.addf %223, %221 : vector<16x128xf32>
    %c0_243 = arith.constant 0 : index
    %c4_244 = arith.constant 4 : index
    %c0_245 = arith.constant 0 : index
    %c0_246 = arith.constant 0 : index
    %225 = vector.load %arg6[%c0_243, %c4_244, %c0_245, %c0_246] : memref<1x8x16x128xf32, #tpu.memory_space<vmem>>, vector<1x1x16x128xf32>
    %226 = vector.shape_cast %225 : vector<1x1x16x128xf32> to vector<16x128xf32>
    %227 = vector.shape_cast %224 : vector<16x128xf32> to vector<1x1x16x128xf32>
    tpu.vector_store %arg6[%c0_243, %c4_244, %c0_245, %c0_246], %227 {strides = array<i32>} : memref<1x8x16x128xf32, #tpu.memory_space<vmem>>, vector<1x1x16x128xf32>,
    %c4_i32_247 = arith.constant 4 : i32
    %228 = arith.addi %0, %c4_i32_247 : i32
    %c2_i32_248 = arith.constant 2 : i32
    %229 = arith.addi %228, %c2_i32_248 : i32
    %c0_249 = arith.constant 0 : index
    %230 = arith.index_cast %229 : i32 to index
    %c0_250 = arith.constant 0 : index
    %c0_251 = arith.constant 0 : index
    %231 = vector.load %arg2[%c0_249, %230, %c0_250, %c0_251] : memref<1x18x16x12xbf16, #tpu.memory_space<vmem>>, vector<1x1x16x12xbf16>
    %232 = vector.shape_cast %231 : vector<1x1x16x12xbf16> to vector<16x12xbf16>
    %c2_252 = arith.constant 2 : index
    %c0_253 = arith.constant 0 : index
    %c0_254 = arith.constant 0 : index
    %233 = vector.load %arg3[%c2_252, %c0_253, %c0_254] : memref<3x12x128xbf16, #tpu.memory_space<vmem>>, vector<1x12x128xbf16>
    %234 = vector.shape_cast %233 : vector<1x12x128xbf16> to vector<12x128xbf16>
    %cst_255 = arith.constant dense<0.000000e+00> : vector<16x128xf32>
    %235 = tpu.matmul %232, %234, %cst_255 {dimension_numbers = #tpu.dot_dimension_numbers<[1], [0], [0], [1], [0, 0, 1, 1], [], []>} : vector<16x12xbf16>, vector<12x128xbf16>, vector<16x128xf32> -> vector<16x128xf32>
    %c0_256 = arith.constant 0 : index
    %c4_257 = arith.constant 4 : index
    %c0_258 = arith.constant 0 : index
    %c0_259 = arith.constant 0 : index
    %236 = vector.load %arg6[%c0_256, %c4_257, %c0_258, %c0_259] : memref<1x8x16x128xf32, #tpu.memory_space<vmem>>, vector<1x1x16x128xf32>
    %237 = vector.shape_cast %236 : vector<1x1x16x128xf32> to vector<16x128xf32>
    %238 = arith.addf %237, %235 : vector<16x128xf32>
    %c0_260 = arith.constant 0 : index
    %c4_261 = arith.constant 4 : index
    %c0_262 = arith.constant 0 : index
    %c0_263 = arith.constant 0 : index
    %239 = vector.load %arg6[%c0_260, %c4_261, %c0_262, %c0_263] : memref<1x8x16x128xf32, #tpu.memory_space<vmem>>, vector<1x1x16x128xf32>
    %240 = vector.shape_cast %239 : vector<1x1x16x128xf32> to vector<16x128xf32>
    %241 = vector.shape_cast %238 : vector<16x128xf32> to vector<1x1x16x128xf32>
    tpu.vector_store %arg6[%c0_260, %c4_261, %c0_262, %c0_263], %241 {strides = array<i32>} : memref<1x8x16x128xf32, #tpu.memory_space<vmem>>, vector<1x1x16x128xf32>,
    %c0_264 = arith.constant 0 : index
    %c4_265 = arith.constant 4 : index
    %c0_266 = arith.constant 0 : index
    %c0_267 = arith.constant 0 : index
    %242 = vector.load %arg6[%c0_264, %c4_265, %c0_266, %c0_267] : memref<1x8x16x128xf32, #tpu.memory_space<vmem>>, vector<1x1x16x128xf32>
    %243 = vector.shape_cast %242 : vector<1x1x16x128xf32> to vector<16x128xf32>
    %244 = vector.broadcast %1 : vector<1x128xf32> to vector<16x128xf32>
    %245 = arith.mulf %243, %244 : vector<16x128xf32>
    %246 = vector.broadcast %2 : vector<1x128xf32> to vector<16x128xf32>
    %247 = arith.addf %245, %246 : vector<16x128xf32>
    %cst_268 = arith.constant 0.000000e+00 : f32
    %248 = vector.broadcast %cst_268 : f32 to vector<16x128xf32>
    %249 = arith.maximumf %247, %248 : vector<16x128xf32>
    %c0_269 = arith.constant 0 : index
    %c4_270 = arith.constant 4 : index
    %c0_271 = arith.constant 0 : index
    %c0_272 = arith.constant 0 : index
    %250 = vector.load %arg6[%c0_269, %c4_270, %c0_271, %c0_272] : memref<1x8x16x128xf32, #tpu.memory_space<vmem>>, vector<1x1x16x128xf32>
    %251 = vector.shape_cast %250 : vector<1x1x16x128xf32> to vector<16x128xf32>
    %252 = vector.shape_cast %249 : vector<16x128xf32> to vector<1x1x16x128xf32>
    tpu.vector_store %arg6[%c0_269, %c4_270, %c0_271, %c0_272], %252 {strides = array<i32>} : memref<1x8x16x128xf32, #tpu.memory_space<vmem>>, vector<1x1x16x128xf32>,
    %c5_i32 = arith.constant 5 : i32
    %253 = arith.addi %0, %c5_i32 : i32
    %c0_i32_273 = arith.constant 0 : i32
    %254 = arith.addi %253, %c0_i32_273 : i32
    %c0_274 = arith.constant 0 : index
    %255 = arith.index_cast %254 : i32 to index
    %c0_275 = arith.constant 0 : index
    %c0_276 = arith.constant 0 : index
    %256 = vector.load %arg2[%c0_274, %255, %c0_275, %c0_276] : memref<1x18x16x12xbf16, #tpu.memory_space<vmem>>, vector<1x1x16x12xbf16>
    %257 = vector.shape_cast %256 : vector<1x1x16x12xbf16> to vector<16x12xbf16>
    %c0_277 = arith.constant 0 : index
    %c0_278 = arith.constant 0 : index
    %c0_279 = arith.constant 0 : index
    %258 = vector.load %arg3[%c0_277, %c0_278, %c0_279] : memref<3x12x128xbf16, #tpu.memory_space<vmem>>, vector<1x12x128xbf16>
    %259 = vector.shape_cast %258 : vector<1x12x128xbf16> to vector<12x128xbf16>
    %cst_280 = arith.constant dense<0.000000e+00> : vector<16x128xf32>
    %260 = tpu.matmul %257, %259, %cst_280 {dimension_numbers = #tpu.dot_dimension_numbers<[1], [0], [0], [1], [0, 0, 1, 1], [], []>} : vector<16x12xbf16>, vector<12x128xbf16>, vector<16x128xf32> -> vector<16x128xf32>
    %c0_281 = arith.constant 0 : index
    %c5 = arith.constant 5 : index
    %c0_282 = arith.constant 0 : index
    %c0_283 = arith.constant 0 : index
    %261 = vector.load %arg6[%c0_281, %c5, %c0_282, %c0_283] : memref<1x8x16x128xf32, #tpu.memory_space<vmem>>, vector<1x1x16x128xf32>
    %262 = vector.shape_cast %261 : vector<1x1x16x128xf32> to vector<16x128xf32>
    %263 = vector.shape_cast %260 : vector<16x128xf32> to vector<1x1x16x128xf32>
    tpu.vector_store %arg6[%c0_281, %c5, %c0_282, %c0_283], %263 {strides = array<i32>} : memref<1x8x16x128xf32, #tpu.memory_space<vmem>>, vector<1x1x16x128xf32>,
    %c5_i32_284 = arith.constant 5 : i32
    %264 = arith.addi %0, %c5_i32_284 : i32
    %c1_i32_285 = arith.constant 1 : i32
    %265 = arith.addi %264, %c1_i32_285 : i32
    %c0_286 = arith.constant 0 : index
    %266 = arith.index_cast %265 : i32 to index
    %c0_287 = arith.constant 0 : index
    %c0_288 = arith.constant 0 : index
    %267 = vector.load %arg2[%c0_286, %266, %c0_287, %c0_288] : memref<1x18x16x12xbf16, #tpu.memory_space<vmem>>, vector<1x1x16x12xbf16>
    %268 = vector.shape_cast %267 : vector<1x1x16x12xbf16> to vector<16x12xbf16>
    %c1_289 = arith.constant 1 : index
    %c0_290 = arith.constant 0 : index
    %c0_291 = arith.constant 0 : index
    %269 = vector.load %arg3[%c1_289, %c0_290, %c0_291] : memref<3x12x128xbf16, #tpu.memory_space<vmem>>, vector<1x12x128xbf16>
    %270 = vector.shape_cast %269 : vector<1x12x128xbf16> to vector<12x128xbf16>
    %cst_292 = arith.constant dense<0.000000e+00> : vector<16x128xf32>
    %271 = tpu.matmul %268, %270, %cst_292 {dimension_numbers = #tpu.dot_dimension_numbers<[1], [0], [0], [1], [0, 0, 1, 1], [], []>} : vector<16x12xbf16>, vector<12x128xbf16>, vector<16x128xf32> -> vector<16x128xf32>
    %c0_293 = arith.constant 0 : index
    %c5_294 = arith.constant 5 : index
    %c0_295 = arith.constant 0 : index
    %c0_296 = arith.constant 0 : index
    %272 = vector.load %arg6[%c0_293, %c5_294, %c0_295, %c0_296] : memref<1x8x16x128xf32, #tpu.memory_space<vmem>>, vector<1x1x16x128xf32>
    %273 = vector.shape_cast %272 : vector<1x1x16x128xf32> to vector<16x128xf32>
    %274 = arith.addf %273, %271 : vector<16x128xf32>
    %c0_297 = arith.constant 0 : index
    %c5_298 = arith.constant 5 : index
    %c0_299 = arith.constant 0 : index
    %c0_300 = arith.constant 0 : index
    %275 = vector.load %arg6[%c0_297, %c5_298, %c0_299, %c0_300] : memref<1x8x16x128xf32, #tpu.memory_space<vmem>>, vector<1x1x16x128xf32>
    %276 = vector.shape_cast %275 : vector<1x1x16x128xf32> to vector<16x128xf32>
    %277 = vector.shape_cast %274 : vector<16x128xf32> to vector<1x1x16x128xf32>
    tpu.vector_store %arg6[%c0_297, %c5_298, %c0_299, %c0_300], %277 {strides = array<i32>} : memref<1x8x16x128xf32, #tpu.memory_space<vmem>>, vector<1x1x16x128xf32>,
    %c5_i32_301 = arith.constant 5 : i32
    %278 = arith.addi %0, %c5_i32_301 : i32
    %c2_i32_302 = arith.constant 2 : i32
    %279 = arith.addi %278, %c2_i32_302 : i32
    %c0_303 = arith.constant 0 : index
    %280 = arith.index_cast %279 : i32 to index
    %c0_304 = arith.constant 0 : index
    %c0_305 = arith.constant 0 : index
    %281 = vector.load %arg2[%c0_303, %280, %c0_304, %c0_305] : memref<1x18x16x12xbf16, #tpu.memory_space<vmem>>, vector<1x1x16x12xbf16>
    %282 = vector.shape_cast %281 : vector<1x1x16x12xbf16> to vector<16x12xbf16>
    %c2_306 = arith.constant 2 : index
    %c0_307 = arith.constant 0 : index
    %c0_308 = arith.constant 0 : index
    %283 = vector.load %arg3[%c2_306, %c0_307, %c0_308] : memref<3x12x128xbf16, #tpu.memory_space<vmem>>, vector<1x12x128xbf16>
    %284 = vector.shape_cast %283 : vector<1x12x128xbf16> to vector<12x128xbf16>
    %cst_309 = arith.constant dense<0.000000e+00> : vector<16x128xf32>
    %285 = tpu.matmul %282, %284, %cst_309 {dimension_numbers = #tpu.dot_dimension_numbers<[1], [0], [0], [1], [0, 0, 1, 1], [], []>} : vector<16x12xbf16>, vector<12x128xbf16>, vector<16x128xf32> -> vector<16x128xf32>
    %c0_310 = arith.constant 0 : index
    %c5_311 = arith.constant 5 : index
    %c0_312 = arith.constant 0 : index
    %c0_313 = arith.constant 0 : index
    %286 = vector.load %arg6[%c0_310, %c5_311, %c0_312, %c0_313] : memref<1x8x16x128xf32, #tpu.memory_space<vmem>>, vector<1x1x16x128xf32>
    %287 = vector.shape_cast %286 : vector<1x1x16x128xf32> to vector<16x128xf32>
    %288 = arith.addf %287, %285 : vector<16x128xf32>
    %c0_314 = arith.constant 0 : index
    %c5_315 = arith.constant 5 : index
    %c0_316 = arith.constant 0 : index
    %c0_317 = arith.constant 0 : index
    %289 = vector.load %arg6[%c0_314, %c5_315, %c0_316, %c0_317] : memref<1x8x16x128xf32, #tpu.memory_space<vmem>>, vector<1x1x16x128xf32>
    %290 = vector.shape_cast %289 : vector<1x1x16x128xf32> to vector<16x128xf32>
    %291 = vector.shape_cast %288 : vector<16x128xf32> to vector<1x1x16x128xf32>
    tpu.vector_store %arg6[%c0_314, %c5_315, %c0_316, %c0_317], %291 {strides = array<i32>} : memref<1x8x16x128xf32, #tpu.memory_space<vmem>>, vector<1x1x16x128xf32>,
    %c0_318 = arith.constant 0 : index
    %c5_319 = arith.constant 5 : index
    %c0_320 = arith.constant 0 : index
    %c0_321 = arith.constant 0 : index
    %292 = vector.load %arg6[%c0_318, %c5_319, %c0_320, %c0_321] : memref<1x8x16x128xf32, #tpu.memory_space<vmem>>, vector<1x1x16x128xf32>
    %293 = vector.shape_cast %292 : vector<1x1x16x128xf32> to vector<16x128xf32>
    %294 = vector.broadcast %1 : vector<1x128xf32> to vector<16x128xf32>
    %295 = arith.mulf %293, %294 : vector<16x128xf32>
    %296 = vector.broadcast %2 : vector<1x128xf32> to vector<16x128xf32>
    %297 = arith.addf %295, %296 : vector<16x128xf32>
    %cst_322 = arith.constant 0.000000e+00 : f32
    %298 = vector.broadcast %cst_322 : f32 to vector<16x128xf32>
    %299 = arith.maximumf %297, %298 : vector<16x128xf32>
    %c0_323 = arith.constant 0 : index
    %c5_324 = arith.constant 5 : index
    %c0_325 = arith.constant 0 : index
    %c0_326 = arith.constant 0 : index
    %300 = vector.load %arg6[%c0_323, %c5_324, %c0_325, %c0_326] : memref<1x8x16x128xf32, #tpu.memory_space<vmem>>, vector<1x1x16x128xf32>
    %301 = vector.shape_cast %300 : vector<1x1x16x128xf32> to vector<16x128xf32>
    %302 = vector.shape_cast %299 : vector<16x128xf32> to vector<1x1x16x128xf32>
    tpu.vector_store %arg6[%c0_323, %c5_324, %c0_325, %c0_326], %302 {strides = array<i32>} : memref<1x8x16x128xf32, #tpu.memory_space<vmem>>, vector<1x1x16x128xf32>,
    %c6_i32 = arith.constant 6 : i32
    %303 = arith.addi %0, %c6_i32 : i32
    %c0_i32_327 = arith.constant 0 : i32
    %304 = arith.addi %303, %c0_i32_327 : i32
    %c0_328 = arith.constant 0 : index
    %305 = arith.index_cast %304 : i32 to index
    %c0_329 = arith.constant 0 : index
    %c0_330 = arith.constant 0 : index
    %306 = vector.load %arg2[%c0_328, %305, %c0_329, %c0_330] : memref<1x18x16x12xbf16, #tpu.memory_space<vmem>>, vector<1x1x16x12xbf16>
    %307 = vector.shape_cast %306 : vector<1x1x16x12xbf16> to vector<16x12xbf16>
    %c0_331 = arith.constant 0 : index
    %c0_332 = arith.constant 0 : index
    %c0_333 = arith.constant 0 : index
    %308 = vector.load %arg3[%c0_331, %c0_332, %c0_333] : memref<3x12x128xbf16, #tpu.memory_space<vmem>>, vector<1x12x128xbf16>
    %309 = vector.shape_cast %308 : vector<1x12x128xbf16> to vector<12x128xbf16>
    %cst_334 = arith.constant dense<0.000000e+00> : vector<16x128xf32>
    %310 = tpu.matmul %307, %309, %cst_334 {dimension_numbers = #tpu.dot_dimension_numbers<[1], [0], [0], [1], [0, 0, 1, 1], [], []>} : vector<16x12xbf16>, vector<12x128xbf16>, vector<16x128xf32> -> vector<16x128xf32>
    %c0_335 = arith.constant 0 : index
    %c6 = arith.constant 6 : index
    %c0_336 = arith.constant 0 : index
    %c0_337 = arith.constant 0 : index
    %311 = vector.load %arg6[%c0_335, %c6, %c0_336, %c0_337] : memref<1x8x16x128xf32, #tpu.memory_space<vmem>>, vector<1x1x16x128xf32>
    %312 = vector.shape_cast %311 : vector<1x1x16x128xf32> to vector<16x128xf32>
    %313 = vector.shape_cast %310 : vector<16x128xf32> to vector<1x1x16x128xf32>
    tpu.vector_store %arg6[%c0_335, %c6, %c0_336, %c0_337], %313 {strides = array<i32>} : memref<1x8x16x128xf32, #tpu.memory_space<vmem>>, vector<1x1x16x128xf32>,
    %c6_i32_338 = arith.constant 6 : i32
    %314 = arith.addi %0, %c6_i32_338 : i32
    %c1_i32_339 = arith.constant 1 : i32
    %315 = arith.addi %314, %c1_i32_339 : i32
    %c0_340 = arith.constant 0 : index
    %316 = arith.index_cast %315 : i32 to index
    %c0_341 = arith.constant 0 : index
    %c0_342 = arith.constant 0 : index
    %317 = vector.load %arg2[%c0_340, %316, %c0_341, %c0_342] : memref<1x18x16x12xbf16, #tpu.memory_space<vmem>>, vector<1x1x16x12xbf16>
    %318 = vector.shape_cast %317 : vector<1x1x16x12xbf16> to vector<16x12xbf16>
    %c1_343 = arith.constant 1 : index
    %c0_344 = arith.constant 0 : index
    %c0_345 = arith.constant 0 : index
    %319 = vector.load %arg3[%c1_343, %c0_344, %c0_345] : memref<3x12x128xbf16, #tpu.memory_space<vmem>>, vector<1x12x128xbf16>
    %320 = vector.shape_cast %319 : vector<1x12x128xbf16> to vector<12x128xbf16>
    %cst_346 = arith.constant dense<0.000000e+00> : vector<16x128xf32>
    %321 = tpu.matmul %318, %320, %cst_346 {dimension_numbers = #tpu.dot_dimension_numbers<[1], [0], [0], [1], [0, 0, 1, 1], [], []>} : vector<16x12xbf16>, vector<12x128xbf16>, vector<16x128xf32> -> vector<16x128xf32>
    %c0_347 = arith.constant 0 : index
    %c6_348 = arith.constant 6 : index
    %c0_349 = arith.constant 0 : index
    %c0_350 = arith.constant 0 : index
    %322 = vector.load %arg6[%c0_347, %c6_348, %c0_349, %c0_350] : memref<1x8x16x128xf32, #tpu.memory_space<vmem>>, vector<1x1x16x128xf32>
    %323 = vector.shape_cast %322 : vector<1x1x16x128xf32> to vector<16x128xf32>
    %324 = arith.addf %323, %321 : vector<16x128xf32>
    %c0_351 = arith.constant 0 : index
    %c6_352 = arith.constant 6 : index
    %c0_353 = arith.constant 0 : index
    %c0_354 = arith.constant 0 : index
    %325 = vector.load %arg6[%c0_351, %c6_352, %c0_353, %c0_354] : memref<1x8x16x128xf32, #tpu.memory_space<vmem>>, vector<1x1x16x128xf32>
    %326 = vector.shape_cast %325 : vector<1x1x16x128xf32> to vector<16x128xf32>
    %327 = vector.shape_cast %324 : vector<16x128xf32> to vector<1x1x16x128xf32>
    tpu.vector_store %arg6[%c0_351, %c6_352, %c0_353, %c0_354], %327 {strides = array<i32>} : memref<1x8x16x128xf32, #tpu.memory_space<vmem>>, vector<1x1x16x128xf32>,
    %c6_i32_355 = arith.constant 6 : i32
    %328 = arith.addi %0, %c6_i32_355 : i32
    %c2_i32_356 = arith.constant 2 : i32
    %329 = arith.addi %328, %c2_i32_356 : i32
    %c0_357 = arith.constant 0 : index
    %330 = arith.index_cast %329 : i32 to index
    %c0_358 = arith.constant 0 : index
    %c0_359 = arith.constant 0 : index
    %331 = vector.load %arg2[%c0_357, %330, %c0_358, %c0_359] : memref<1x18x16x12xbf16, #tpu.memory_space<vmem>>, vector<1x1x16x12xbf16>
    %332 = vector.shape_cast %331 : vector<1x1x16x12xbf16> to vector<16x12xbf16>
    %c2_360 = arith.constant 2 : index
    %c0_361 = arith.constant 0 : index
    %c0_362 = arith.constant 0 : index
    %333 = vector.load %arg3[%c2_360, %c0_361, %c0_362] : memref<3x12x128xbf16, #tpu.memory_space<vmem>>, vector<1x12x128xbf16>
    %334 = vector.shape_cast %333 : vector<1x12x128xbf16> to vector<12x128xbf16>
    %cst_363 = arith.constant dense<0.000000e+00> : vector<16x128xf32>
    %335 = tpu.matmul %332, %334, %cst_363 {dimension_numbers = #tpu.dot_dimension_numbers<[1], [0], [0], [1], [0, 0, 1, 1], [], []>} : vector<16x12xbf16>, vector<12x128xbf16>, vector<16x128xf32> -> vector<16x128xf32>
    %c0_364 = arith.constant 0 : index
    %c6_365 = arith.constant 6 : index
    %c0_366 = arith.constant 0 : index
    %c0_367 = arith.constant 0 : index
    %336 = vector.load %arg6[%c0_364, %c6_365, %c0_366, %c0_367] : memref<1x8x16x128xf32, #tpu.memory_space<vmem>>, vector<1x1x16x128xf32>
    %337 = vector.shape_cast %336 : vector<1x1x16x128xf32> to vector<16x128xf32>
    %338 = arith.addf %337, %335 : vector<16x128xf32>
    %c0_368 = arith.constant 0 : index
    %c6_369 = arith.constant 6 : index
    %c0_370 = arith.constant 0 : index
    %c0_371 = arith.constant 0 : index
    %339 = vector.load %arg6[%c0_368, %c6_369, %c0_370, %c0_371] : memref<1x8x16x128xf32, #tpu.memory_space<vmem>>, vector<1x1x16x128xf32>
    %340 = vector.shape_cast %339 : vector<1x1x16x128xf32> to vector<16x128xf32>
    %341 = vector.shape_cast %338 : vector<16x128xf32> to vector<1x1x16x128xf32>
    tpu.vector_store %arg6[%c0_368, %c6_369, %c0_370, %c0_371], %341 {strides = array<i32>} : memref<1x8x16x128xf32, #tpu.memory_space<vmem>>, vector<1x1x16x128xf32>,
    %c0_372 = arith.constant 0 : index
    %c6_373 = arith.constant 6 : index
    %c0_374 = arith.constant 0 : index
    %c0_375 = arith.constant 0 : index
    %342 = vector.load %arg6[%c0_372, %c6_373, %c0_374, %c0_375] : memref<1x8x16x128xf32, #tpu.memory_space<vmem>>, vector<1x1x16x128xf32>
    %343 = vector.shape_cast %342 : vector<1x1x16x128xf32> to vector<16x128xf32>
    %344 = vector.broadcast %1 : vector<1x128xf32> to vector<16x128xf32>
    %345 = arith.mulf %343, %344 : vector<16x128xf32>
    %346 = vector.broadcast %2 : vector<1x128xf32> to vector<16x128xf32>
    %347 = arith.addf %345, %346 : vector<16x128xf32>
    %cst_376 = arith.constant 0.000000e+00 : f32
    %348 = vector.broadcast %cst_376 : f32 to vector<16x128xf32>
    %349 = arith.maximumf %347, %348 : vector<16x128xf32>
    %c0_377 = arith.constant 0 : index
    %c6_378 = arith.constant 6 : index
    %c0_379 = arith.constant 0 : index
    %c0_380 = arith.constant 0 : index
    %350 = vector.load %arg6[%c0_377, %c6_378, %c0_379, %c0_380] : memref<1x8x16x128xf32, #tpu.memory_space<vmem>>, vector<1x1x16x128xf32>
    %351 = vector.shape_cast %350 : vector<1x1x16x128xf32> to vector<16x128xf32>
    %352 = vector.shape_cast %349 : vector<16x128xf32> to vector<1x1x16x128xf32>
    tpu.vector_store %arg6[%c0_377, %c6_378, %c0_379, %c0_380], %352 {strides = array<i32>} : memref<1x8x16x128xf32, #tpu.memory_space<vmem>>, vector<1x1x16x128xf32>,
    %c7_i32 = arith.constant 7 : i32
    %353 = arith.addi %0, %c7_i32 : i32
    %c0_i32_381 = arith.constant 0 : i32
    %354 = arith.addi %353, %c0_i32_381 : i32
    %c0_382 = arith.constant 0 : index
    %355 = arith.index_cast %354 : i32 to index
    %c0_383 = arith.constant 0 : index
    %c0_384 = arith.constant 0 : index
    %356 = vector.load %arg2[%c0_382, %355, %c0_383, %c0_384] : memref<1x18x16x12xbf16, #tpu.memory_space<vmem>>, vector<1x1x16x12xbf16>
    %357 = vector.shape_cast %356 : vector<1x1x16x12xbf16> to vector<16x12xbf16>
    %c0_385 = arith.constant 0 : index
    %c0_386 = arith.constant 0 : index
    %c0_387 = arith.constant 0 : index
    %358 = vector.load %arg3[%c0_385, %c0_386, %c0_387] : memref<3x12x128xbf16, #tpu.memory_space<vmem>>, vector<1x12x128xbf16>
    %359 = vector.shape_cast %358 : vector<1x12x128xbf16> to vector<12x128xbf16>
    %cst_388 = arith.constant dense<0.000000e+00> : vector<16x128xf32>
    %360 = tpu.matmul %357, %359, %cst_388 {dimension_numbers = #tpu.dot_dimension_numbers<[1], [0], [0], [1], [0, 0, 1, 1], [], []>} : vector<16x12xbf16>, vector<12x128xbf16>, vector<16x128xf32> -> vector<16x128xf32>
    %c0_389 = arith.constant 0 : index
    %c7 = arith.constant 7 : index
    %c0_390 = arith.constant 0 : index
    %c0_391 = arith.constant 0 : index
    %361 = vector.load %arg6[%c0_389, %c7, %c0_390, %c0_391] : memref<1x8x16x128xf32, #tpu.memory_space<vmem>>, vector<1x1x16x128xf32>
    %362 = vector.shape_cast %361 : vector<1x1x16x128xf32> to vector<16x128xf32>
    %363 = vector.shape_cast %360 : vector<16x128xf32> to vector<1x1x16x128xf32>
    tpu.vector_store %arg6[%c0_389, %c7, %c0_390, %c0_391], %363 {strides = array<i32>} : memref<1x8x16x128xf32, #tpu.memory_space<vmem>>, vector<1x1x16x128xf32>,
    %c7_i32_392 = arith.constant 7 : i32
    %364 = arith.addi %0, %c7_i32_392 : i32
    %c1_i32_393 = arith.constant 1 : i32
    %365 = arith.addi %364, %c1_i32_393 : i32
    %c0_394 = arith.constant 0 : index
    %366 = arith.index_cast %365 : i32 to index
    %c0_395 = arith.constant 0 : index
    %c0_396 = arith.constant 0 : index
    %367 = vector.load %arg2[%c0_394, %366, %c0_395, %c0_396] : memref<1x18x16x12xbf16, #tpu.memory_space<vmem>>, vector<1x1x16x12xbf16>
    %368 = vector.shape_cast %367 : vector<1x1x16x12xbf16> to vector<16x12xbf16>
    %c1_397 = arith.constant 1 : index
    %c0_398 = arith.constant 0 : index
    %c0_399 = arith.constant 0 : index
    %369 = vector.load %arg3[%c1_397, %c0_398, %c0_399] : memref<3x12x128xbf16, #tpu.memory_space<vmem>>, vector<1x12x128xbf16>
    %370 = vector.shape_cast %369 : vector<1x12x128xbf16> to vector<12x128xbf16>
    %cst_400 = arith.constant dense<0.000000e+00> : vector<16x128xf32>
    %371 = tpu.matmul %368, %370, %cst_400 {dimension_numbers = #tpu.dot_dimension_numbers<[1], [0], [0], [1], [0, 0, 1, 1], [], []>} : vector<16x12xbf16>, vector<12x128xbf16>, vector<16x128xf32> -> vector<16x128xf32>
    %c0_401 = arith.constant 0 : index
    %c7_402 = arith.constant 7 : index
    %c0_403 = arith.constant 0 : index
    %c0_404 = arith.constant 0 : index
    %372 = vector.load %arg6[%c0_401, %c7_402, %c0_403, %c0_404] : memref<1x8x16x128xf32, #tpu.memory_space<vmem>>, vector<1x1x16x128xf32>
    %373 = vector.shape_cast %372 : vector<1x1x16x128xf32> to vector<16x128xf32>
    %374 = arith.addf %373, %371 : vector<16x128xf32>
    %c0_405 = arith.constant 0 : index
    %c7_406 = arith.constant 7 : index
    %c0_407 = arith.constant 0 : index
    %c0_408 = arith.constant 0 : index
    %375 = vector.load %arg6[%c0_405, %c7_406, %c0_407, %c0_408] : memref<1x8x16x128xf32, #tpu.memory_space<vmem>>, vector<1x1x16x128xf32>
    %376 = vector.shape_cast %375 : vector<1x1x16x128xf32> to vector<16x128xf32>
    %377 = vector.shape_cast %374 : vector<16x128xf32> to vector<1x1x16x128xf32>
    tpu.vector_store %arg6[%c0_405, %c7_406, %c0_407, %c0_408], %377 {strides = array<i32>} : memref<1x8x16x128xf32, #tpu.memory_space<vmem>>, vector<1x1x16x128xf32>,
    %c7_i32_409 = arith.constant 7 : i32
    %378 = arith.addi %0, %c7_i32_409 : i32
    %c2_i32_410 = arith.constant 2 : i32
    %379 = arith.addi %378, %c2_i32_410 : i32
    %c0_411 = arith.constant 0 : index
    %380 = arith.index_cast %379 : i32 to index
    %c0_412 = arith.constant 0 : index
    %c0_413 = arith.constant 0 : index
    %381 = vector.load %arg2[%c0_411, %380, %c0_412, %c0_413] : memref<1x18x16x12xbf16, #tpu.memory_space<vmem>>, vector<1x1x16x12xbf16>
    %382 = vector.shape_cast %381 : vector<1x1x16x12xbf16> to vector<16x12xbf16>
    %c2_414 = arith.constant 2 : index
    %c0_415 = arith.constant 0 : index
    %c0_416 = arith.constant 0 : index
    %383 = vector.load %arg3[%c2_414, %c0_415, %c0_416] : memref<3x12x128xbf16, #tpu.memory_space<vmem>>, vector<1x12x128xbf16>
    %384 = vector.shape_cast %383 : vector<1x12x128xbf16> to vector<12x128xbf16>
    %cst_417 = arith.constant dense<0.000000e+00> : vector<16x128xf32>
    %385 = tpu.matmul %382, %384, %cst_417 {dimension_numbers = #tpu.dot_dimension_numbers<[1], [0], [0], [1], [0, 0, 1, 1], [], []>} : vector<16x12xbf16>, vector<12x128xbf16>, vector<16x128xf32> -> vector<16x128xf32>
    %c0_418 = arith.constant 0 : index
    %c7_419 = arith.constant 7 : index
    %c0_420 = arith.constant 0 : index
    %c0_421 = arith.constant 0 : index
    %386 = vector.load %arg6[%c0_418, %c7_419, %c0_420, %c0_421] : memref<1x8x16x128xf32, #tpu.memory_space<vmem>>, vector<1x1x16x128xf32>
    %387 = vector.shape_cast %386 : vector<1x1x16x128xf32> to vector<16x128xf32>
    %388 = arith.addf %387, %385 : vector<16x128xf32>
    %c0_422 = arith.constant 0 : index
    %c7_423 = arith.constant 7 : index
    %c0_424 = arith.constant 0 : index
    %c0_425 = arith.constant 0 : index
    %389 = vector.load %arg6[%c0_422, %c7_423, %c0_424, %c0_425] : memref<1x8x16x128xf32, #tpu.memory_space<vmem>>, vector<1x1x16x128xf32>
    %390 = vector.shape_cast %389 : vector<1x1x16x128xf32> to vector<16x128xf32>
    %391 = vector.shape_cast %388 : vector<16x128xf32> to vector<1x1x16x128xf32>
    tpu.vector_store %arg6[%c0_422, %c7_423, %c0_424, %c0_425], %391 {strides = array<i32>} : memref<1x8x16x128xf32, #tpu.memory_space<vmem>>, vector<1x1x16x128xf32>,
    %c0_426 = arith.constant 0 : index
    %c7_427 = arith.constant 7 : index
    %c0_428 = arith.constant 0 : index
    %c0_429 = arith.constant 0 : index
    %392 = vector.load %arg6[%c0_426, %c7_427, %c0_428, %c0_429] : memref<1x8x16x128xf32, #tpu.memory_space<vmem>>, vector<1x1x16x128xf32>
    %393 = vector.shape_cast %392 : vector<1x1x16x128xf32> to vector<16x128xf32>
    %394 = vector.broadcast %1 : vector<1x128xf32> to vector<16x128xf32>
    %395 = arith.mulf %393, %394 : vector<16x128xf32>
    %396 = vector.broadcast %2 : vector<1x128xf32> to vector<16x128xf32>
    %397 = arith.addf %395, %396 : vector<16x128xf32>
    %cst_430 = arith.constant 0.000000e+00 : f32
    %398 = vector.broadcast %cst_430 : f32 to vector<16x128xf32>
    %399 = arith.maximumf %397, %398 : vector<16x128xf32>
    %c0_431 = arith.constant 0 : index
    %c7_432 = arith.constant 7 : index
    %c0_433 = arith.constant 0 : index
    %c0_434 = arith.constant 0 : index
    %400 = vector.load %arg6[%c0_431, %c7_432, %c0_433, %c0_434] : memref<1x8x16x128xf32, #tpu.memory_space<vmem>>, vector<1x1x16x128xf32>
    %401 = vector.shape_cast %400 : vector<1x1x16x128xf32> to vector<16x128xf32>
    %402 = vector.shape_cast %399 : vector<16x128xf32> to vector<1x1x16x128xf32>
    tpu.vector_store %arg6[%c0_431, %c7_432, %c0_433, %c0_434], %402 {strides = array<i32>} : memref<1x8x16x128xf32, #tpu.memory_space<vmem>>, vector<1x1x16x128xf32>,
    return
  }
  func.func @transform_0(%arg0: i32, %arg1: i32) -> (i32, i32, i32, i32) {
    %c0_i32 = arith.constant 0 : i32
    %c0_i32_0 = arith.constant 0 : i32
    %c0_i32_1 = arith.constant 0 : i32
    %c0_i32_2 = arith.constant 0 : i32
    return %arg0, %c0_i32, %c0_i32_0, %c0_i32_1 : i32, i32, i32, i32
  }
  func.func @transform_1(%arg0: i32, %arg1: i32) -> (i32, i32, i32) {
    %c0_i32 = arith.constant 0 : i32
    %c0_i32_0 = arith.constant 0 : i32
    %c0_i32_1 = arith.constant 0 : i32
    %c0_i32_2 = arith.constant 0 : i32
    return %c0_i32, %c0_i32_0, %c0_i32_1 : i32, i32, i32
  }
  func.func @transform_2(%arg0: i32, %arg1: i32) -> (i32, i32) {
    %c0_i32 = arith.constant 0 : i32
    %c0_i32_0 = arith.constant 0 : i32
    %c0_i32_1 = arith.constant 0 : i32
    return %c0_i32, %c0_i32_0 : i32, i32
  }
  func.func @transform_3(%arg0: i32, %arg1: i32) -> (i32, i32) {
    %c0_i32 = arith.constant 0 : i32
    %c0_i32_0 = arith.constant 0 : i32
    %c0_i32_1 = arith.constant 0 : i32
    return %c0_i32, %c0_i32_0 : i32, i32
  }
  func.func @transform_4(%arg0: i32, %arg1: i32) -> (i32, i32, i32, i32) {
    %c0_i32 = arith.constant 0 : i32
    %c0_i32_0 = arith.constant 0 : i32
    %c0_i32_1 = arith.constant 0 : i32
    return %arg0, %arg1, %c0_i32, %c0_i32_0 : i32, i32, i32, i32
  }
}

</mosaic_0001>

<llo_original>
// kernel: basic_conv2d.1
$region0: #{basic_conv2d.1}
  #allocation0 [shape = 'u32[]', space=smem, size = 0x4, offset = 0x4, fixed_abs, tag = 'smem constant byte address 0x4 - core index']
  #allocation1 [shape = 'u32[144,128]{1,0:T(1,128)}', space=vmem, size = 0x12000, scoped, tag = 'internal scratch']
  %s0 = inlined_call_operand.vmem [shape: bf16[2,18,16,12], index: 0, kind: input, shape index: {}]
  %s1 = inlined_call_operand.vmem [shape: bf16[3,12,128], index: 1, kind: input, shape index: {}]
  %s2 = inlined_call_operand.vmem [shape: f32[1,128], index: 2, kind: input, shape index: {}]
  %s3 = inlined_call_operand.vmem [shape: f32[1,128], index: 3, kind: input, shape index: {}]
  %s4 = inlined_call_operand.vmem [shape: f32[2,16,16,128], index: 4, kind: output, shape index: {}]
  %s5 = sld [smem:[#allocation0]]
  $region49: #{basic_conv2d.1} parent=0
    _
  %s7 = ssub.s32 1, %s5
  %s8 = scalar_select 0, %s7, %s5
  loop: start=0, step=1, limit=6
  $region2: #{basic_conv2d.1} parent=0 // loop_pre_header
    _
  $region3: #{basic_conv2d.1} parent=0 // loop_header
    %s10 = sphi 0, %s14
    %p11 = scmp.ge.s32.totalorder %s10, 6
    %s17 = sphi 0, %s29
    %s18 = sphi 0, %s25
    %s19 = sphi 0, %s17
    %s20 = sphi 0, %s18
    %s21 = sphi 0, %s19
    %s22 = sphi 0, %s20
    %s32 = sphi 0, %s34
    %s35 = sphi 0, %s32
    %s36 = sphi 0, %s35
    %s52 = sphi 0, %s36
    %s56 = sphi 0, %s56
    %s58 = sphi 0, %s56
    %s59 = sphi 0, %s58
    %s73 = sphi 0, %s59
    %s77 = sphi 0, %s77
    %s79 = sphi 0, %s77
    %s80 = sphi 0, %s79
    %s94 = sphi 0, %s80
    %s98 = sphi 0, %s98
    %s100 = sphi 0, %s98
    %s101 = sphi 0, %s100
    %s115 = sphi 0, %s101
    %s123 = sphi 0, %s125
    %s126 = sphi 0, %s123
    %s127 = sphi 0, %s126
    %s143 = sphi 0, %s127
  $region4: #{basic_conv2d.1} parent=0 // loop_header_branch
    %13 = sbr.rel (%p11) target = $region8
  $region5: #{basic_conv2d.1} parent=0 // loop_body
    %s15 = ssub.s32 %s10, 1
    %s16 = ssub.s32 %s10, 2
    %s23 = sadd.s32 1, %s18
    %p24 = scmp.ge.s32.totalorder %s23, 2
    %s25 = scalar_select %p24, 0, %s23
    %s26 = sadd.s32 1, %s17
    %s27 = scalar_select %p24, %s26, %s17
    %p28 = scmp.ge.s32.totalorder %s27, 2
    %s29 = scalar_select %p28, 0, %s27
    %s30 = ssub.s32 %s17, %s29
    %p31 = scmp.eq.s32.totalorder %s30, 0
    %s33 = sadd.s32 %s32, 1
    %s34 = scalar_select %p31, %s32, %s33
    %p37 = pneg %p31
    %p38 = scmp.eq.s32.totalorder %s10, 3
    %p39 = por %p37, %p38
    %p40 = scmp.ne.s32.totalorder %s32, %s35
    %p41 = scmp.eq.s32.totalorder %s10, 0
    %p42 = por %p40, %p41
    %p43 = scmp.ne.s32.totalorder %s32, %s35
    %p44 = scmp.eq.s32.totalorder %s15, 3
    %p45 = por %p43, %p44
    %p46 = scmp.ne.s32.totalorder %s35, %s36
    %p47 = scmp.eq.s32.totalorder %s15, 0
    %p48 = por %p46, %p47
    %p49 = scmp.ne.s32.totalorder %s35, %s36
    %p50 = scmp.eq.s32.totalorder %s16, 3
    %p51 = por %p49, %p50
    %p53 = scmp.ne.s32.totalorder %s36, %s52
    %p54 = scmp.eq.s32.totalorder %s16, 0
    %p55 = por %p53, %p54
    %s57 = sadd.s32 %s56, 1
    %p60 = scmp.eq.s32.totalorder %s10, 3
    %p61 = scmp.ne.s32.totalorder %s56, %s58
    %p62 = scmp.eq.s32.totalorder %s10, 0
    %p63 = por %p61, %p62
    %p64 = scmp.ne.s32.totalorder %s56, %s58
    %p65 = scmp.eq.s32.totalorder %s15, 3
    %p66 = por %p64, %p65
    %p67 = scmp.ne.s32.totalorder %s58, %s59
    %p68 = scmp.eq.s32.totalorder %s15, 0
    %p69 = por %p67, %p68
    %p70 = scmp.ne.s32.totalorder %s58, %s59
    %p71 = scmp.eq.s32.totalorder %s16, 3
    %p72 = por %p70, %p71
    %p74 = scmp.ne.s32.totalorder %s59, %s73
    %p75 = scmp.eq.s32.totalorder %s16, 0
    %p76 = por %p74, %p75
    %s78 = sadd.s32 %s77, 1
    %p81 = scmp.eq.s32.totalorder %s10, 3
    %p82 = scmp.ne.s32.totalorder %s77, %s79
    %p83 = scmp.eq.s32.totalorder %s10, 0
    %p84 = por %p82, %p83
    %p85 = scmp.ne.s32.totalorder %s77, %s79
    %p86 = scmp.eq.s32.totalorder %s15, 3
    %p87 = por %p85, %p86
    %p88 = scmp.ne.s32.totalorder %s79, %s80
    %p89 = scmp.eq.s32.totalorder %s15, 0
    %p90 = por %p88, %p89
    %p91 = scmp.ne.s32.totalorder %s79, %s80
    %p92 = scmp.eq.s32.totalorder %s16, 3
    %p93 = por %p91, %p92
    %p95 = scmp.ne.s32.totalorder %s80, %s94
    %p96 = scmp.eq.s32.totalorder %s16, 0
    %p97 = por %p95, %p96
    %s99 = sadd.s32 %s98, 1
    %p102 = scmp.eq.s32.totalorder %s10, 3
    %p103 = scmp.ne.s32.totalorder %s98, %s100
    %p104 = scmp.eq.s32.totalorder %s10, 0
    %p105 = por %p103, %p104
    %p106 = scmp.ne.s32.totalorder %s98, %s100
    %p107 = scmp.eq.s32.totalorder %s15, 3
    %p108 = por %p106, %p107
    %p109 = scmp.ne.s32.totalorder %s100, %s101
    %p110 = scmp.eq.s32.totalorder %s15, 0
    %p111 = por %p109, %p110
    %p112 = scmp.ne.s32.totalorder %s100, %s101
    %p113 = scmp.eq.s32.totalorder %s16, 3
    %p114 = por %p112, %p113
    %p116 = scmp.ne.s32.totalorder %s101, %s115
    %p117 = scmp.eq.s32.totalorder %s16, 0
    %p118 = por %p116, %p117
    %s119 = ssub.s32 %s17, %s29
    %s120 = ssub.s32 %s18, %s25
    %s121 = sor.u32 %s119, %s120
    %p122 = scmp.eq.s32.totalorder %s121, 0
    %s124 = sadd.s32 %s123, 1
    %s125 = scalar_select %p122, %s123, %s124
    %p128 = pneg %p122
    %p129 = scmp.eq.s32.totalorder %s10, 3
    %p130 = por %p128, %p129
    %p131 = scmp.ne.s32.totalorder %s123, %s126
    %p132 = scmp.eq.s32.totalorder %s10, 0
    %p133 = por %p131, %p132
    %p134 = scmp.ne.s32.totalorder %s123, %s126
    %p135 = scmp.eq.s32.totalorder %s15, 3
    %p136 = por %p134, %p135
    %p137 = scmp.ne.s32.totalorder %s126, %s127
    %p138 = scmp.eq.s32.totalorder %s15, 0
    %p139 = por %p137, %p138
    %p140 = scmp.ne.s32.totalorder %s126, %s127
    %p141 = scmp.eq.s32.totalorder %s16, 3
    %p142 = por %p140, %p141
    %p144 = scmp.ne.s32.totalorder %s127, %s143
    %p145 = scmp.eq.s32.totalorder %s16, 0
    %p146 = por %p144, %p145
    %p147 = scmp.le.s32.totalorder 1, %s10
    %p148 = scmp.lt.s32.totalorder %s10, 5
    %p149 = pnand %p147, %p148
    %p150 = pneg %p149
    // Predicated region
    $region9: #{basic_conv2d.1} parent=5 // pred_check
      _
    $region10: #{basic_conv2d.1} parent=5 // pred_check_branch
      %152 = sbr.rel (%p149) target = $region12
    $region11: #{basic_conv2d.1} parent=5 // pred_region
      %s153 = ssub.s32 %s10, 1
      // Predicated region
      $region13: #{basic_conv2d.1} parent=11 // pred_check
        %p154 = pneg %p69
      $region14: #{basic_conv2d.1} parent=11 // pred_check_branch
        %156 = sbr.rel (%p154) target = $region16
      $region15: #{basic_conv2d.1} parent=11 // pred_region
        _
      $region16: #{basic_conv2d.1} parent=11 // pred_fallthru
        _
      // Predicated region
      $region17: #{basic_conv2d.1} parent=11 // pred_check
        %p157 = pneg %p90
      $region18: #{basic_conv2d.1} parent=11 // pred_check_branch
        %159 = sbr.rel (%p157) target = $region20
      $region19: #{basic_conv2d.1} parent=11 // pred_region
        _
      $region20: #{basic_conv2d.1} parent=11 // pred_fallthru
        _
      // Predicated region
      $region21: #{basic_conv2d.1} parent=11 // pred_check
        %p160 = pneg %p111
      $region22: #{basic_conv2d.1} parent=11 // pred_check_branch
        %162 = sbr.rel (%p160) target = $region24
      $region23: #{basic_conv2d.1} parent=11 // pred_region
        _
      $region24: #{basic_conv2d.1} parent=11 // pred_fallthru
        _
    $region12: #{basic_conv2d.1} parent=5 // pred_fallthru
      _
    %p163 = scmp.lt.s32.totalorder %s10, 4
    // Predicated region
    $region25: #{basic_conv2d.1} parent=5 // pred_check
      %p164 = pneg %p163
    $region26: #{basic_conv2d.1} parent=5 // pred_check_branch
      %166 = sbr.rel (%p164) target = $region28
    $region27: #{basic_conv2d.1} parent=5 // pred_region
      // Predicated region
      $region29: #{basic_conv2d.1} parent=27 // pred_check
        %p167 = pneg %p42
      $region30: #{basic_conv2d.1} parent=27 // pred_check_branch
        %169 = sbr.rel (%p167) target = $region32
      $region31: #{basic_conv2d.1} parent=27 // pred_region
        %p170 = scmp.lt.s32.totalorder %s17, 1
        %s171 = scalar_select %p170, %s17, 1
        %s172 = smul.addr %s171, 36
        %s173 = smul.addr %s172, 4
        %s174 = scalar_lea.vmem %s0, %s173
      $region32: #{basic_conv2d.1} parent=27 // pred_fallthru
        _
    $region28: #{basic_conv2d.1} parent=5 // pred_fallthru
      _
    %p175 = scmp.le.s32.totalorder 1, %s10
    %p176 = scmp.lt.s32.totalorder %s10, 5
    %p177 = pnand %p175, %p176
    %p178 = pneg %p177
    // Predicated region
    $region33: #{basic_conv2d.1} parent=5 // pred_check
      _
    $region34: #{basic_conv2d.1} parent=5 // pred_check_branch
      %180 = sbr.rel (%p177) target = $region36
    $region35: #{basic_conv2d.1} parent=5 // pred_region
      %s181 = ssub.s32 %s10, 1
      %p182 = scmp.lt.s32.totalorder %s19, 1
      %s183 = scalar_select %p182, %s19, 1
      %s184 = smul.addr %s183, 36
      %s185 = smul.addr %s184, 4
      %s186 = scalar_lea.vmem %s0, %s185
      %p187 = pneg %p48
      %p188 = pneg %p45
      %p189 = pneg %p69
      %p190 = pneg %p66
      %p191 = pneg %p90
      %p192 = pneg %p87
      %p193 = pneg %p111
      %p194 = pneg %p108
      %p195 = pneg %p139
      %p196 = pneg %p136
      %s197 = smul.u32 8, %s20
      %p198 = scmp.lt.s32.totalorder %s19, 1
      %s199 = scalar_select %p198, %s19, 1
      %p200 = scmp.lt.s32.totalorder %s197, 15
      %s201 = scalar_select %p200, %s197, 15
      %s202 = smul.addr %s201, 2
      %s203 = smul.addr %s199, 32
      %s204 = sadd.s32 %s202, %s203
      %s205 = smul.addr %s204, 8
      %s206 = scalar_lea.vmem %s4, %s205
      %p207 = scmp.lt.s32.totalorder %s19, 1
      %s208 = scalar_select %p207, %s19, 1
      %s209 = smul.addr %s208, 36
      %s210 = smul.addr %s209, 4
      %s211 = scalar_lea.vmem %s0, %s210
      %s212 = smul.u32 8, %s20
      %p213 = scmp.lt.s32.totalorder %s19, 1
      %s214 = scalar_select %p213, %s19, 1
      %p215 = scmp.lt.s32.totalorder %s212, 15
      %s216 = scalar_select %p215, %s212, 15
      %s217 = smul.addr %s216, 2
      %s218 = smul.addr %s214, 32
      %s219 = sadd.s32 %s217, %s218
      %s220 = smul.addr %s219, 8
      %s221 = scalar_lea.vmem %s4, %s220
      %s222 = smul.u32 8, %s20
      %s224 = smul.u32 %s20, 8
      %v225 = vld [vmem:[%s2] sm:$0x1]
      %v226 = vld [vmem:[%s3] sm:$0x1]
      %s227 = smul.u32 %s224, 2
      %s228 = smul.addr %s227, 4
      %s229 = scalar_lea.vmem %s211, %s228
      %v230 = vld [vmem:[%s229] sm:$0xf]
      %v231 = vld [vmem:[%s229 + $0x4] sm:$0xf]
      %v232 = vld [vmem:[%s1] sm:$0xf]
      %v233 = vld [vmem:[%s1 + $0x4] sm:$0x3]
      %v236 = vunpack.c.l.b16 %v230
      %v237 = vunpack.c.l.b16 %v231
      %v238 = vpack.c.b16 %v237, %v236
      %v241 = vunpack.c.l.b16 %v232
      %v242 = vunpack.c.l.b16 %v233
      %v243 = vpack.c.b16 %v242, %v241
      %vm244 = vcmask 97280
      %v246 = vsel %vm244, %v238, 0
      %vm248 = vcmask 1045504
      %v250 = vsel %vm248, %v243, 0
      %252 = vmatprep.subr.bf16.mxu0 0
      %253 = vmatpush1.bf16.msra.mxu0 %v250
      %254 = vmatprep.subr.bf16.mxu0 0
      %255 = vmatpush1.bf16.msra.mxu0 0
      %256 = vmatprep.subr.bf16.mxu0 0
      %257 = vmatpush1.bf16.msra.mxu0 0
      %258 = vmatprep.subr.bf16.mxu0 0
      %259 = vmatpush1.bf16.msra.mxu0 0
      %260 = vmatprep.subr.bf16.mxu0 0
      %261 = vmatpush1.bf16.msra.mxu0 0
      %262 = vmatprep.subr.bf16.mxu0 0
      %263 = vmatpush1.bf16.msra.mxu0 0
      %264 = vmatprep.subr.bf16.mxu0 0
      %265 = vmatpush1.bf16.msra.mxu0 0
      %266 = vmatprep.subr.bf16.mxu0 0
      %267 = vmatpush1.bf16.msra.mxu0 0
      %268 = vmatprep.subr.bf16.mxu0 0
      %269 = vmatpush1.bf16.msra.mxu0 0
      %270 = vmatprep.subr.bf16.mxu0 0
      %271 = vmatpush1.bf16.msra.mxu0 0
      %272 = vmatprep.subr.bf16.mxu0 0
      %273 = vmatpush1.bf16.msra.mxu0 0
      %274 = vmatprep.subr.bf16.mxu0 0
      %275 = vmatpush1.bf16.msra.mxu0 0
      %276 = vmatprep.subr.bf16.mxu0 0
      %277 = vmatpush1.bf16.msra.mxu0 0
      %278 = vmatprep.subr.bf16.mxu0 0
      %279 = vmatpush1.bf16.msra.mxu0 0
      %280 = vmatprep.subr.bf16.mxu0 0
      %281 = vmatpush1.bf16.msra.mxu0 0
      %282 = vmatprep.subr.bf16.mxu0 0
      %283 = vmatpush1.bf16.msra.mxu0 0
      %284 = vmatprep.mubr.bf16.mxu0 0
      %285 = vmatmul.mubr.bf16.gmra.mrb[0].mxu0 %v246
      %v286 = vpop.f32.mrb[0].mxu0
      %v287 = vadd.f32 0.0, %v286
      %v288 = vpop.f32.mrb[0].mxu0
      %v289 = vpop.f32.mrb[0].mxu0
      %v290 = vadd.f32 0.0, %v289
      %v291 = vpop.f32.mrb[0].mxu0
      %292 = vdwg.mxu0
      %293 = vst [vmem:[%s221] sm:$0xff] %v287
      %294 = vst [vmem:[%s221 + $0x8] sm:$0xff] %v290
      %s295 = sadd.s32 %s224, 1
      %s296 = smul.u32 %s295, 2
      %s297 = smul.addr %s296, 4
      %s298 = scalar_lea.vmem %s211, %s297
      %v299 = vld [vmem:[%s298] sm:$0xf]
      %v300 = vld [vmem:[%s298 + $0x4] sm:$0xf]
      %s301 = scalar_lea.vmem %s1, 8
      %v302 = vld [vmem:[%s301] sm:$0xf]
      %v303 = vld [vmem:[%s301 + $0x4] sm:$0x3]
      %v306 = vunpack.c.l.b16 %v299
      %v307 = vunpack.c.l.b16 %v300
      %v308 = vpack.c.b16 %v307, %v306
      %v311 = vunpack.c.l.b16 %v302
      %v312 = vunpack.c.l.b16 %v303
      %v313 = vpack.c.b16 %v312, %v311
      %v315 = vsel %vm244, %v308, 0
      %v318 = vsel %vm248, %v313, 0
      %320 = vmatprep.subr.bf16.mxu0 0
      %321 = vmatpush1.bf16.msra.mxu0 %v318
      %322 = vmatprep.subr.bf16.mxu0 0
      %323 = vmatpush1.bf16.msra.mxu0 0
      %324 = vmatprep.subr.bf16.mxu0 0
      %325 = vmatpush1.bf16.msra.mxu0 0
      %326 = vmatprep.subr.bf16.mxu0 0
      %327 = vmatpush1.bf16.msra.mxu0 0
      %328 = vmatprep.subr.bf16.mxu0 0
      %329 = vmatpush1.bf16.msra.mxu0 0
      %330 = vmatprep.subr.bf16.mxu0 0
      %331 = vmatpush1.bf16.msra.mxu0 0
      %332 = vmatprep.subr.bf16.mxu0 0
      %333 = vmatpush1.bf16.msra.mxu0 0
      %334 = vmatprep.subr.bf16.mxu0 0
      %335 = vmatpush1.bf16.msra.mxu0 0
      %336 = vmatprep.subr.bf16.mxu0 0
      %337 = vmatpush1.bf16.msra.mxu0 0
      %338 = vmatprep.subr.bf16.mxu0 0
      %339 = vmatpush1.bf16.msra.mxu0 0
      %340 = vmatprep.subr.bf16.mxu0 0
      %341 = vmatpush1.bf16.msra.mxu0 0
      %342 = vmatprep.subr.bf16.mxu0 0
      %343 = vmatpush1.bf16.msra.mxu0 0
      %344 = vmatprep.subr.bf16.mxu0 0
      %345 = vmatpush1.bf16.msra.mxu0 0
      %346 = vmatprep.subr.bf16.mxu0 0
      %347 = vmatpush1.bf16.msra.mxu0 0
      %348 = vmatprep.subr.bf16.mxu0 0
      %349 = vmatpush1.bf16.msra.mxu0 0
      %350 = vmatprep.subr.bf16.mxu0 0
      %351 = vmatpush1.bf16.msra.mxu0 0
      %352 = vmatprep.mubr.bf16.mxu0 0
      %353 = vmatmul.mubr.bf16.gmra.mrb[0].mxu0 %v315
      %v354 = vpop.f32.mrb[0].mxu0
      %v355 = vadd.f32 0.0, %v354
      %v356 = vpop.f32.mrb[0].mxu0
      %v357 = vpop.f32.mrb[0].mxu0
      %v358 = vadd.f32 0.0, %v357
      %v359 = vpop.f32.mrb[0].mxu0
      %360 = vdwg.mxu0
      %v361 = vld [vmem:[%s221] sm:$0xff]
      %v362 = vld [vmem:[%s221 + $0x8] sm:$0xff]
      %v363 = vadd.f32 %v361, %v355
      %v364 = vadd.f32 %v362, %v358
      %365 = vst [vmem:[%s221] sm:$0xff] %v363
      %366 = vst [vmem:[%s221 + $0x8] sm:$0xff] %v364
      %s367 = sadd.s32 %s224, 2
      %s368 = smul.u32 %s367, 2
      %s369 = smul.addr %s368, 4
      %s370 = scalar_lea.vmem %s211, %s369
      %v371 = vld [vmem:[%s370] sm:$0xf]
      %v372 = vld [vmem:[%s370 + $0x4] sm:$0xf]
      %s373 = scalar_lea.vmem %s1, 16
      %v374 = vld [vmem:[%s373] sm:$0xf]
      %v375 = vld [vmem:[%s373 + $0x4] sm:$0x3]
      %v378 = vunpack.c.l.b16 %v371
      %v379 = vunpack.c.l.b16 %v372
      %v380 = vpack.c.b16 %v379, %v378
      %v383 = vunpack.c.l.b16 %v374
      %v384 = vunpack.c.l.b16 %v375
      %v385 = vpack.c.b16 %v384, %v383
      %v387 = vsel %vm244, %v380, 0
      %v390 = vsel %vm248, %v385, 0
      %392 = vmatprep.subr.bf16.mxu0 0
      %393 = vmatpush1.bf16.msra.mxu0 %v390
      %394 = vmatprep.subr.bf16.mxu0 0
      %395 = vmatpush1.bf16.msra.mxu0 0
      %396 = vmatprep.subr.bf16.mxu0 0
      %397 = vmatpush1.bf16.msra.mxu0 0
      %398 = vmatprep.subr.bf16.mxu0 0
      %399 = vmatpush1.bf16.msra.mxu0 0
      %400 = vmatprep.subr.bf16.mxu0 0
      %401 = vmatpush1.bf16.msra.mxu0 0
      %402 = vmatprep.subr.bf16.mxu0 0
      %403 = vmatpush1.bf16.msra.mxu0 0
      %404 = vmatprep.subr.bf16.mxu0 0
      %405 = vmatpush1.bf16.msra.mxu0 0
      %406 = vmatprep.subr.bf16.mxu0 0
      %407 = vmatpush1.bf16.msra.mxu0 0
      %408 = vmatprep.subr.bf16.mxu0 0
      %409 = vmatpush1.bf16.msra.mxu0 0
      %410 = vmatprep.subr.bf16.mxu0 0
      %411 = vmatpush1.bf16.msra.mxu0 0
      %412 = vmatprep.subr.bf16.mxu0 0
      %413 = vmatpush1.bf16.msra.mxu0 0
      %414 = vmatprep.subr.bf16.mxu0 0
      %415 = vmatpush1.bf16.msra.mxu0 0
      %416 = vmatprep.subr.bf16.mxu0 0
      %417 = vmatpush1.bf16.msra.mxu0 0
      %418 = vmatprep.subr.bf16.mxu0 0
      %419 = vmatpush1.bf16.msra.mxu0 0
      %420 = vmatprep.subr.bf16.mxu0 0
      %421 = vmatpush1.bf16.msra.mxu0 0
      %422 = vmatprep.subr.bf16.mxu0 0
      %423 = vmatpush1.bf16.msra.mxu0 0
      %424 = vmatprep.mubr.bf16.mxu0 0
      %425 = vmatmul.mubr.bf16.gmra.mrb[0].mxu0 %v387
      %v426 = vpop.f32.mrb[0].mxu0
      %v427 = vadd.f32 0.0, %v426
      %v428 = vpop.f32.mrb[0].mxu0
      %v429 = vpop.f32.mrb[0].mxu0
      %v430 = vadd.f32 0.0, %v429
      %v431 = vpop.f32.mrb[0].mxu0
      %432 = vdwg.mxu0
      %v433 = vld [vmem:[%s221] sm:$0xff]
      %v434 = vld [vmem:[%s221 + $0x8] sm:$0xff]
      %v435 = vadd.f32 %v433, %v427
      %v436 = vadd.f32 %v434, %v430
      %437 = vst [vmem:[%s221] sm:$0xff] %v435
      %438 = vst [vmem:[%s221 + $0x8] sm:$0xff] %v436
      %v439 = vld [vmem:[%s221] sm:$0xff]
      %v440 = vld [vmem:[%s221 + $0x8] sm:$0xff]
      %v442 = vlaneseq
      %v443 = vshrl.u32 %v442, 7
      %v444 = vsub.s32 0, %v443
      %v445 = vrot.slane %v225, %v444
      %v447 = vmul.f32 %v439, %v445
      %v448 = vmul.f32 %v440, %v445
      %v450 = vlaneseq
      %v451 = vshrl.u32 %v450, 7
      %v452 = vsub.s32 0, %v451
      %v453 = vrot.slane %v226, %v452
      %v455 = vadd.f32 %v447, %v453
      %v456 = vadd.f32 %v448, %v453
      %v457 = vmax.f32 %v455, 0.0
      %v458 = vmax.f32 %v456, 0.0
      %459 = vst [vmem:[%s221] sm:$0xff] %v457
      %460 = vst [vmem:[%s221 + $0x8] sm:$0xff] %v458
      %v461 = vld [vmem:[%s298] sm:$0xf]
      %v462 = vld [vmem:[%s298 + $0x4] sm:$0xf]
      %v463 = vld [vmem:[%s1] sm:$0xf]
      %v464 = vld [vmem:[%s1 + $0x4] sm:$0x3]
      %v467 = vunpack.c.l.b16 %v461
      %v468 = vunpack.c.l.b16 %v462
      %v469 = vpack.c.b16 %v468, %v467
      %v472 = vunpack.c.l.b16 %v463
      %v473 = vunpack.c.l.b16 %v464
      %v474 = vpack.c.b16 %v473, %v472
      %v476 = vsel %vm244, %v469, 0
      %v479 = vsel %vm248, %v474, 0
      %481 = vmatprep.subr.bf16.mxu0 0
      %482 = vmatpush1.bf16.msra.mxu0 %v479
      %483 = vmatprep.subr.bf16.mxu0 0
      %484 = vmatpush1.bf16.msra.mxu0 0
      %485 = vmatprep.subr.bf16.mxu0 0
      %486 = vmatpush1.bf16.msra.mxu0 0
      %487 = vmatprep.subr.bf16.mxu0 0
      %488 = vmatpush1.bf16.msra.mxu0 0
      %489 = vmatprep.subr.bf16.mxu0 0
      %490 = vmatpush1.bf16.msra.mxu0 0
      %491 = vmatprep.subr.bf16.mxu0 0
      %492 = vmatpush1.bf16.msra.mxu0 0
      %493 = vmatprep.subr.bf16.mxu0 0
      %494 = vmatpush1.bf16.msra.mxu0 0
      %495 = vmatprep.subr.bf16.mxu0 0
      %496 = vmatpush1.bf16.msra.mxu0 0
      %497 = vmatprep.subr.bf16.mxu0 0
      %498 = vmatpush1.bf16.msra.mxu0 0
      %499 = vmatprep.subr.bf16.mxu0 0
      %500 = vmatpush1.bf16.msra.mxu0 0
      %501 = vmatprep.subr.bf16.mxu0 0
      %502 = vmatpush1.bf16.msra.mxu0 0
      %503 = vmatprep.subr.bf16.mxu0 0
      %504 = vmatpush1.bf16.msra.mxu0 0
      %505 = vmatprep.subr.bf16.mxu0 0
      %506 = vmatpush1.bf16.msra.mxu0 0
      %507 = vmatprep.subr.bf16.mxu0 0
      %508 = vmatpush1.bf16.msra.mxu0 0
      %509 = vmatprep.subr.bf16.mxu0 0
      %510 = vmatpush1.bf16.msra.mxu0 0
      %511 = vmatprep.subr.bf16.mxu0 0
      %512 = vmatpush1.bf16.msra.mxu0 0
      %513 = vmatprep.mubr.bf16.mxu0 0
      %514 = vmatmul.mubr.bf16.gmra.mrb[0].mxu0 %v476
      %v515 = vpop.f32.mrb[0].mxu0
      %v516 = vadd.f32 0.0, %v515
      %v517 = vpop.f32.mrb[0].mxu0
      %v518 = vpop.f32.mrb[0].mxu0
      %v519 = vadd.f32 0.0, %v518
      %v520 = vpop.f32.mrb[0].mxu0
      %521 = vdwg.mxu0
      %s522 = scalar_lea.vmem %s221, 16
      %523 = vst [vmem:[%s522] sm:$0xff] %v516
      %524 = vst [vmem:[%s522 + $0x8] sm:$0xff] %v519
      %v525 = vld [vmem:[%s370] sm:$0xf]
      %v526 = vld [vmem:[%s370 + $0x4] sm:$0xf]
      %v527 = vld [vmem:[%s301] sm:$0xf]
      %v528 = vld [vmem:[%s301 + $0x4] sm:$0x3]
      %v531 = vunpack.c.l.b16 %v525
      %v532 = vunpack.c.l.b16 %v526
      %v533 = vpack.c.b16 %v532, %v531
      %v536 = vunpack.c.l.b16 %v527
      %v537 = vunpack.c.l.b16 %v528
      %v538 = vpack.c.b16 %v537, %v536
      %v540 = vsel %vm244, %v533, 0
      %v543 = vsel %vm248, %v538, 0
      %545 = vmatprep.subr.bf16.mxu0 0
      %546 = vmatpush1.bf16.msra.mxu0 %v543
      %547 = vmatprep.subr.bf16.mxu0 0
      %548 = vmatpush1.bf16.msra.mxu0 0
      %549 = vmatprep.subr.bf16.mxu0 0
      %550 = vmatpush1.bf16.msra.mxu0 0
      %551 = vmatprep.subr.bf16.mxu0 0
      %552 = vmatpush1.bf16.msra.mxu0 0
      %553 = vmatprep.subr.bf16.mxu0 0
      %554 = vmatpush1.bf16.msra.mxu0 0
      %555 = vmatprep.subr.bf16.mxu0 0
      %556 = vmatpush1.bf16.msra.mxu0 0
      %557 = vmatprep.subr.bf16.mxu0 0
      %558 = vmatpush1.bf16.msra.mxu0 0
      %559 = vmatprep.subr.bf16.mxu0 0
      %560 = vmatpush1.bf16.msra.mxu0 0
      %561 = vmatprep.subr.bf16.mxu0 0
      %562 = vmatpush1.bf16.msra.mxu0 0
      %563 = vmatprep.subr.bf16.mxu0 0
      %564 = vmatpush1.bf16.msra.mxu0 0
      %565 = vmatprep.subr.bf16.mxu0 0
      %566 = vmatpush1.bf16.msra.mxu0 0
      %567 = vmatprep.subr.bf16.mxu0 0
      %568 = vmatpush1.bf16.msra.mxu0 0
      %569 = vmatprep.subr.bf16.mxu0 0
      %570 = vmatpush1.bf16.msra.mxu0 0
      %571 = vmatprep.subr.bf16.mxu0 0
      %572 = vmatpush1.bf16.msra.mxu0 0
      %573 = vmatprep.subr.bf16.mxu0 0
      %574 = vmatpush1.bf16.msra.mxu0 0
      %575 = vmatprep.subr.bf16.mxu0 0
      %576 = vmatpush1.bf16.msra.mxu0 0
      %577 = vmatprep.mubr.bf16.mxu0 0
      %578 = vmatmul.mubr.bf16.gmra.mrb[0].mxu0 %v540
      %v579 = vpop.f32.mrb[0].mxu0
      %v580 = vadd.f32 0.0, %v579
      %v581 = vpop.f32.mrb[0].mxu0
      %v582 = vpop.f32.mrb[0].mxu0
      %v583 = vadd.f32 0.0, %v582
      %v584 = vpop.f32.mrb[0].mxu0
      %585 = vdwg.mxu0
      %v586 = vld [vmem:[%s522] sm:$0xff]
      %v587 = vld [vmem:[%s522 + $0x8] sm:$0xff]
      %v588 = vadd.f32 %v586, %v580
      %v589 = vadd.f32 %v587, %v583
      %590 = vst [vmem:[%s522] sm:$0xff] %v588
      %591 = vst [vmem:[%s522 + $0x8] sm:$0xff] %v589
      %s592 = sadd.s32 %s224, 3
      %s593 = smul.u32 %s592, 2
      %s594 = smul.addr %s593, 4
      %s595 = scalar_lea.vmem %s211, %s594
      %v596 = vld [vmem:[%s595] sm:$0xf]
      %v597 = vld [vmem:[%s595 + $0x4] sm:$0xf]
      %v598 = vld [vmem:[%s373] sm:$0xf]
      %v599 = vld [vmem:[%s373 + $0x4] sm:$0x3]
      %v602 = vunpack.c.l.b16 %v596
      %v603 = vunpack.c.l.b16 %v597
      %v604 = vpack.c.b16 %v603, %v602
      %v607 = vunpack.c.l.b16 %v598
      %v608 = vunpack.c.l.b16 %v599
      %v609 = vpack.c.b16 %v608, %v607
      %v611 = vsel %vm244, %v604, 0
      %v614 = vsel %vm248, %v609, 0
      %616 = vmatprep.subr.bf16.mxu0 0
      %617 = vmatpush1.bf16.msra.mxu0 %v614
      %618 = vmatprep.subr.bf16.mxu0 0
      %619 = vmatpush1.bf16.msra.mxu0 0
      %620 = vmatprep.subr.bf16.mxu0 0
      %621 = vmatpush1.bf16.msra.mxu0 0
      %622 = vmatprep.subr.bf16.mxu0 0
      %623 = vmatpush1.bf16.msra.mxu0 0
      %624 = vmatprep.subr.bf16.mxu0 0
      %625 = vmatpush1.bf16.msra.mxu0 0
      %626 = vmatprep.subr.bf16.mxu0 0
      %627 = vmatpush1.bf16.msra.mxu0 0
      %628 = vmatprep.subr.bf16.mxu0 0
      %629 = vmatpush1.bf16.msra.mxu0 0
      %630 = vmatprep.subr.bf16.mxu0 0
      %631 = vmatpush1.bf16.msra.mxu0 0
      %632 = vmatprep.subr.bf16.mxu0 0
      %633 = vmatpush1.bf16.msra.mxu0 0
      %634 = vmatprep.subr.bf16.mxu0 0
      %635 = vmatpush1.bf16.msra.mxu0 0
      %636 = vmatprep.subr.bf16.mxu0 0
      %637 = vmatpush1.bf16.msra.mxu0 0
      %638 = vmatprep.subr.bf16.mxu0 0
      %639 = vmatpush1.bf16.msra.mxu0 0
      %640 = vmatprep.subr.bf16.mxu0 0
      %641 = vmatpush1.bf16.msra.mxu0 0
      %642 = vmatprep.subr.bf16.mxu0 0
      %643 = vmatpush1.bf16.msra.mxu0 0
      %644 = vmatprep.subr.bf16.mxu0 0
      %645 = vmatpush1.bf16.msra.mxu0 0
      %646 = vmatprep.subr.bf16.mxu0 0
      %647 = vmatpush1.bf16.msra.mxu0 0
      %648 = vmatprep.mubr.bf16.mxu0 0
      %649 = vmatmul.mubr.bf16.gmra.mrb[0].mxu0 %v611
      %v650 = vpop.f32.mrb[0].mxu0
      %v651 = vadd.f32 0.0, %v650
      %v652 = vpop.f32.mrb[0].mxu0
      %v653 = vpop.f32.mrb[0].mxu0
      %v654 = vadd.f32 0.0, %v653
      %v655 = vpop.f32.mrb[0].mxu0
      %656 = vdwg.mxu0
      %v657 = vld [vmem:[%s522] sm:$0xff]
      %v658 = vld [vmem:[%s522 + $0x8] sm:$0xff]
      %v659 = vadd.f32 %v657, %v651
      %v660 = vadd.f32 %v658, %v654
      %661 = vst [vmem:[%s522] sm:$0xff] %v659
      %662 = vst [vmem:[%s522 + $0x8] sm:$0xff] %v660
      %v663 = vld [vmem:[%s522] sm:$0xff]
      %v664 = vld [vmem:[%s522 + $0x8] sm:$0xff]
      %v665 = vmul.f32 %v663, %v445
      %v666 = vmul.f32 %v664, %v445
      %v667 = vadd.f32 %v665, %v453
      %v668 = vadd.f32 %v666, %v453
      %v669 = vmax.f32 %v667, 0.0
      %v670 = vmax.f32 %v668, 0.0
      %671 = vst [vmem:[%s522] sm:$0xff] %v669
      %672 = vst [vmem:[%s522 + $0x8] sm:$0xff] %v670
      %v673 = vld [vmem:[%s370] sm:$0xf]
      %v674 = vld [vmem:[%s370 + $0x4] sm:$0xf]
      %v675 = vld [vmem:[%s1] sm:$0xf]
      %v676 = vld [vmem:[%s1 + $0x4] sm:$0x3]
      %v679 = vunpack.c.l.b16 %v673
      %v680 = vunpack.c.l.b16 %v674
      %v681 = vpack.c.b16 %v680, %v679
      %v684 = vunpack.c.l.b16 %v675
      %v685 = vunpack.c.l.b16 %v676
      %v686 = vpack.c.b16 %v685, %v684
      %v688 = vsel %vm244, %v681, 0
      %v691 = vsel %vm248, %v686, 0
      %693 = vmatprep.subr.bf16.mxu0 0
      %694 = vmatpush1.bf16.msra.mxu0 %v691
      %695 = vmatprep.subr.bf16.mxu0 0
      %696 = vmatpush1.bf16.msra.mxu0 0
      %697 = vmatprep.subr.bf16.mxu0 0
      %698 = vmatpush1.bf16.msra.mxu0 0
      %699 = vmatprep.subr.bf16.mxu0 0
      %700 = vmatpush1.bf16.msra.mxu0 0
      %701 = vmatprep.subr.bf16.mxu0 0
      %702 = vmatpush1.bf16.msra.mxu0 0
      %703 = vmatprep.subr.bf16.mxu0 0
      %704 = vmatpush1.bf16.msra.mxu0 0
      %705 = vmatprep.subr.bf16.mxu0 0
      %706 = vmatpush1.bf16.msra.mxu0 0
      %707 = vmatprep.subr.bf16.mxu0 0
      %708 = vmatpush1.bf16.msra.mxu0 0
      %709 = vmatprep.subr.bf16.mxu0 0
      %710 = vmatpush1.bf16.msra.mxu0 0
      %711 = vmatprep.subr.bf16.mxu0 0
      %712 = vmatpush1.bf16.msra.mxu0 0
      %713 = vmatprep.subr.bf16.mxu0 0
      %714 = vmatpush1.bf16.msra.mxu0 0
      %715 = vmatprep.subr.bf16.mxu0 0
      %716 = vmatpush1.bf16.msra.mxu0 0
      %717 = vmatprep.subr.bf16.mxu0 0
      %718 = vmatpush1.bf16.msra.mxu0 0
      %719 = vmatprep.subr.bf16.mxu0 0
      %720 = vmatpush1.bf16.msra.mxu0 0
      %721 = vmatprep.subr.bf16.mxu0 0
      %722 = vmatpush1.bf16.msra.mxu0 0
      %723 = vmatprep.subr.bf16.mxu0 0
      %724 = vmatpush1.bf16.msra.mxu0 0
      %725 = vmatprep.mubr.bf16.mxu0 0
      %726 = vmatmul.mubr.bf16.gmra.mrb[0].mxu0 %v688
      %v727 = vpop.f32.mrb[0].mxu0
      %v728 = vadd.f32 0.0, %v727
      %v729 = vpop.f32.mrb[0].mxu0
      %v730 = vpop.f32.mrb[0].mxu0
      %v731 = vadd.f32 0.0, %v730
      %v732 = vpop.f32.mrb[0].mxu0
      %733 = vdwg.mxu0
      %s734 = scalar_lea.vmem %s221, 32
      %735 = vst [vmem:[%s734] sm:$0xff] %v728
      %736 = vst [vmem:[%s734 + $0x8] sm:$0xff] %v731
      %v737 = vld [vmem:[%s595] sm:$0xf]
      %v738 = vld [vmem:[%s595 + $0x4] sm:$0xf]
      %v739 = vld [vmem:[%s301] sm:$0xf]
      %v740 = vld [vmem:[%s301 + $0x4] sm:$0x3]
      %v743 = vunpack.c.l.b16 %v737
      %v744 = vunpack.c.l.b16 %v738
      %v745 = vpack.c.b16 %v744, %v743
      %v748 = vunpack.c.l.b16 %v739
      %v749 = vunpack.c.l.b16 %v740
      %v750 = vpack.c.b16 %v749, %v748
      %v752 = vsel %vm244, %v745, 0
      %v755 = vsel %vm248, %v750, 0
      %757 = vmatprep.subr.bf16.mxu0 0
      %758 = vmatpush1.bf16.msra.mxu0 %v755
      %759 = vmatprep.subr.bf16.mxu0 0
      %760 = vmatpush1.bf16.msra.mxu0 0
      %761 = vmatprep.subr.bf16.mxu0 0
      %762 = vmatpush1.bf16.msra.mxu0 0
      %763 = vmatprep.subr.bf16.mxu0 0
      %764 = vmatpush1.bf16.msra.mxu0 0
      %765 = vmatprep.subr.bf16.mxu0 0
      %766 = vmatpush1.bf16.msra.mxu0 0
      %767 = vmatprep.subr.bf16.mxu0 0
      %768 = vmatpush1.bf16.msra.mxu0 0
      %769 = vmatprep.subr.bf16.mxu0 0
      %770 = vmatpush1.bf16.msra.mxu0 0
      %771 = vmatprep.subr.bf16.mxu0 0
      %772 = vmatpush1.bf16.msra.mxu0 0
      %773 = vmatprep.subr.bf16.mxu0 0
      %774 = vmatpush1.bf16.msra.mxu0 0
      %775 = vmatprep.subr.bf16.mxu0 0
      %776 = vmatpush1.bf16.msra.mxu0 0
      %777 = vmatprep.subr.bf16.mxu0 0
      %778 = vmatpush1.bf16.msra.mxu0 0
      %779 = vmatprep.subr.bf16.mxu0 0
      %780 = vmatpush1.bf16.msra.mxu0 0
      %781 = vmatprep.subr.bf16.mxu0 0
      %782 = vmatpush1.bf16.msra.mxu0 0
      %783 = vmatprep.subr.bf16.mxu0 0
      %784 = vmatpush1.bf16.msra.mxu0 0
      %785 = vmatprep.subr.bf16.mxu0 0
      %786 = vmatpush1.bf16.msra.mxu0 0
      %787 = vmatprep.subr.bf16.mxu0 0
      %788 = vmatpush1.bf16.msra.mxu0 0
      %789 = vmatprep.mubr.bf16.mxu0 0
      %790 = vmatmul.mubr.bf16.gmra.mrb[0].mxu0 %v752
      %v791 = vpop.f32.mrb[0].mxu0
      %v792 = vadd.f32 0.0, %v791
      %v793 = vpop.f32.mrb[0].mxu0
      %v794 = vpop.f32.mrb[0].mxu0
      %v795 = vadd.f32 0.0, %v794
      %v796 = vpop.f32.mrb[0].mxu0
      %797 = vdwg.mxu0
      %v798 = vld [vmem:[%s734] sm:$0xff]
      %v799 = vld [vmem:[%s734 + $0x8] sm:$0xff]
      %v800 = vadd.f32 %v798, %v792
      %v801 = vadd.f32 %v799, %v795
      %802 = vst [vmem:[%s734] sm:$0xff] %v800
      %803 = vst [vmem:[%s734 + $0x8] sm:$0xff] %v801
      %s804 = sadd.s32 %s224, 4
      %s805 = smul.u32 %s804, 2
      %s806 = smul.addr %s805, 4
      %s807 = scalar_lea.vmem %s211, %s806
      %v808 = vld [vmem:[%s807] sm:$0xf]
      %v809 = vld [vmem:[%s807 + $0x4] sm:$0xf]
      %v810 = vld [vmem:[%s373] sm:$0xf]
      %v811 = vld [vmem:[%s373 + $0x4] sm:$0x3]
      %v814 = vunpack.c.l.b16 %v808
      %v815 = vunpack.c.l.b16 %v809
      %v816 = vpack.c.b16 %v815, %v814
      %v819 = vunpack.c.l.b16 %v810
      %v820 = vunpack.c.l.b16 %v811
      %v821 = vpack.c.b16 %v820, %v819
      %v823 = vsel %vm244, %v816, 0
      %v826 = vsel %vm248, %v821, 0
      %828 = vmatprep.subr.bf16.mxu0 0
      %829 = vmatpush1.bf16.msra.mxu0 %v826
      %830 = vmatprep.subr.bf16.mxu0 0
      %831 = vmatpush1.bf16.msra.mxu0 0
      %832 = vmatprep.subr.bf16.mxu0 0
      %833 = vmatpush1.bf16.msra.mxu0 0
      %834 = vmatprep.subr.bf16.mxu0 0
      %835 = vmatpush1.bf16.msra.mxu0 0
      %836 = vmatprep.subr.bf16.mxu0 0
      %837 = vmatpush1.bf16.msra.mxu0 0
      %838 = vmatprep.subr.bf16.mxu0 0
      %839 = vmatpush1.bf16.msra.mxu0 0
      %840 = vmatprep.subr.bf16.mxu0 0
      %841 = vmatpush1.bf16.msra.mxu0 0
      %842 = vmatprep.subr.bf16.mxu0 0
      %843 = vmatpush1.bf16.msra.mxu0 0
      %844 = vmatprep.subr.bf16.mxu0 0
      %845 = vmatpush1.bf16.msra.mxu0 0
      %846 = vmatprep.subr.bf16.mxu0 0
      %847 = vmatpush1.bf16.msra.mxu0 0
      %848 = vmatprep.subr.bf16.mxu0 0
      %849 = vmatpush1.bf16.msra.mxu0 0
      %850 = vmatprep.subr.bf16.mxu0 0
      %851 = vmatpush1.bf16.msra.mxu0 0
      %852 = vmatprep.subr.bf16.mxu0 0
      %853 = vmatpush1.bf16.msra.mxu0 0
      %854 = vmatprep.subr.bf16.mxu0 0
      %855 = vmatpush1.bf16.msra.mxu0 0
      %856 = vmatprep.subr.bf16.mxu0 0
      %857 = vmatpush1.bf16.msra.mxu0 0
      %858 = vmatprep.subr.bf16.mxu0 0
      %859 = vmatpush1.bf16.msra.mxu0 0
      %860 = vmatprep.mubr.bf16.mxu0 0
      %861 = vmatmul.mubr.bf16.gmra.mrb[0].mxu0 %v823
      %v862 = vpop.f32.mrb[0].mxu0
      %v863 = vadd.f32 0.0, %v862
      %v864 = vpop.f32.mrb[0].mxu0
      %v865 = vpop.f32.mrb[0].mxu0
      %v866 = vadd.f32 0.0, %v865
      %v867 = vpop.f32.mrb[0].mxu0
      %868 = vdwg.mxu0
      %v869 = vld [vmem:[%s734] sm:$0xff]
      %v870 = vld [vmem:[%s734 + $0x8] sm:$0xff]
      %v871 = vadd.f32 %v869, %v863
      %v872 = vadd.f32 %v870, %v866
      %873 = vst [vmem:[%s734] sm:$0xff] %v871
      %874 = vst [vmem:[%s734 + $0x8] sm:$0xff] %v872
      %v875 = vld [vmem:[%s734] sm:$0xff]
      %v876 = vld [vmem:[%s734 + $0x8] sm:$0xff]
      %v877 = vmul.f32 %v875, %v445
      %v878 = vmul.f32 %v876, %v445
      %v879 = vadd.f32 %v877, %v453
      %v880 = vadd.f32 %v878, %v453
      %v881 = vmax.f32 %v879, 0.0
      %v882 = vmax.f32 %v880, 0.0
      %883 = vst [vmem:[%s734] sm:$0xff] %v881
      %884 = vst [vmem:[%s734 + $0x8] sm:$0xff] %v882
      %v885 = vld [vmem:[%s595] sm:$0xf]
      %v886 = vld [vmem:[%s595 + $0x4] sm:$0xf]
      %v887 = vld [vmem:[%s1] sm:$0xf]
      %v888 = vld [vmem:[%s1 + $0x4] sm:$0x3]
      %v891 = vunpack.c.l.b16 %v885
      %v892 = vunpack.c.l.b16 %v886
      %v893 = vpack.c.b16 %v892, %v891
      %v896 = vunpack.c.l.b16 %v887
      %v897 = vunpack.c.l.b16 %v888
      %v898 = vpack.c.b16 %v897, %v896
      %v900 = vsel %vm244, %v893, 0
      %v903 = vsel %vm248, %v898, 0
      %905 = vmatprep.subr.bf16.mxu0 0
      %906 = vmatpush1.bf16.msra.mxu0 %v903
      %907 = vmatprep.subr.bf16.mxu0 0
      %908 = vmatpush1.bf16.msra.mxu0 0
      %909 = vmatprep.subr.bf16.mxu0 0
      %910 = vmatpush1.bf16.msra.mxu0 0
      %911 = vmatprep.subr.bf16.mxu0 0
      %912 = vmatpush1.bf16.msra.mxu0 0
      %913 = vmatprep.subr.bf16.mxu0 0
      %914 = vmatpush1.bf16.msra.mxu0 0
      %915 = vmatprep.subr.bf16.mxu0 0
      %916 = vmatpush1.bf16.msra.mxu0 0
      %917 = vmatprep.subr.bf16.mxu0 0
      %918 = vmatpush1.bf16.msra.mxu0 0
      %919 = vmatprep.subr.bf16.mxu0 0
      %920 = vmatpush1.bf16.msra.mxu0 0
      %921 = vmatprep.subr.bf16.mxu0 0
      %922 = vmatpush1.bf16.msra.mxu0 0
      %923 = vmatprep.subr.bf16.mxu0 0
      %924 = vmatpush1.bf16.msra.mxu0 0
      %925 = vmatprep.subr.bf16.mxu0 0
      %926 = vmatpush1.bf16.msra.mxu0 0
      %927 = vmatprep.subr.bf16.mxu0 0
      %928 = vmatpush1.bf16.msra.mxu0 0
      %929 = vmatprep.subr.bf16.mxu0 0
      %930 = vmatpush1.bf16.msra.mxu0 0
      %931 = vmatprep.subr.bf16.mxu0 0
      %932 = vmatpush1.bf16.msra.mxu0 0
      %933 = vmatprep.subr.bf16.mxu0 0
      %934 = vmatpush1.bf16.msra.mxu0 0
      %935 = vmatprep.subr.bf16.mxu0 0
      %936 = vmatpush1.bf16.msra.mxu0 0
      %937 = vmatprep.mubr.bf16.mxu0 0
      %938 = vmatmul.mubr.bf16.gmra.mrb[0].mxu0 %v900
      %v939 = vpop.f32.mrb[0].mxu0
      %v940 = vadd.f32 0.0, %v939
      %v941 = vpop.f32.mrb[0].mxu0
      %v942 = vpop.f32.mrb[0].mxu0
      %v943 = vadd.f32 0.0, %v942
      %v944 = vpop.f32.mrb[0].mxu0
      %945 = vdwg.mxu0
      %s946 = scalar_lea.vmem %s221, 48
      %947 = vst [vmem:[%s946] sm:$0xff] %v940
      %948 = vst [vmem:[%s946 + $0x8] sm:$0xff] %v943
      %v949 = vld [vmem:[%s807] sm:$0xf]
      %v950 = vld [vmem:[%s807 + $0x4] sm:$0xf]
      %v951 = vld [vmem:[%s301] sm:$0xf]
      %v952 = vld [vmem:[%s301 + $0x4] sm:$0x3]
      %v955 = vunpack.c.l.b16 %v949
      %v956 = vunpack.c.l.b16 %v950
      %v957 = vpack.c.b16 %v956, %v955
      %v960 = vunpack.c.l.b16 %v951
      %v961 = vunpack.c.l.b16 %v952
      %v962 = vpack.c.b16 %v961, %v960
      %v964 = vsel %vm244, %v957, 0
      %v967 = vsel %vm248, %v962, 0
      %969 = vmatprep.subr.bf16.mxu0 0
      %970 = vmatpush1.bf16.msra.mxu0 %v967
      %971 = vmatprep.subr.bf16.mxu0 0
      %972 = vmatpush1.bf16.msra.mxu0 0
      %973 = vmatprep.subr.bf16.mxu0 0
      %974 = vmatpush1.bf16.msra.mxu0 0
      %975 = vmatprep.subr.bf16.mxu0 0
      %976 = vmatpush1.bf16.msra.mxu0 0
      %977 = vmatprep.subr.bf16.mxu0 0
      %978 = vmatpush1.bf16.msra.mxu0 0
      %979 = vmatprep.subr.bf16.mxu0 0
      %980 = vmatpush1.bf16.msra.mxu0 0
      %981 = vmatprep.subr.bf16.mxu0 0
      %982 = vmatpush1.bf16.msra.mxu0 0
      %983 = vmatprep.subr.bf16.mxu0 0
      %984 = vmatpush1.bf16.msra.mxu0 0
      %985 = vmatprep.subr.bf16.mxu0 0
      %986 = vmatpush1.bf16.msra.mxu0 0
      %987 = vmatprep.subr.bf16.mxu0 0
      %988 = vmatpush1.bf16.msra.mxu0 0
      %989 = vmatprep.subr.bf16.mxu0 0
      %990 = vmatpush1.bf16.msra.mxu0 0
      %991 = vmatprep.subr.bf16.mxu0 0
      %992 = vmatpush1.bf16.msra.mxu0 0
      %993 = vmatprep.subr.bf16.mxu0 0
      %994 = vmatpush1.bf16.msra.mxu0 0
      %995 = vmatprep.subr.bf16.mxu0 0
      %996 = vmatpush1.bf16.msra.mxu0 0
      %997 = vmatprep.subr.bf16.mxu0 0
      %998 = vmatpush1.bf16.msra.mxu0 0
      %999 = vmatprep.subr.bf16.mxu0 0
      %1000 = vmatpush1.bf16.msra.mxu0 0
      %1001 = vmatprep.mubr.bf16.mxu0 0
      %1002 = vmatmul.mubr.bf16.gmra.mrb[0].mxu0 %v964
      %v1003 = vpop.f32.mrb[0].mxu0
      %v1004 = vadd.f32 0.0, %v1003
      %v1005 = vpop.f32.mrb[0].mxu0
      %v1006 = vpop.f32.mrb[0].mxu0
      %v1007 = vadd.f32 0.0, %v1006
      %v1008 = vpop.f32.mrb[0].mxu0
      %1009 = vdwg.mxu0
      %v1010 = vld [vmem:[%s946] sm:$0xff]
      %v1011 = vld [vmem:[%s946 + $0x8] sm:$0xff]
      %v1012 = vadd.f32 %v1010, %v1004
      %v1013 = vadd.f32 %v1011, %v1007
      %1014 = vst [vmem:[%s946] sm:$0xff] %v1012
      %1015 = vst [vmem:[%s946 + $0x8] sm:$0xff] %v1013
      %s1016 = sadd.s32 %s224, 5
      %s1017 = smul.u32 %s1016, 2
      %s1018 = smul.addr %s1017, 4
      %s1019 = scalar_lea.vmem %s211, %s1018
      %v1020 = vld [vmem:[%s1019] sm:$0xf]
      %v1021 = vld [vmem:[%s1019 + $0x4] sm:$0xf]
      %v1022 = vld [vmem:[%s373] sm:$0xf]
      %v1023 = vld [vmem:[%s373 + $0x4] sm:$0x3]
      %v1026 = vunpack.c.l.b16 %v1020
      %v1027 = vunpack.c.l.b16 %v1021
      %v1028 = vpack.c.b16 %v1027, %v1026
      %v1031 = vunpack.c.l.b16 %v1022
      %v1032 = vunpack.c.l.b16 %v1023
      %v1033 = vpack.c.b16 %v1032, %v1031
      %v1035 = vsel %vm244, %v1028, 0
      %v1038 = vsel %vm248, %v1033, 0
      %1040 = vmatprep.subr.bf16.mxu0 0
      %1041 = vmatpush1.bf16.msra.mxu0 %v1038
      %1042 = vmatprep.subr.bf16.mxu0 0
      %1043 = vmatpush1.bf16.msra.mxu0 0
      %1044 = vmatprep.subr.bf16.mxu0 0
      %1045 = vmatpush1.bf16.msra.mxu0 0
      %1046 = vmatprep.subr.bf16.mxu0 0
      %1047 = vmatpush1.bf16.msra.mxu0 0
      %1048 = vmatprep.subr.bf16.mxu0 0
      %1049 = vmatpush1.bf16.msra.mxu0 0
      %1050 = vmatprep.subr.bf16.mxu0 0
      %1051 = vmatpush1.bf16.msra.mxu0 0
      %1052 = vmatprep.subr.bf16.mxu0 0
      %1053 = vmatpush1.bf16.msra.mxu0 0
      %1054 = vmatprep.subr.bf16.mxu0 0
      %1055 = vmatpush1.bf16.msra.mxu0 0
      %1056 = vmatprep.subr.bf16.mxu0 0
      %1057 = vmatpush1.bf16.msra.mxu0 0
      %1058 = vmatprep.subr.bf16.mxu0 0
      %1059 = vmatpush1.bf16.msra.mxu0 0
      %1060 = vmatprep.subr.bf16.mxu0 0
      %1061 = vmatpush1.bf16.msra.mxu0 0
      %1062 = vmatprep.subr.bf16.mxu0 0
      %1063 = vmatpush1.bf16.msra.mxu0 0
      %1064 = vmatprep.subr.bf16.mxu0 0
      %1065 = vmatpush1.bf16.msra.mxu0 0
      %1066 = vmatprep.subr.bf16.mxu0 0
      %1067 = vmatpush1.bf16.msra.mxu0 0
      %1068 = vmatprep.subr.bf16.mxu0 0
      %1069 = vmatpush1.bf16.msra.mxu0 0
      %1070 = vmatprep.subr.bf16.mxu0 0
      %1071 = vmatpush1.bf16.msra.mxu0 0
      %1072 = vmatprep.mubr.bf16.mxu0 0
      %1073 = vmatmul.mubr.bf16.gmra.mrb[0].mxu0 %v1035
      %v1074 = vpop.f32.mrb[0].mxu0
      %v1075 = vadd.f32 0.0, %v1074
      %v1076 = vpop.f32.mrb[0].mxu0
      %v1077 = vpop.f32.mrb[0].mxu0
      %v1078 = vadd.f32 0.0, %v1077
      %v1079 = vpop.f32.mrb[0].mxu0
      %1080 = vdwg.mxu0
      %v1081 = vld [vmem:[%s946] sm:$0xff]
      %v1082 = vld [vmem:[%s946 + $0x8] sm:$0xff]
      %v1083 = vadd.f32 %v1081, %v1075
      %v1084 = vadd.f32 %v1082, %v1078
      %1085 = vst [vmem:[%s946] sm:$0xff] %v1083
      %1086 = vst [vmem:[%s946 + $0x8] sm:$0xff] %v1084
      %v1087 = vld [vmem:[%s946] sm:$0xff]
      %v1088 = vld [vmem:[%s946 + $0x8] sm:$0xff]
      %v1089 = vmul.f32 %v1087, %v445
      %v1090 = vmul.f32 %v1088, %v445
      %v1091 = vadd.f32 %v1089, %v453
      %v1092 = vadd.f32 %v1090, %v453
      %v1093 = vmax.f32 %v1091, 0.0
      %v1094 = vmax.f32 %v1092, 0.0
      %1095 = vst [vmem:[%s946] sm:$0xff] %v1093
      %1096 = vst [vmem:[%s946 + $0x8] sm:$0xff] %v1094
      %v1097 = vld [vmem:[%s807] sm:$0xf]
      %v1098 = vld [vmem:[%s807 + $0x4] sm:$0xf]
      %v1099 = vld [vmem:[%s1] sm:$0xf]
      %v1100 = vld [vmem:[%s1 + $0x4] sm:$0x3]
      %v1103 = vunpack.c.l.b16 %v1097
      %v1104 = vunpack.c.l.b16 %v1098
      %v1105 = vpack.c.b16 %v1104, %v1103
      %v1108 = vunpack.c.l.b16 %v1099
      %v1109 = vunpack.c.l.b16 %v1100
      %v1110 = vpack.c.b16 %v1109, %v1108
      %v1112 = vsel %vm244, %v1105, 0
      %v1115 = vsel %vm248, %v1110, 0
      %1117 = vmatprep.subr.bf16.mxu0 0
      %1118 = vmatpush1.bf16.msra.mxu0 %v1115
      %1119 = vmatprep.subr.bf16.mxu0 0
      %1120 = vmatpush1.bf16.msra.mxu0 0
      %1121 = vmatprep.subr.bf16.mxu0 0
      %1122 = vmatpush1.bf16.msra.mxu0 0
      %1123 = vmatprep.subr.bf16.mxu0 0
      %1124 = vmatpush1.bf16.msra.mxu0 0
      %1125 = vmatprep.subr.bf16.mxu0 0
      %1126 = vmatpush1.bf16.msra.mxu0 0
      %1127 = vmatprep.subr.bf16.mxu0 0
      %1128 = vmatpush1.bf16.msra.mxu0 0
      %1129 = vmatprep.subr.bf16.mxu0 0
      %1130 = vmatpush1.bf16.msra.mxu0 0
      %1131 = vmatprep.subr.bf16.mxu0 0
      %1132 = vmatpush1.bf16.msra.mxu0 0
      %1133 = vmatprep.subr.bf16.mxu0 0
      %1134 = vmatpush1.bf16.msra.mxu0 0
      %1135 = vmatprep.subr.bf16.mxu0 0
      %1136 = vmatpush1.bf16.msra.mxu0 0
      %1137 = vmatprep.subr.bf16.mxu0 0
      %1138 = vmatpush1.bf16.msra.mxu0 0
      %1139 = vmatprep.subr.bf16.mxu0 0
      %1140 = vmatpush1.bf16.msra.mxu0 0
      %1141 = vmatprep.subr.bf16.mxu0 0
      %1142 = vmatpush1.bf16.msra.mxu0 0
      %1143 = vmatprep.subr.bf16.mxu0 0
      %1144 = vmatpush1.bf16.msra.mxu0 0
      %1145 = vmatprep.subr.bf16.mxu0 0
      %1146 = vmatpush1.bf16.msra.mxu0 0
      %1147 = vmatprep.subr.bf16.mxu0 0
      %1148 = vmatpush1.bf16.msra.mxu0 0
      %1149 = vmatprep.mubr.bf16.mxu0 0
      %1150 = vmatmul.mubr.bf16.gmra.mrb[0].mxu0 %v1112
      %v1151 = vpop.f32.mrb[0].mxu0
      %v1152 = vadd.f32 0.0, %v1151
      %v1153 = vpop.f32.mrb[0].mxu0
      %v1154 = vpop.f32.mrb[0].mxu0
      %v1155 = vadd.f32 0.0, %v1154
      %v1156 = vpop.f32.mrb[0].mxu0
      %1157 = vdwg.mxu0
      %s1158 = scalar_lea.vmem %s221, 64
      %1159 = vst [vmem:[%s1158] sm:$0xff] %v1152
      %1160 = vst [vmem:[%s1158 + $0x8] sm:$0xff] %v1155
      %v1161 = vld [vmem:[%s1019] sm:$0xf]
      %v1162 = vld [vmem:[%s1019 + $0x4] sm:$0xf]
      %v1163 = vld [vmem:[%s301] sm:$0xf]
      %v1164 = vld [vmem:[%s301 + $0x4] sm:$0x3]
      %v1167 = vunpack.c.l.b16 %v1161
      %v1168 = vunpack.c.l.b16 %v1162
      %v1169 = vpack.c.b16 %v1168, %v1167
      %v1172 = vunpack.c.l.b16 %v1163
      %v1173 = vunpack.c.l.b16 %v1164
      %v1174 = vpack.c.b16 %v1173, %v1172
      %v1176 = vsel %vm244, %v1169, 0
      %v1179 = vsel %vm248, %v1174, 0
      %1181 = vmatprep.subr.bf16.mxu0 0
      %1182 = vmatpush1.bf16.msra.mxu0 %v1179
      %1183 = vmatprep.subr.bf16.mxu0 0
      %1184 = vmatpush1.bf16.msra.mxu0 0
      %1185 = vmatprep.subr.bf16.mxu0 0
      %1186 = vmatpush1.bf16.msra.mxu0 0
      %1187 = vmatprep.subr.bf16.mxu0 0
      %1188 = vmatpush1.bf16.msra.mxu0 0
      %1189 = vmatprep.subr.bf16.mxu0 0
      %1190 = vmatpush1.bf16.msra.mxu0 0
      %1191 = vmatprep.subr.bf16.mxu0 0
      %1192 = vmatpush1.bf16.msra.mxu0 0
      %1193 = vmatprep.subr.bf16.mxu0 0
      %1194 = vmatpush1.bf16.msra.mxu0 0
      %1195 = vmatprep.subr.bf16.mxu0 0
      %1196 = vmatpush1.bf16.msra.mxu0 0
      %1197 = vmatprep.subr.bf16.mxu0 0
      %1198 = vmatpush1.bf16.msra.mxu0 0
      %1199 = vmatprep.subr.bf16.mxu0 0
      %1200 = vmatpush1.bf16.msra.mxu0 0
      %1201 = vmatprep.subr.bf16.mxu0 0
      %1202 = vmatpush1.bf16.msra.mxu0 0
      %1203 = vmatprep.subr.bf16.mxu0 0
      %1204 = vmatpush1.bf16.msra.mxu0 0
      %1205 = vmatprep.subr.bf16.mxu0 0
      %1206 = vmatpush1.bf16.msra.mxu0 0
      %1207 = vmatprep.subr.bf16.mxu0 0
      %1208 = vmatpush1.bf16.msra.mxu0 0
      %1209 = vmatprep.subr.bf16.mxu0 0
      %1210 = vmatpush1.bf16.msra.mxu0 0
      %1211 = vmatprep.subr.bf16.mxu0 0
      %1212 = vmatpush1.bf16.msra.mxu0 0
      %1213 = vmatprep.mubr.bf16.mxu0 0
      %1214 = vmatmul.mubr.bf16.gmra.mrb[0].mxu0 %v1176
      %v1215 = vpop.f32.mrb[0].mxu0
      %v1216 = vadd.f32 0.0, %v1215
      %v1217 = vpop.f32.mrb[0].mxu0
      %v1218 = vpop.f32.mrb[0].mxu0
      %v1219 = vadd.f32 0.0, %v1218
      %v1220 = vpop.f32.mrb[0].mxu0
      %1221 = vdwg.mxu0
      %v1222 = vld [vmem:[%s1158] sm:$0xff]
      %v1223 = vld [vmem:[%s1158 + $0x8] sm:$0xff]
      %v1224 = vadd.f32 %v1222, %v1216
      %v1225 = vadd.f32 %v1223, %v1219
      %1226 = vst [vmem:[%s1158] sm:$0xff] %v1224
      %1227 = vst [vmem:[%s1158 + $0x8] sm:$0xff] %v1225
      %s1228 = sadd.s32 %s224, 6
      %s1229 = smul.u32 %s1228, 2
      %s1230 = smul.addr %s1229, 4
      %s1231 = scalar_lea.vmem %s211, %s1230
      %v1232 = vld [vmem:[%s1231] sm:$0xf]
      %v1233 = vld [vmem:[%s1231 + $0x4] sm:$0xf]
      %v1234 = vld [vmem:[%s373] sm:$0xf]
      %v1235 = vld [vmem:[%s373 + $0x4] sm:$0x3]
      %v1238 = vunpack.c.l.b16 %v1232
      %v1239 = vunpack.c.l.b16 %v1233
      %v1240 = vpack.c.b16 %v1239, %v1238
      %v1243 = vunpack.c.l.b16 %v1234
      %v1244 = vunpack.c.l.b16 %v1235
      %v1245 = vpack.c.b16 %v1244, %v1243
      %v1247 = vsel %vm244, %v1240, 0
      %v1250 = vsel %vm248, %v1245, 0
      %1252 = vmatprep.subr.bf16.mxu0 0
      %1253 = vmatpush1.bf16.msra.mxu0 %v1250
      %1254 = vmatprep.subr.bf16.mxu0 0
      %1255 = vmatpush1.bf16.msra.mxu0 0
      %1256 = vmatprep.subr.bf16.mxu0 0
      %1257 = vmatpush1.bf16.msra.mxu0 0
      %1258 = vmatprep.subr.bf16.mxu0 0
      %1259 = vmatpush1.bf16.msra.mxu0 0
      %1260 = vmatprep.subr.bf16.mxu0 0
      %1261 = vmatpush1.bf16.msra.mxu0 0
      %1262 = vmatprep.subr.bf16.mxu0 0
      %1263 = vmatpush1.bf16.msra.mxu0 0
      %1264 = vmatprep.subr.bf16.mxu0 0
      %1265 = vmatpush1.bf16.msra.mxu0 0
      %1266 = vmatprep.subr.bf16.mxu0 0
      %1267 = vmatpush1.bf16.msra.mxu0 0
      %1268 = vmatprep.subr.bf16.mxu0 0
      %1269 = vmatpush1.bf16.msra.mxu0 0
      %1270 = vmatprep.subr.bf16.mxu0 0
      %1271 = vmatpush1.bf16.msra.mxu0 0
      %1272 = vmatprep.subr.bf16.mxu0 0
      %1273 = vmatpush1.bf16.msra.mxu0 0
      %1274 = vmatprep.subr.bf16.mxu0 0
      %1275 = vmatpush1.bf16.msra.mxu0 0
      %1276 = vmatprep.subr.bf16.mxu0 0
      %1277 = vmatpush1.bf16.msra.mxu0 0
      %1278 = vmatprep.subr.bf16.mxu0 0
      %1279 = vmatpush1.bf16.msra.mxu0 0
      %1280 = vmatprep.subr.bf16.mxu0 0
      %1281 = vmatpush1.bf16.msra.mxu0 0
      %1282 = vmatprep.subr.bf16.mxu0 0
      %1283 = vmatpush1.bf16.msra.mxu0 0
      %1284 = vmatprep.mubr.bf16.mxu0 0
      %1285 = vmatmul.mubr.bf16.gmra.mrb[0].mxu0 %v1247
      %v1286 = vpop.f32.mrb[0].mxu0
      %v1287 = vadd.f32 0.0, %v1286
      %v1288 = vpop.f32.mrb[0].mxu0
      %v1289 = vpop.f32.mrb[0].mxu0
      %v1290 = vadd.f32 0.0, %v1289
      %v1291 = vpop.f32.mrb[0].mxu0
      %1292 = vdwg.mxu0
      %v1293 = vld [vmem:[%s1158] sm:$0xff]
      %v1294 = vld [vmem:[%s1158 + $0x8] sm:$0xff]
      %v1295 = vadd.f32 %v1293, %v1287
      %v1296 = vadd.f32 %v1294, %v1290
      %1297 = vst [vmem:[%s1158] sm:$0xff] %v1295
      %1298 = vst [vmem:[%s1158 + $0x8] sm:$0xff] %v1296
      %v1299 = vld [vmem:[%s1158] sm:$0xff]
      %v1300 = vld [vmem:[%s1158 + $0x8] sm:$0xff]
      %v1301 = vmul.f32 %v1299, %v445
      %v1302 = vmul.f32 %v1300, %v445
      %v1303 = vadd.f32 %v1301, %v453
      %v1304 = vadd.f32 %v1302, %v453
      %v1305 = vmax.f32 %v1303, 0.0
      %v1306 = vmax.f32 %v1304, 0.0
      %1307 = vst [vmem:[%s1158] sm:$0xff] %v1305
      %1308 = vst [vmem:[%s1158 + $0x8] sm:$0xff] %v1306
      %v1309 = vld [vmem:[%s1019] sm:$0xf]
      %v1310 = vld [vmem:[%s1019 + $0x4] sm:$0xf]
      %v1311 = vld [vmem:[%s1] sm:$0xf]
      %v1312 = vld [vmem:[%s1 + $0x4] sm:$0x3]
      %v1315 = vunpack.c.l.b16 %v1309
      %v1316 = vunpack.c.l.b16 %v1310
      %v1317 = vpack.c.b16 %v1316, %v1315
      %v1320 = vunpack.c.l.b16 %v1311
      %v1321 = vunpack.c.l.b16 %v1312
      %v1322 = vpack.c.b16 %v1321, %v1320
      %v1324 = vsel %vm244, %v1317, 0
      %v1327 = vsel %vm248, %v1322, 0
      %1329 = vmatprep.subr.bf16.mxu0 0
      %1330 = vmatpush1.bf16.msra.mxu0 %v1327
      %1331 = vmatprep.subr.bf16.mxu0 0
      %1332 = vmatpush1.bf16.msra.mxu0 0
      %1333 = vmatprep.subr.bf16.mxu0 0
      %1334 = vmatpush1.bf16.msra.mxu0 0
      %1335 = vmatprep.subr.bf16.mxu0 0
      %1336 = vmatpush1.bf16.msra.mxu0 0
      %1337 = vmatprep.subr.bf16.mxu0 0
      %1338 = vmatpush1.bf16.msra.mxu0 0
      %1339 = vmatprep.subr.bf16.mxu0 0
      %1340 = vmatpush1.bf16.msra.mxu0 0
      %1341 = vmatprep.subr.bf16.mxu0 0
      %1342 = vmatpush1.bf16.msra.mxu0 0
      %1343 = vmatprep.subr.bf16.mxu0 0
      %1344 = vmatpush1.bf16.msra.mxu0 0
      %1345 = vmatprep.subr.bf16.mxu0 0
      %1346 = vmatpush1.bf16.msra.mxu0 0
      %1347 = vmatprep.subr.bf16.mxu0 0
      %1348 = vmatpush1.bf16.msra.mxu0 0
      %1349 = vmatprep.subr.bf16.mxu0 0
      %1350 = vmatpush1.bf16.msra.mxu0 0
      %1351 = vmatprep.subr.bf16.mxu0 0
      %1352 = vmatpush1.bf16.msra.mxu0 0
      %1353 = vmatprep.subr.bf16.mxu0 0
      %1354 = vmatpush1.bf16.msra.mxu0 0
      %1355 = vmatprep.subr.bf16.mxu0 0
      %1356 = vmatpush1.bf16.msra.mxu0 0
      %1357 = vmatprep.subr.bf16.mxu0 0
      %1358 = vmatpush1.bf16.msra.mxu0 0
      %1359 = vmatprep.subr.bf16.mxu0 0
      %1360 = vmatpush1.bf16.msra.mxu0 0
      %1361 = vmatprep.mubr.bf16.mxu0 0
      %1362 = vmatmul.mubr.bf16.gmra.mrb[0].mxu0 %v1324
      %v1363 = vpop.f32.mrb[0].mxu0
      %v1364 = vadd.f32 0.0, %v1363
      %v1365 = vpop.f32.mrb[0].mxu0
      %v1366 = vpop.f32.mrb[0].mxu0
      %v1367 = vadd.f32 0.0, %v1366
      %v1368 = vpop.f32.mrb[0].mxu0
      %1369 = vdwg.mxu0
      %s1370 = scalar_lea.vmem %s221, 80
      %1371 = vst [vmem:[%s1370] sm:$0xff] %v1364
      %1372 = vst [vmem:[%s1370 + $0x8] sm:$0xff] %v1367
      %v1373 = vld [vmem:[%s1231] sm:$0xf]
      %v1374 = vld [vmem:[%s1231 + $0x4] sm:$0xf]
      %v1375 = vld [vmem:[%s301] sm:$0xf]
      %v1376 = vld [vmem:[%s301 + $0x4] sm:$0x3]
      %v1379 = vunpack.c.l.b16 %v1373
      %v1380 = vunpack.c.l.b16 %v1374
      %v1381 = vpack.c.b16 %v1380, %v1379
      %v1384 = vunpack.c.l.b16 %v1375
      %v1385 = vunpack.c.l.b16 %v1376
      %v1386 = vpack.c.b16 %v1385, %v1384
      %v1388 = vsel %vm244, %v1381, 0
      %v1391 = vsel %vm248, %v1386, 0
      %1393 = vmatprep.subr.bf16.mxu0 0
      %1394 = vmatpush1.bf16.msra.mxu0 %v1391
      %1395 = vmatprep.subr.bf16.mxu0 0
      %1396 = vmatpush1.bf16.msra.mxu0 0
      %1397 = vmatprep.subr.bf16.mxu0 0
      %1398 = vmatpush1.bf16.msra.mxu0 0
      %1399 = vmatprep.subr.bf16.mxu0 0
      %1400 = vmatpush1.bf16.msra.mxu0 0
      %1401 = vmatprep.subr.bf16.mxu0 0
      %1402 = vmatpush1.bf16.msra.mxu0 0
      %1403 = vmatprep.subr.bf16.mxu0 0
      %1404 = vmatpush1.bf16.msra.mxu0 0
      %1405 = vmatprep.subr.bf16.mxu0 0
      %1406 = vmatpush1.bf16.msra.mxu0 0
      %1407 = vmatprep.subr.bf16.mxu0 0
      %1408 = vmatpush1.bf16.msra.mxu0 0
      %1409 = vmatprep.subr.bf16.mxu0 0
      %1410 = vmatpush1.bf16.msra.mxu0 0
      %1411 = vmatprep.subr.bf16.mxu0 0
      %1412 = vmatpush1.bf16.msra.mxu0 0
      %1413 = vmatprep.subr.bf16.mxu0 0
      %1414 = vmatpush1.bf16.msra.mxu0 0
      %1415 = vmatprep.subr.bf16.mxu0 0
      %1416 = vmatpush1.bf16.msra.mxu0 0
      %1417 = vmatprep.subr.bf16.mxu0 0
      %1418 = vmatpush1.bf16.msra.mxu0 0
      %1419 = vmatprep.subr.bf16.mxu0 0
      %1420 = vmatpush1.bf16.msra.mxu0 0
      %1421 = vmatprep.subr.bf16.mxu0 0
      %1422 = vmatpush1.bf16.msra.mxu0 0
      %1423 = vmatprep.subr.bf16.mxu0 0
      %1424 = vmatpush1.bf16.msra.mxu0 0
      %1425 = vmatprep.mubr.bf16.mxu0 0
      %1426 = vmatmul.mubr.bf16.gmra.mrb[0].mxu0 %v1388
      %v1427 = vpop.f32.mrb[0].mxu0
      %v1428 = vadd.f32 0.0, %v1427
      %v1429 = vpop.f32.mrb[0].mxu0
      %v1430 = vpop.f32.mrb[0].mxu0
      %v1431 = vadd.f32 0.0, %v1430
      %v1432 = vpop.f32.mrb[0].mxu0
      %1433 = vdwg.mxu0
      %v1434 = vld [vmem:[%s1370] sm:$0xff]
      %v1435 = vld [vmem:[%s1370 + $0x8] sm:$0xff]
      %v1436 = vadd.f32 %v1434, %v1428
      %v1437 = vadd.f32 %v1435, %v1431
      %1438 = vst [vmem:[%s1370] sm:$0xff] %v1436
      %1439 = vst [vmem:[%s1370 + $0x8] sm:$0xff] %v1437
      %s1440 = sadd.s32 %s224, 7
      %s1441 = smul.u32 %s1440, 2
      %s1442 = smul.addr %s1441, 4
      %s1443 = scalar_lea.vmem %s211, %s1442
      %v1444 = vld [vmem:[%s1443] sm:$0xf]
      %v1445 = vld [vmem:[%s1443 + $0x4] sm:$0xf]
      %v1446 = vld [vmem:[%s373] sm:$0xf]
      %v1447 = vld [vmem:[%s373 + $0x4] sm:$0x3]
      %v1450 = vunpack.c.l.b16 %v1444
      %v1451 = vunpack.c.l.b16 %v1445
      %v1452 = vpack.c.b16 %v1451, %v1450
      %v1455 = vunpack.c.l.b16 %v1446
      %v1456 = vunpack.c.l.b16 %v1447
      %v1457 = vpack.c.b16 %v1456, %v1455
      %v1459 = vsel %vm244, %v1452, 0
      %v1462 = vsel %vm248, %v1457, 0
      %1464 = vmatprep.subr.bf16.mxu0 0
      %1465 = vmatpush1.bf16.msra.mxu0 %v1462
      %1466 = vmatprep.subr.bf16.mxu0 0
      %1467 = vmatpush1.bf16.msra.mxu0 0
      %1468 = vmatprep.subr.bf16.mxu0 0
      %1469 = vmatpush1.bf16.msra.mxu0 0
      %1470 = vmatprep.subr.bf16.mxu0 0
      %1471 = vmatpush1.bf16.msra.mxu0 0
      %1472 = vmatprep.subr.bf16.mxu0 0
      %1473 = vmatpush1.bf16.msra.mxu0 0
      %1474 = vmatprep.subr.bf16.mxu0 0
      %1475 = vmatpush1.bf16.msra.mxu0 0
      %1476 = vmatprep.subr.bf16.mxu0 0
      %1477 = vmatpush1.bf16.msra.mxu0 0
      %1478 = vmatprep.subr.bf16.mxu0 0
      %1479 = vmatpush1.bf16.msra.mxu0 0
      %1480 = vmatprep.subr.bf16.mxu0 0
      %1481 = vmatpush1.bf16.msra.mxu0 0
      %1482 = vmatprep.subr.bf16.mxu0 0
      %1483 = vmatpush1.bf16.msra.mxu0 0
      %1484 = vmatprep.subr.bf16.mxu0 0
      %1485 = vmatpush1.bf16.msra.mxu0 0
      %1486 = vmatprep.subr.bf16.mxu0 0
      %1487 = vmatpush1.bf16.msra.mxu0 0
      %1488 = vmatprep.subr.bf16.mxu0 0
      %1489 = vmatpush1.bf16.msra.mxu0 0
      %1490 = vmatprep.subr.bf16.mxu0 0
      %1491 = vmatpush1.bf16.msra.mxu0 0
      %1492 = vmatprep.subr.bf16.mxu0 0
      %1493 = vmatpush1.bf16.msra.mxu0 0
      %1494 = vmatprep.subr.bf16.mxu0 0
      %1495 = vmatpush1.bf16.msra.mxu0 0
      %1496 = vmatprep.mubr.bf16.mxu0 0
      %1497 = vmatmul.mubr.bf16.gmra.mrb[0].mxu0 %v1459
      %v1498 = vpop.f32.mrb[0].mxu0
      %v1499 = vadd.f32 0.0, %v1498
      %v1500 = vpop.f32.mrb[0].mxu0
      %v1501 = vpop.f32.mrb[0].mxu0
      %v1502 = vadd.f32 0.0, %v1501
      %v1503 = vpop.f32.mrb[0].mxu0
      %1504 = vdwg.mxu0
      %v1505 = vld [vmem:[%s1370] sm:$0xff]
      %v1506 = vld [vmem:[%s1370 + $0x8] sm:$0xff]
      %v1507 = vadd.f32 %v1505, %v1499
      %v1508 = vadd.f32 %v1506, %v1502
      %1509 = vst [vmem:[%s1370] sm:$0xff] %v1507
      %1510 = vst [vmem:[%s1370 + $0x8] sm:$0xff] %v1508
      %v1511 = vld [vmem:[%s1370] sm:$0xff]
      %v1512 = vld [vmem:[%s1370 + $0x8] sm:$0xff]
      %v1513 = vmul.f32 %v1511, %v445
      %v1514 = vmul.f32 %v1512, %v445
      %v1515 = vadd.f32 %v1513, %v453
      %v1516 = vadd.f32 %v1514, %v453
      %v1517 = vmax.f32 %v1515, 0.0
      %v1518 = vmax.f32 %v1516, 0.0
      %1519 = vst [vmem:[%s1370] sm:$0xff] %v1517
      %1520 = vst [vmem:[%s1370 + $0x8] sm:$0xff] %v1518
      %v1521 = vld [vmem:[%s1231] sm:$0xf]
      %v1522 = vld [vmem:[%s1231 + $0x4] sm:$0xf]
      %v1523 = vld [vmem:[%s1] sm:$0xf]
      %v1524 = vld [vmem:[%s1 + $0x4] sm:$0x3]
      %v1527 = vunpack.c.l.b16 %v1521
      %v1528 = vunpack.c.l.b16 %v1522
      %v1529 = vpack.c.b16 %v1528, %v1527
      %v1532 = vunpack.c.l.b16 %v1523
      %v1533 = vunpack.c.l.b16 %v1524
      %v1534 = vpack.c.b16 %v1533, %v1532
      %v1536 = vsel %vm244, %v1529, 0
      %v1539 = vsel %vm248, %v1534, 0
      %1541 = vmatprep.subr.bf16.mxu0 0
      %1542 = vmatpush1.bf16.msra.mxu0 %v1539
      %1543 = vmatprep.subr.bf16.mxu0 0
      %1544 = vmatpush1.bf16.msra.mxu0 0
      %1545 = vmatprep.subr.bf16.mxu0 0
      %1546 = vmatpush1.bf16.msra.mxu0 0
      %1547 = vmatprep.subr.bf16.mxu0 0
      %1548 = vmatpush1.bf16.msra.mxu0 0
      %1549 = vmatprep.subr.bf16.mxu0 0
      %1550 = vmatpush1.bf16.msra.mxu0 0
      %1551 = vmatprep.subr.bf16.mxu0 0
      %1552 = vmatpush1.bf16.msra.mxu0 0
      %1553 = vmatprep.subr.bf16.mxu0 0
      %1554 = vmatpush1.bf16.msra.mxu0 0
      %1555 = vmatprep.subr.bf16.mxu0 0
      %1556 = vmatpush1.bf16.msra.mxu0 0
      %1557 = vmatprep.subr.bf16.mxu0 0
      %1558 = vmatpush1.bf16.msra.mxu0 0
      %1559 = vmatprep.subr.bf16.mxu0 0
      %1560 = vmatpush1.bf16.msra.mxu0 0
      %1561 = vmatprep.subr.bf16.mxu0 0
      %1562 = vmatpush1.bf16.msra.mxu0 0
      %1563 = vmatprep.subr.bf16.mxu0 0
      %1564 = vmatpush1.bf16.msra.mxu0 0
      %1565 = vmatprep.subr.bf16.mxu0 0
      %1566 = vmatpush1.bf16.msra.mxu0 0
      %1567 = vmatprep.subr.bf16.mxu0 0
      %1568 = vmatpush1.bf16.msra.mxu0 0
      %1569 = vmatprep.subr.bf16.mxu0 0
      %1570 = vmatpush1.bf16.msra.mxu0 0
      %1571 = vmatprep.subr.bf16.mxu0 0
      %1572 = vmatpush1.bf16.msra.mxu0 0
      %1573 = vmatprep.mubr.bf16.mxu0 0
      %1574 = vmatmul.mubr.bf16.gmra.mrb[0].mxu0 %v1536
      %v1575 = vpop.f32.mrb[0].mxu0
      %v1576 = vadd.f32 0.0, %v1575
      %v1577 = vpop.f32.mrb[0].mxu0
      %v1578 = vpop.f32.mrb[0].mxu0
      %v1579 = vadd.f32 0.0, %v1578
      %v1580 = vpop.f32.mrb[0].mxu0
      %1581 = vdwg.mxu0
      %s1582 = scalar_lea.vmem %s221, 96
      %1583 = vst [vmem:[%s1582] sm:$0xff] %v1576
      %1584 = vst [vmem:[%s1582 + $0x8] sm:$0xff] %v1579
      %v1585 = vld [vmem:[%s1443] sm:$0xf]
      %v1586 = vld [vmem:[%s1443 + $0x4] sm:$0xf]
      %v1587 = vld [vmem:[%s301] sm:$0xf]
      %v1588 = vld [vmem:[%s301 + $0x4] sm:$0x3]
      %v1591 = vunpack.c.l.b16 %v1585
      %v1592 = vunpack.c.l.b16 %v1586
      %v1593 = vpack.c.b16 %v1592, %v1591
      %v1596 = vunpack.c.l.b16 %v1587
      %v1597 = vunpack.c.l.b16 %v1588
      %v1598 = vpack.c.b16 %v1597, %v1596
      %v1600 = vsel %vm244, %v1593, 0
      %v1603 = vsel %vm248, %v1598, 0
      %1605 = vmatprep.subr.bf16.mxu0 0
      %1606 = vmatpush1.bf16.msra.mxu0 %v1603
      %1607 = vmatprep.subr.bf16.mxu0 0
      %1608 = vmatpush1.bf16.msra.mxu0 0
      %1609 = vmatprep.subr.bf16.mxu0 0
      %1610 = vmatpush1.bf16.msra.mxu0 0
      %1611 = vmatprep.subr.bf16.mxu0 0
      %1612 = vmatpush1.bf16.msra.mxu0 0
      %1613 = vmatprep.subr.bf16.mxu0 0
      %1614 = vmatpush1.bf16.msra.mxu0 0
      %1615 = vmatprep.subr.bf16.mxu0 0
      %1616 = vmatpush1.bf16.msra.mxu0 0
      %1617 = vmatprep.subr.bf16.mxu0 0
      %1618 = vmatpush1.bf16.msra.mxu0 0
      %1619 = vmatprep.subr.bf16.mxu0 0
      %1620 = vmatpush1.bf16.msra.mxu0 0
      %1621 = vmatprep.subr.bf16.mxu0 0
      %1622 = vmatpush1.bf16.msra.mxu0 0
      %1623 = vmatprep.subr.bf16.mxu0 0
      %1624 = vmatpush1.bf16.msra.mxu0 0
      %1625 = vmatprep.subr.bf16.mxu0 0
      %1626 = vmatpush1.bf16.msra.mxu0 0
      %1627 = vmatprep.subr.bf16.mxu0 0
      %1628 = vmatpush1.bf16.msra.mxu0 0
      %1629 = vmatprep.subr.bf16.mxu0 0
      %1630 = vmatpush1.bf16.msra.mxu0 0
      %1631 = vmatprep.subr.bf16.mxu0 0
      %1632 = vmatpush1.bf16.msra.mxu0 0
      %1633 = vmatprep.subr.bf16.mxu0 0
      %1634 = vmatpush1.bf16.msra.mxu0 0
      %1635 = vmatprep.subr.bf16.mxu0 0
      %1636 = vmatpush1.bf16.msra.mxu0 0
      %1637 = vmatprep.mubr.bf16.mxu0 0
      %1638 = vmatmul.mubr.bf16.gmra.mrb[0].mxu0 %v1600
      %v1639 = vpop.f32.mrb[0].mxu0
      %v1640 = vadd.f32 0.0, %v1639
      %v1641 = vpop.f32.mrb[0].mxu0
      %v1642 = vpop.f32.mrb[0].mxu0
      %v1643 = vadd.f32 0.0, %v1642
      %v1644 = vpop.f32.mrb[0].mxu0
      %1645 = vdwg.mxu0
      %v1646 = vld [vmem:[%s1582] sm:$0xff]
      %v1647 = vld [vmem:[%s1582 + $0x8] sm:$0xff]
      %v1648 = vadd.f32 %v1646, %v1640
      %v1649 = vadd.f32 %v1647, %v1643
      %1650 = vst [vmem:[%s1582] sm:$0xff] %v1648
      %1651 = vst [vmem:[%s1582 + $0x8] sm:$0xff] %v1649
      %s1652 = sadd.s32 %s224, 8
      %s1653 = smul.u32 %s1652, 2
      %s1654 = smul.addr %s1653, 4
      %s1655 = scalar_lea.vmem %s211, %s1654
      %v1656 = vld [vmem:[%s1655] sm:$0xf]
      %v1657 = vld [vmem:[%s1655 + $0x4] sm:$0xf]
      %v1658 = vld [vmem:[%s373] sm:$0xf]
      %v1659 = vld [vmem:[%s373 + $0x4] sm:$0x3]
      %v1662 = vunpack.c.l.b16 %v1656
      %v1663 = vunpack.c.l.b16 %v1657
      %v1664 = vpack.c.b16 %v1663, %v1662
      %v1667 = vunpack.c.l.b16 %v1658
      %v1668 = vunpack.c.l.b16 %v1659
      %v1669 = vpack.c.b16 %v1668, %v1667
      %v1671 = vsel %vm244, %v1664, 0
      %v1674 = vsel %vm248, %v1669, 0
      %1676 = vmatprep.subr.bf16.mxu0 0
      %1677 = vmatpush1.bf16.msra.mxu0 %v1674
      %1678 = vmatprep.subr.bf16.mxu0 0
      %1679 = vmatpush1.bf16.msra.mxu0 0
      %1680 = vmatprep.subr.bf16.mxu0 0
      %1681 = vmatpush1.bf16.msra.mxu0 0
      %1682 = vmatprep.subr.bf16.mxu0 0
      %1683 = vmatpush1.bf16.msra.mxu0 0
      %1684 = vmatprep.subr.bf16.mxu0 0
      %1685 = vmatpush1.bf16.msra.mxu0 0
      %1686 = vmatprep.subr.bf16.mxu0 0
      %1687 = vmatpush1.bf16.msra.mxu0 0
      %1688 = vmatprep.subr.bf16.mxu0 0
      %1689 = vmatpush1.bf16.msra.mxu0 0
      %1690 = vmatprep.subr.bf16.mxu0 0
      %1691 = vmatpush1.bf16.msra.mxu0 0
      %1692 = vmatprep.subr.bf16.mxu0 0
      %1693 = vmatpush1.bf16.msra.mxu0 0
      %1694 = vmatprep.subr.bf16.mxu0 0
      %1695 = vmatpush1.bf16.msra.mxu0 0
      %1696 = vmatprep.subr.bf16.mxu0 0
      %1697 = vmatpush1.bf16.msra.mxu0 0
      %1698 = vmatprep.subr.bf16.mxu0 0
      %1699 = vmatpush1.bf16.msra.mxu0 0
      %1700 = vmatprep.subr.bf16.mxu0 0
      %1701 = vmatpush1.bf16.msra.mxu0 0
      %1702 = vmatprep.subr.bf16.mxu0 0
      %1703 = vmatpush1.bf16.msra.mxu0 0
      %1704 = vmatprep.subr.bf16.mxu0 0
      %1705 = vmatpush1.bf16.msra.mxu0 0
      %1706 = vmatprep.subr.bf16.mxu0 0
      %1707 = vmatpush1.bf16.msra.mxu0 0
      %1708 = vmatprep.mubr.bf16.mxu0 0
      %1709 = vmatmul.mubr.bf16.gmra.mrb[0].mxu0 %v1671
      %v1710 = vpop.f32.mrb[0].mxu0
      %v1711 = vadd.f32 0.0, %v1710
      %v1712 = vpop.f32.mrb[0].mxu0
      %v1713 = vpop.f32.mrb[0].mxu0
      %v1714 = vadd.f32 0.0, %v1713
      %v1715 = vpop.f32.mrb[0].mxu0
      %1716 = vdwg.mxu0
      %v1717 = vld [vmem:[%s1582] sm:$0xff]
      %v1718 = vld [vmem:[%s1582 + $0x8] sm:$0xff]
      %v1719 = vadd.f32 %v1717, %v1711
      %v1720 = vadd.f32 %v1718, %v1714
      %1721 = vst [vmem:[%s1582] sm:$0xff] %v1719
      %1722 = vst [vmem:[%s1582 + $0x8] sm:$0xff] %v1720
      %v1723 = vld [vmem:[%s1582] sm:$0xff]
      %v1724 = vld [vmem:[%s1582 + $0x8] sm:$0xff]
      %v1725 = vmul.f32 %v1723, %v445
      %v1726 = vmul.f32 %v1724, %v445
      %v1727 = vadd.f32 %v1725, %v453
      %v1728 = vadd.f32 %v1726, %v453
      %v1729 = vmax.f32 %v1727, 0.0
      %v1730 = vmax.f32 %v1728, 0.0
      %1731 = vst [vmem:[%s1582] sm:$0xff] %v1729
      %1732 = vst [vmem:[%s1582 + $0x8] sm:$0xff] %v1730
      %v1733 = vld [vmem:[%s1443] sm:$0xf]
      %v1734 = vld [vmem:[%s1443 + $0x4] sm:$0xf]
      %v1735 = vld [vmem:[%s1] sm:$0xf]
      %v1736 = vld [vmem:[%s1 + $0x4] sm:$0x3]
      %v1739 = vunpack.c.l.b16 %v1733
      %v1740 = vunpack.c.l.b16 %v1734
      %v1741 = vpack.c.b16 %v1740, %v1739
      %v1744 = vunpack.c.l.b16 %v1735
      %v1745 = vunpack.c.l.b16 %v1736
      %v1746 = vpack.c.b16 %v1745, %v1744
      %v1748 = vsel %vm244, %v1741, 0
      %v1751 = vsel %vm248, %v1746, 0
      %1753 = vmatprep.subr.bf16.mxu0 0
      %1754 = vmatpush1.bf16.msra.mxu0 %v1751
      %1755 = vmatprep.subr.bf16.mxu0 0
      %1756 = vmatpush1.bf16.msra.mxu0 0
      %1757 = vmatprep.subr.bf16.mxu0 0
      %1758 = vmatpush1.bf16.msra.mxu0 0
      %1759 = vmatprep.subr.bf16.mxu0 0
      %1760 = vmatpush1.bf16.msra.mxu0 0
      %1761 = vmatprep.subr.bf16.mxu0 0
      %1762 = vmatpush1.bf16.msra.mxu0 0
      %1763 = vmatprep.subr.bf16.mxu0 0
      %1764 = vmatpush1.bf16.msra.mxu0 0
      %1765 = vmatprep.subr.bf16.mxu0 0
      %1766 = vmatpush1.bf16.msra.mxu0 0
      %1767 = vmatprep.subr.bf16.mxu0 0
      %1768 = vmatpush1.bf16.msra.mxu0 0
      %1769 = vmatprep.subr.bf16.mxu0 0
      %1770 = vmatpush1.bf16.msra.mxu0 0
      %1771 = vmatprep.subr.bf16.mxu0 0
      %1772 = vmatpush1.bf16.msra.mxu0 0
      %1773 = vmatprep.subr.bf16.mxu0 0
      %1774 = vmatpush1.bf16.msra.mxu0 0
      %1775 = vmatprep.subr.bf16.mxu0 0
      %1776 = vmatpush1.bf16.msra.mxu0 0
      %1777 = vmatprep.subr.bf16.mxu0 0
      %1778 = vmatpush1.bf16.msra.mxu0 0
      %1779 = vmatprep.subr.bf16.mxu0 0
      %1780 = vmatpush1.bf16.msra.mxu0 0
      %1781 = vmatprep.subr.bf16.mxu0 0
      %1782 = vmatpush1.bf16.msra.mxu0 0
      %1783 = vmatprep.subr.bf16.mxu0 0
      %1784 = vmatpush1.bf16.msra.mxu0 0
      %1785 = vmatprep.mubr.bf16.mxu0 0
      %1786 = vmatmul.mubr.bf16.gmra.mrb[0].mxu0 %v1748
      %v1787 = vpop.f32.mrb[0].mxu0
      %v1788 = vadd.f32 0.0, %v1787
      %v1789 = vpop.f32.mrb[0].mxu0
      %v1790 = vpop.f32.mrb[0].mxu0
      %v1791 = vadd.f32 0.0, %v1790
      %v1792 = vpop.f32.mrb[0].mxu0
      %1793 = vdwg.mxu0
      %s1794 = scalar_lea.vmem %s221, 112
      %1795 = vst [vmem:[%s1794] sm:$0xff] %v1788
      %1796 = vst [vmem:[%s1794 + $0x8] sm:$0xff] %v1791
      %v1797 = vld [vmem:[%s1655] sm:$0xf]
      %v1798 = vld [vmem:[%s1655 + $0x4] sm:$0xf]
      %v1799 = vld [vmem:[%s301] sm:$0xf]
      %v1800 = vld [vmem:[%s301 + $0x4] sm:$0x3]
      %v1803 = vunpack.c.l.b16 %v1797
      %v1804 = vunpack.c.l.b16 %v1798
      %v1805 = vpack.c.b16 %v1804, %v1803
      %v1808 = vunpack.c.l.b16 %v1799
      %v1809 = vunpack.c.l.b16 %v1800
      %v1810 = vpack.c.b16 %v1809, %v1808
      %v1812 = vsel %vm244, %v1805, 0
      %v1815 = vsel %vm248, %v1810, 0
      %1817 = vmatprep.subr.bf16.mxu0 0
      %1818 = vmatpush1.bf16.msra.mxu0 %v1815
      %1819 = vmatprep.subr.bf16.mxu0 0
      %1820 = vmatpush1.bf16.msra.mxu0 0
      %1821 = vmatprep.subr.bf16.mxu0 0
      %1822 = vmatpush1.bf16.msra.mxu0 0
      %1823 = vmatprep.subr.bf16.mxu0 0
      %1824 = vmatpush1.bf16.msra.mxu0 0
      %1825 = vmatprep.subr.bf16.mxu0 0
      %1826 = vmatpush1.bf16.msra.mxu0 0
      %1827 = vmatprep.subr.bf16.mxu0 0
      %1828 = vmatpush1.bf16.msra.mxu0 0
      %1829 = vmatprep.subr.bf16.mxu0 0
      %1830 = vmatpush1.bf16.msra.mxu0 0
      %1831 = vmatprep.subr.bf16.mxu0 0
      %1832 = vmatpush1.bf16.msra.mxu0 0
      %1833 = vmatprep.subr.bf16.mxu0 0
      %1834 = vmatpush1.bf16.msra.mxu0 0
      %1835 = vmatprep.subr.bf16.mxu0 0
      %1836 = vmatpush1.bf16.msra.mxu0 0
      %1837 = vmatprep.subr.bf16.mxu0 0
      %1838 = vmatpush1.bf16.msra.mxu0 0
      %1839 = vmatprep.subr.bf16.mxu0 0
      %1840 = vmatpush1.bf16.msra.mxu0 0
      %1841 = vmatprep.subr.bf16.mxu0 0
      %1842 = vmatpush1.bf16.msra.mxu0 0
      %1843 = vmatprep.subr.bf16.mxu0 0
      %1844 = vmatpush1.bf16.msra.mxu0 0
      %1845 = vmatprep.subr.bf16.mxu0 0
      %1846 = vmatpush1.bf16.msra.mxu0 0
      %1847 = vmatprep.subr.bf16.mxu0 0
      %1848 = vmatpush1.bf16.msra.mxu0 0
      %1849 = vmatprep.mubr.bf16.mxu0 0
      %1850 = vmatmul.mubr.bf16.gmra.mrb[0].mxu0 %v1812
      %v1851 = vpop.f32.mrb[0].mxu0
      %v1852 = vadd.f32 0.0, %v1851
      %v1853 = vpop.f32.mrb[0].mxu0
      %v1854 = vpop.f32.mrb[0].mxu0
      %v1855 = vadd.f32 0.0, %v1854
      %v1856 = vpop.f32.mrb[0].mxu0
      %1857 = vdwg.mxu0
      %v1858 = vld [vmem:[%s1794] sm:$0xff]
      %v1859 = vld [vmem:[%s1794 + $0x8] sm:$0xff]
      %v1860 = vadd.f32 %v1858, %v1852
      %v1861 = vadd.f32 %v1859, %v1855
      %1862 = vst [vmem:[%s1794] sm:$0xff] %v1860
      %1863 = vst [vmem:[%s1794 + $0x8] sm:$0xff] %v1861
      %s1864 = sadd.s32 %s224, 9
      %s1865 = smul.u32 %s1864, 2
      %s1866 = smul.addr %s1865, 4
      %s1867 = scalar_lea.vmem %s211, %s1866
      %v1868 = vld [vmem:[%s1867] sm:$0xf]
      %v1869 = vld [vmem:[%s1867 + $0x4] sm:$0xf]
      %v1870 = vld [vmem:[%s373] sm:$0xf]
      %v1871 = vld [vmem:[%s373 + $0x4] sm:$0x3]
      %v1874 = vunpack.c.l.b16 %v1868
      %v1875 = vunpack.c.l.b16 %v1869
      %v1876 = vpack.c.b16 %v1875, %v1874
      %v1879 = vunpack.c.l.b16 %v1870
      %v1880 = vunpack.c.l.b16 %v1871
      %v1881 = vpack.c.b16 %v1880, %v1879
      %v1883 = vsel %vm244, %v1876, 0
      %v1886 = vsel %vm248, %v1881, 0
      %1888 = vmatprep.subr.bf16.mxu0 0
      %1889 = vmatpush1.bf16.msra.mxu0 %v1886
      %1890 = vmatprep.subr.bf16.mxu0 0
      %1891 = vmatpush1.bf16.msra.mxu0 0
      %1892 = vmatprep.subr.bf16.mxu0 0
      %1893 = vmatpush1.bf16.msra.mxu0 0
      %1894 = vmatprep.subr.bf16.mxu0 0
      %1895 = vmatpush1.bf16.msra.mxu0 0
      %1896 = vmatprep.subr.bf16.mxu0 0
      %1897 = vmatpush1.bf16.msra.mxu0 0
      %1898 = vmatprep.subr.bf16.mxu0 0
      %1899 = vmatpush1.bf16.msra.mxu0 0
      %1900 = vmatprep.subr.bf16.mxu0 0
      %1901 = vmatpush1.bf16.msra.mxu0 0
      %1902 = vmatprep.subr.bf16.mxu0 0
      %1903 = vmatpush1.bf16.msra.mxu0 0
      %1904 = vmatprep.subr.bf16.mxu0 0
      %1905 = vmatpush1.bf16.msra.mxu0 0
      %1906 = vmatprep.subr.bf16.mxu0 0
      %1907 = vmatpush1.bf16.msra.mxu0 0
      %1908 = vmatprep.subr.bf16.mxu0 0
      %1909 = vmatpush1.bf16.msra.mxu0 0
      %1910 = vmatprep.subr.bf16.mxu0 0
      %1911 = vmatpush1.bf16.msra.mxu0 0
      %1912 = vmatprep.subr.bf16.mxu0 0
      %1913 = vmatpush1.bf16.msra.mxu0 0
      %1914 = vmatprep.subr.bf16.mxu0 0
      %1915 = vmatpush1.bf16.msra.mxu0 0
      %1916 = vmatprep.subr.bf16.mxu0 0
      %1917 = vmatpush1.bf16.msra.mxu0 0
      %1918 = vmatprep.subr.bf16.mxu0 0
      %1919 = vmatpush1.bf16.msra.mxu0 0
      %1920 = vmatprep.mubr.bf16.mxu0 0
      %1921 = vmatmul.mubr.bf16.gmra.mrb[0].mxu0 %v1883
      %v1922 = vpop.f32.mrb[0].mxu0
      %v1923 = vadd.f32 0.0, %v1922
      %v1924 = vpop.f32.mrb[0].mxu0
      %v1925 = vpop.f32.mrb[0].mxu0
      %v1926 = vadd.f32 0.0, %v1925
      %v1927 = vpop.f32.mrb[0].mxu0
      %1928 = vdwg.mxu0
      %v1929 = vld [vmem:[%s1794] sm:$0xff]
      %v1930 = vld [vmem:[%s1794 + $0x8] sm:$0xff]
      %v1931 = vadd.f32 %v1929, %v1923
      %v1932 = vadd.f32 %v1930, %v1926
      %1933 = vst [vmem:[%s1794] sm:$0xff] %v1931
      %1934 = vst [vmem:[%s1794 + $0x8] sm:$0xff] %v1932
      %v1935 = vld [vmem:[%s1794] sm:$0xff]
      %v1936 = vld [vmem:[%s1794 + $0x8] sm:$0xff]
      %v1937 = vmul.f32 %v1935, %v445
      %v1938 = vmul.f32 %v1936, %v445
      %v1939 = vadd.f32 %v1937, %v453
      %v1940 = vadd.f32 %v1938, %v453
      %v1941 = vmax.f32 %v1939, 0.0
      %v1942 = vmax.f32 %v1940, 0.0
      %1943 = vst [vmem:[%s1794] sm:$0xff] %v1941
      %1944 = vst [vmem:[%s1794 + $0x8] sm:$0xff] %v1942
      %s1945 = smul.u32 8, %s20
      %p1946 = scmp.lt.s32.totalorder %s19, 1
      %s1947 = scalar_select %p1946, %s19, 1
      %p1948 = scmp.lt.s32.totalorder %s1945, 15
      %s1949 = scalar_select %p1948, %s1945, 15
      %s1950 = smul.addr %s1949, 2
      %s1951 = smul.addr %s1947, 32
      %s1952 = sadd.s32 %s1950, %s1951
      %s1953 = smul.addr %s1952, 8
      %s1954 = scalar_lea.vmem %s4, %s1953
      // Predicated region
      $region37: #{basic_conv2d.1} parent=35 // pred_check
        %p1955 = pneg %p136
      $region38: #{basic_conv2d.1} parent=35 // pred_check_branch
        %1957 = sbr.rel (%p1955) target = $region40
      $region39: #{basic_conv2d.1} parent=35 // pred_region
        %s1958 = smul.u32 8, %s20
      $region40: #{basic_conv2d.1} parent=35 // pred_fallthru
        _
    $region36: #{basic_conv2d.1} parent=5 // pred_fallthru
      _
    %p1959 = scmp.le.s32.totalorder 2, %s10
    // Predicated region
    $region41: #{basic_conv2d.1} parent=5 // pred_check
      %p1960 = pneg %p1959
    $region42: #{basic_conv2d.1} parent=5 // pred_check_branch
      %1962 = sbr.rel (%p1960) target = $region44
    $region43: #{basic_conv2d.1} parent=5 // pred_region
      %s1963 = ssub.s32 %s10, 2
      // Predicated region
      $region45: #{basic_conv2d.1} parent=43 // pred_check
        %p1964 = pneg %p142
      $region46: #{basic_conv2d.1} parent=43 // pred_check_branch
        %1966 = sbr.rel (%p1964) target = $region48
      $region47: #{basic_conv2d.1} parent=43 // pred_region
        %s1967 = smul.u32 8, %s22
        %p1968 = scmp.lt.s32.totalorder %s21, 1
        %s1969 = scalar_select %p1968, %s21, 1
        %p1970 = scmp.lt.s32.totalorder %s1967, 15
        %s1971 = scalar_select %p1970, %s1967, 15
        %s1972 = smul.addr %s1971, 2
        %s1973 = smul.addr %s1969, 32
        %s1974 = sadd.s32 %s1972, %s1973
        %s1975 = smul.addr %s1974, 8
        %s1976 = scalar_lea.vmem %s4, %s1975
      $region48: #{basic_conv2d.1} parent=43 // pred_fallthru
        _
    $region44: #{basic_conv2d.1} parent=5 // pred_fallthru
      _
  $region6: #{basic_conv2d.1} parent=0 // loop_footer
    %s14 = sadd.s32 1, %s10
  $region7: #{basic_conv2d.1} parent=0 // loop_footer_branch
    %9 = sbr.rel target = $region3
  $region8: #{basic_conv2d.1} parent=0 // loop_exit
    _

</llo_original>
